<compile_context>
chip_gen: v6e
topology: v6e:2x2x1
jax: 0.10.0
libtpu: 0.0.40
codegen_flags: <defaults>
</compile_context>

<pallas_src>
import functools
import math

import jax
import jax.numpy as jnp
from jax.experimental import pallas as pl
from jax.experimental.pallas import tpu as pltpu

LANE = 128  # lane width used to pad the tiny classifier output


# ------------------------------ Fused kernel -------------------------------

def _fused_forward_kernel(
    # scalar prefetch (SMEM)
    ids_ref,
    # inputs
    pos_ref, bias_ref, wemb_hbm, eg_ref, eb_ref,
    wqkv_ref, bqkv_ref, wo_ref, bo_ref, sg_ref, sb_ref,
    w1_ref, b1_ref, w2_ref, b2_ref, og_ref, ob_ref,
    wc_ref, bc_ref,
    # output
    o_ref,
    # scratch
    emb_scr, gather_sem,
    *, n_layers, n_heads, seq):
  hidden = pos_ref.shape[-1]
  head_dim = hidden // n_heads
  scale = 1.0 / math.sqrt(head_dim)
  b = pl.program_id(0)

  def layernorm(x, g, beta):
    mu = jnp.mean(x, axis=-1, keepdims=True)
    d = x - mu
    var = jnp.mean(d * d, axis=-1, keepdims=True)
    return (d * jax.lax.rsqrt(var + 1e-12)) * g + beta

  def gelu(x):
    c = 0.7978845608028654  # sqrt(2/pi)
    return 0.5 * x * (1.0 + jnp.tanh(c * (x + 0.044715 * x * x * x)))

  # --- Embeddings: exact DMA row-gather from the HBM-resident table --------
  copies = []
  for s in range(seq):
    tok = ids_ref[b * seq + s]                      # SMEM scalar read
    cp = pltpu.make_async_copy(
        wemb_hbm.at[pl.ds(tok, 1)],                 # (1, H) row in HBM
        emb_scr.at[pl.ds(s, 1)],                    # (1, H) row in VMEM
        gather_sem.at[s])
    cp.start()
    copies.append(cp)
  for cp in copies:
    cp.wait()

  word = emb_scr[...]                                             # (S, H) f32
  h = layernorm(word + pos_ref[...], eg_ref[...], eb_ref[...])    # (S, H) f32

  # Additive attention-mask bias row for this batch element: (1, S) f32.
  bias_row = bias_ref[pl.ds(b, 1), :]

  # --------------------------- Transformer layers ---------------------------
  for l in range(n_layers):
    # Fused QKV projection: bf16 operands on the MXU, f32 accumulation.
    qkv = (jnp.dot(h.astype(jnp.bfloat16), wqkv_ref[l],
                   preferred_element_type=jnp.float32) + bqkv_ref[l])

    # Attention: heads are static lane slices of the traced QKV value (stays
    # in vregs — no scratch round trips).  bf16 MXU operands, f32 softmax.
    ctx_heads = []
    for hd in range(n_heads):
      c0 = hd * head_dim
      q = qkv[:, c0:c0 + head_dim].astype(jnp.bfloat16)
      k = qkv[:, hidden + c0:hidden + c0 + head_dim].astype(jnp.bfloat16)
      v = qkv[:, 2 * hidden + c0:2 * hidden + c0 + head_dim].astype(jnp.bfloat16)
      s_ = jax.lax.dot_general(
          q, k, (((1,), (1,)), ((), ())),
          preferred_element_type=jnp.float32) * scale + bias_row  # (S, S) f32
      m = jnp.max(s_, axis=-1, keepdims=True)
      p = jnp.exp(s_ - m)
      denom = jnp.sum(p, axis=-1, keepdims=True)
      p = p * pl.reciprocal(denom, approx=True)                   # EUP recip
      ctx_heads.append(jnp.dot(p.astype(jnp.bfloat16), v,
                               preferred_element_type=jnp.float32))
    ctx = jnp.concatenate(ctx_heads, axis=-1)                     # (S, H) f32

    # Output projection + residual + LayerNorm.
    attn = (jnp.dot(ctx.astype(jnp.bfloat16), wo_ref[l],
                    preferred_element_type=jnp.float32) + bo_ref[l])
    h = layernorm(attn + h, sg_ref[l], sb_ref[l])

    # Feed-forward (GELU) + residual + LayerNorm.
    ff = (jnp.dot(h.astype(jnp.bfloat16), w1_ref[l],
                  preferred_element_type=jnp.float32) + b1_ref[l])
    ff = gelu(ff)
    ff = (jnp.dot(ff.astype(jnp.bfloat16), w2_ref[l],
                  preferred_element_type=jnp.float32) + b2_ref[l])
    h = layernorm(ff + h, og_ref[l], ob_ref[l])

  # ------------- [CLS] row -> classifier (lane-dense padded store) ----------
  cls = h[0:1, :]                                                 # (1, H) f32
  logits = (jnp.dot(cls, wc_ref[...], preferred_element_type=jnp.float32)
            + bc_ref[...])                                        # (1, LANE)
  o_ref[0] = logits


# ------------------------------ Python wrapper ------------------------------

def text_classification_forward(params, input_ids, attention_mask,
                                *, n_layers, n_heads):
  """Equivalent of TextClassificationModel.forward(x, attention_mask)."""
  B, S = input_ids.shape
  _, H = params["pos_emb"].shape
  L = params["wqkv"].shape[0]
  F = params["w1"].shape[-1]
  num_labels = params["wc"].shape[1]

  ids = input_ids.reshape(-1).astype(jnp.int32)                   # (B*S,) SMEM
  # DistilBERT mask semantics: 1 = attend, 0 = pad -> additive -1e9 bias.
  mask_bias = (1.0 - attention_mask.astype(jnp.float32)) * -1e9   # (B, S)
  # Lane-pad the tiny classifier so the kernel output store is lane-dense.
  wc_pad = jnp.pad(params["wc"], ((0, 0), (0, LANE - num_labels)))
  bc_pad = jnp.pad(params["bc"], ((0, 0), (0, LANE - num_labels)))

  kernel = functools.partial(_fused_forward_kernel, n_layers=n_layers,
                             n_heads=n_heads, seq=S)

  const2 = lambda b, ids_r: (0, 0)
  const3 = lambda b, ids_r: (0, 0, 0)

  grid_spec = pltpu.PrefetchScalarGridSpec(
      num_scalar_prefetch=1,
      grid=(B,),
      in_specs=[
          pl.BlockSpec((S, H), const2),                # pos_emb (first S rows)
          pl.BlockSpec((B, S), const2),                # mask bias (full)
          pl.BlockSpec(memory_space=pl.ANY),           # word_emb stays in HBM
          pl.BlockSpec((1, H), const2),                # emb LN gamma
          pl.BlockSpec((1, H), const2),                # emb LN beta
          pl.BlockSpec((L, H, 3 * H), const3),         # wqkv (fused QKV)
          pl.BlockSpec((L, 1, 3 * H), const3),         # bqkv
          pl.BlockSpec((L, H, H), const3),             # wo
          pl.BlockSpec((L, 1, H), const3),             # bo
          pl.BlockSpec((L, 1, H), const3),             # sa LN gamma
          pl.BlockSpec((L, 1, H), const3),             # sa LN beta
          pl.BlockSpec((L, H, F), const3),             # w1
          pl.BlockSpec((L, 1, F), const3),             # b1
          pl.BlockSpec((L, F, H), const3),             # w2
          pl.BlockSpec((L, 1, H), const3),             # b2
          pl.BlockSpec((L, 1, H), const3),             # out LN gamma
          pl.BlockSpec((L, 1, H), const3),             # out LN beta
          pl.BlockSpec((H, LANE), const2),             # classifier W (padded)
          pl.BlockSpec((1, LANE), const2),             # classifier b (padded)
      ],
      out_specs=pl.BlockSpec((1, 1, LANE), lambda b, ids_r: (b, 0, 0)),
      scratch_shapes=[
          pltpu.VMEM((S, H), jnp.float32),             # gathered word embeddings
          pltpu.SemaphoreType.DMA((S,)),               # one sem per gathered row
      ],
  )

  out = pl.pallas_call(
      kernel,
      grid_spec=grid_spec,
      out_shape=jax.ShapeDtypeStruct((B, 1, LANE), jnp.float32),
      compiler_params=pltpu.CompilerParams(
          dimension_semantics=("parallel",),           # megacore over batch
          vmem_limit_bytes=32 * 1024 * 1024),
  )(ids, params["pos_emb"], mask_bias, params["word_emb"],
    params["emb_ln_g"], params["emb_ln_b"],
    params["wqkv"], params["bqkv"], params["wo"], params["bo"],
    params["sa_ln_g"], params["sa_ln_b"],
    params["w1"], params["b1"], params["w2"], params["b2"],
    params["out_ln_g"], params["out_ln_b"],
    wc_pad, bc_pad)

  return out[:, 0, :num_labels]                        # (B, num_labels)


# --------------------------------- Params -----------------------------------

def init_params(key, *, vocab, max_pos, hidden, n_layers, n_heads, ffn,
                num_labels):
  del n_heads  # layout only
  keys = iter(jax.random.split(key, 16))
  std = 0.02

  def w(shape, dtype=jnp.float32):
    return (std * jax.random.normal(next(keys), shape)).astype(dtype)

  return {
      "word_emb": w((vocab, hidden)),                  # f32, stays in HBM
      "pos_emb": w((max_pos, hidden)),
      "emb_ln_g": jnp.ones((1, hidden), jnp.float32),
      "emb_ln_b": jnp.zeros((1, hidden), jnp.float32),
      # Per-layer weights stacked on a leading layer axis; QKV fused to (H,3H).
      # Matmul weights stored in bf16 (MXU operands), biases / LN params f32.
      "wqkv": w((n_layers, hidden, 3 * hidden), jnp.bfloat16),
      "bqkv": jnp.zeros((n_layers, 1, 3 * hidden), jnp.float32),
      "wo": w((n_layers, hidden, hidden), jnp.bfloat16),
      "bo": jnp.zeros((n_layers, 1, hidden), jnp.float32),
      "sa_ln_g": jnp.ones((n_layers, 1, hidden), jnp.float32),
      "sa_ln_b": jnp.zeros((n_layers, 1, hidden), jnp.float32),
      "w1": w((n_layers, hidden, ffn), jnp.bfloat16),
      "b1": jnp.zeros((n_layers, 1, ffn), jnp.float32),
      "w2": w((n_layers, ffn, hidden), jnp.bfloat16),
      "b2": jnp.zeros((n_layers, 1, hidden), jnp.float32),
      "out_ln_g": jnp.ones((n_layers, 1, hidden), jnp.float32),
      "out_ln_b": jnp.zeros((n_layers, 1, hidden), jnp.float32),
      "wc": w((hidden, num_labels)),
      "bc": jnp.zeros((1, num_labels), jnp.float32),
  }


# ---------------------------------- Main -------------------------------------

if __name__ == "__main__":
  # Small DistilBERT-like config (real model: hidden=768, 6 layers, 12 heads).
  VOCAB, MAX_POS = 512, 64
  HIDDEN, N_LAYERS, N_HEADS, FFN = 128, 2, 2, 256
  NUM_LABELS = 4
  BATCH, SEQ = 2, 8

  key = jax.random.PRNGKey(0)
  k_param, k_ids = jax.random.split(key)

  params = init_params(k_param, vocab=VOCAB, max_pos=MAX_POS, hidden=HIDDEN,
                       n_layers=N_LAYERS, n_heads=N_HEADS, ffn=FFN,
                       num_labels=NUM_LABELS)

  input_ids = jax.random.randint(k_ids, (BATCH, SEQ), 0, VOCAB, dtype=jnp.int32)
  attention_mask = jnp.array(
      [[1, 1, 1, 1, 1, 1, 1, 1],
       [1, 1, 1, 1, 1, 0, 0, 0]], dtype=jnp.int32)  # second example is padded

  forward = jax.jit(functools.partial(
      text_classification_forward, n_layers=N_LAYERS, n_heads=N_HEADS))
  logits = forward(params, input_ids, attention_mask)
  logits = jax.block_until_ready(logits)
  assert logits.shape == (BATCH, NUM_LABELS) and logits.dtype == jnp.float32
  assert bool(jnp.all(jnp.isfinite(logits)))
  print("KERNEL_OK")
</pallas_src>

<mosaic_0001>
module attributes {stable_mosaic.version = 11 : i64} {
  func.func @_fused_forward_kernel(%arg0: i32, %arg1: memref<16xi32, #tpu.memory_space<smem>>, %arg2: memref<8x128xf32, #tpu.memory_space<vmem>>, %arg3: memref<2x8xf32, #tpu.memory_space<vmem>>, %arg4: memref<512x128xf32, #tpu.memory_space<any>>, %arg5: memref<1x128xf32, #tpu.memory_space<vmem>>, %arg6: memref<1x128xf32, #tpu.memory_space<vmem>>, %arg7: memref<2x128x384xbf16, #tpu.memory_space<vmem>>, %arg8: memref<2x1x384xf32, #tpu.memory_space<vmem>>, %arg9: memref<2x128x128xbf16, #tpu.memory_space<vmem>>, %arg10: memref<2x1x128xf32, #tpu.memory_space<vmem>>, %arg11: memref<2x1x128xf32, #tpu.memory_space<vmem>>, %arg12: memref<2x1x128xf32, #tpu.memory_space<vmem>>, %arg13: memref<2x128x256xbf16, #tpu.memory_space<vmem>>, %arg14: memref<2x1x256xf32, #tpu.memory_space<vmem>>, %arg15: memref<2x256x128xbf16, #tpu.memory_space<vmem>>, %arg16: memref<2x1x128xf32, #tpu.memory_space<vmem>>, %arg17: memref<2x1x128xf32, #tpu.memory_space<vmem>>, %arg18: memref<2x1x128xf32, #tpu.memory_space<vmem>>, %arg19: memref<128x128xf32, #tpu.memory_space<vmem>>, %arg20: memref<1x128xf32, #tpu.memory_space<vmem>>, %arg21: memref<1x1x128xf32, #tpu.memory_space<vmem>>, %arg22: memref<8x128xf32, #tpu.memory_space<vmem>>, %arg23: memref<8x!tpu.dma_semaphore, #tpu.memory_space<semaphore_mem>>) attributes {dimension_semantics = [#tpu.dimension_semantics<parallel>], iteration_bounds = array<i64: 2>, scalar_prefetch = 1 : i64, scratch_operands = 2 : i64, tpu.core_type = #tpu.core_type<tc>, window_params = [{transform_indices = @transform_0, window_bounds = array<i64: 8, 128>}, {pipeline_mode = #tpu.pipeline_mode<synchronous>, transform_indices = @transform_1, window_bounds = array<i64: 2, 8>}, {}, {pipeline_mode = #tpu.pipeline_mode<synchronous>, transform_indices = @transform_3, window_bounds = array<i64: 1, 128>}, {pipeline_mode = #tpu.pipeline_mode<synchronous>, transform_indices = @transform_4, window_bounds = array<i64: 1, 128>}, {pipeline_mode = #tpu.pipeline_mode<synchronous>, transform_indices = @transform_5, window_bounds = array<i64: 2, 128, 384>}, {pipeline_mode = #tpu.pipeline_mode<synchronous>, transform_indices = @transform_6, window_bounds = array<i64: 2, 1, 384>}, {pipeline_mode = #tpu.pipeline_mode<synchronous>, transform_indices = @transform_7, window_bounds = array<i64: 2, 128, 128>}, {pipeline_mode = #tpu.pipeline_mode<synchronous>, transform_indices = @transform_8, window_bounds = array<i64: 2, 1, 128>}, {pipeline_mode = #tpu.pipeline_mode<synchronous>, transform_indices = @transform_9, window_bounds = array<i64: 2, 1, 128>}, {pipeline_mode = #tpu.pipeline_mode<synchronous>, transform_indices = @transform_10, window_bounds = array<i64: 2, 1, 128>}, {pipeline_mode = #tpu.pipeline_mode<synchronous>, transform_indices = @transform_11, window_bounds = array<i64: 2, 128, 256>}, {pipeline_mode = #tpu.pipeline_mode<synchronous>, transform_indices = @transform_12, window_bounds = array<i64: 2, 1, 256>}, {pipeline_mode = #tpu.pipeline_mode<synchronous>, transform_indices = @transform_13, window_bounds = array<i64: 2, 256, 128>}, {pipeline_mode = #tpu.pipeline_mode<synchronous>, transform_indices = @transform_14, window_bounds = array<i64: 2, 1, 128>}, {pipeline_mode = #tpu.pipeline_mode<synchronous>, transform_indices = @transform_15, window_bounds = array<i64: 2, 1, 128>}, {pipeline_mode = #tpu.pipeline_mode<synchronous>, transform_indices = @transform_16, window_bounds = array<i64: 2, 1, 128>}, {pipeline_mode = #tpu.pipeline_mode<synchronous>, transform_indices = @transform_17, window_bounds = array<i64: 128, 128>}, {pipeline_mode = #tpu.pipeline_mode<synchronous>, transform_indices = @transform_18, window_bounds = array<i64: 1, 128>}, {transform_indices = @transform_19, window_bounds = array<i64: 1, 1, 128>}]} {
    %c8_i32 = arith.constant 8 : i32
    %0 = arith.muli %arg0, %c8_i32 : i32
    %c0_i32 = arith.constant 0 : i32
    %1 = arith.addi %0, %c0_i32 : i32
    %2 = arith.index_cast %1 : i32 to index
    %3 = memref.load %arg1[%2] : memref<16xi32, #tpu.memory_space<smem>>
    %c0_i32_0 = arith.constant 0 : i32
    %c0_i32_1 = arith.constant 0 : i32
    %4 = tpu.memref_slice %arg4[%3, %c0_i32_1] : memref<512x128xf32, #tpu.memory_space<any>> -> memref<1x128xf32, #tpu.memory_space<any>>
    %c0_i32_2 = arith.constant 0 : i32
    %c0_i32_3 = arith.constant 0 : i32
    %5 = tpu.memref_slice %arg22[%c0_i32_2, %c0_i32_3] : memref<8x128xf32, #tpu.memory_space<vmem>> -> memref<1x128xf32, #tpu.memory_space<vmem>>
    %6 = tpu.memref_slice %arg23[%c0_i32_0] : memref<8x!tpu.dma_semaphore, #tpu.memory_space<semaphore_mem>> -> memref<1x!tpu.dma_semaphore, #tpu.memory_space<semaphore_mem>>
    %7 = tpu.memref_squeeze %6 : memref<1x!tpu.dma_semaphore, #tpu.memory_space<semaphore_mem>> -> memref<!tpu.dma_semaphore, #tpu.memory_space<semaphore_mem>>
    tpu.enqueue_dma source(%4 : memref<1x128xf32, #tpu.memory_space<any>>) target(%5 : memref<1x128xf32, #tpu.memory_space<vmem>>) target_semaphore(%7 : memref<!tpu.dma_semaphore, #tpu.memory_space<semaphore_mem>>)
    %c8_i32_4 = arith.constant 8 : i32
    %8 = arith.muli %arg0, %c8_i32_4 : i32
    %c1_i32 = arith.constant 1 : i32
    %9 = arith.addi %8, %c1_i32 : i32
    %10 = arith.index_cast %9 : i32 to index
    %11 = memref.load %arg1[%10] : memref<16xi32, #tpu.memory_space<smem>>
    %c1_i32_5 = arith.constant 1 : i32
    %c0_i32_6 = arith.constant 0 : i32
    %12 = tpu.memref_slice %arg4[%11, %c0_i32_6] : memref<512x128xf32, #tpu.memory_space<any>> -> memref<1x128xf32, #tpu.memory_space<any>>
    %c1_i32_7 = arith.constant 1 : i32
    %c0_i32_8 = arith.constant 0 : i32
    %13 = tpu.memref_slice %arg22[%c1_i32_7, %c0_i32_8] : memref<8x128xf32, #tpu.memory_space<vmem>> -> memref<1x128xf32, #tpu.memory_space<vmem>>
    %14 = tpu.memref_slice %arg23[%c1_i32_5] : memref<8x!tpu.dma_semaphore, #tpu.memory_space<semaphore_mem>> -> memref<1x!tpu.dma_semaphore, #tpu.memory_space<semaphore_mem>>
    %15 = tpu.memref_squeeze %14 : memref<1x!tpu.dma_semaphore, #tpu.memory_space<semaphore_mem>> -> memref<!tpu.dma_semaphore, #tpu.memory_space<semaphore_mem>>
    tpu.enqueue_dma source(%12 : memref<1x128xf32, #tpu.memory_space<any>>) target(%13 : memref<1x128xf32, #tpu.memory_space<vmem>>) target_semaphore(%15 : memref<!tpu.dma_semaphore, #tpu.memory_space<semaphore_mem>>)
    %c8_i32_9 = arith.constant 8 : i32
    %16 = arith.muli %arg0, %c8_i32_9 : i32
    %c2_i32 = arith.constant 2 : i32
    %17 = arith.addi %16, %c2_i32 : i32
    %18 = arith.index_cast %17 : i32 to index
    %19 = memref.load %arg1[%18] : memref<16xi32, #tpu.memory_space<smem>>
    %c2_i32_10 = arith.constant 2 : i32
    %c0_i32_11 = arith.constant 0 : i32
    %20 = tpu.memref_slice %arg4[%19, %c0_i32_11] : memref<512x128xf32, #tpu.memory_space<any>> -> memref<1x128xf32, #tpu.memory_space<any>>
    %c2_i32_12 = arith.constant 2 : i32
    %c0_i32_13 = arith.constant 0 : i32
    %21 = tpu.memref_slice %arg22[%c2_i32_12, %c0_i32_13] : memref<8x128xf32, #tpu.memory_space<vmem>> -> memref<1x128xf32, #tpu.memory_space<vmem>>
    %22 = tpu.memref_slice %arg23[%c2_i32_10] : memref<8x!tpu.dma_semaphore, #tpu.memory_space<semaphore_mem>> -> memref<1x!tpu.dma_semaphore, #tpu.memory_space<semaphore_mem>>
    %23 = tpu.memref_squeeze %22 : memref<1x!tpu.dma_semaphore, #tpu.memory_space<semaphore_mem>> -> memref<!tpu.dma_semaphore, #tpu.memory_space<semaphore_mem>>
    tpu.enqueue_dma source(%20 : memref<1x128xf32, #tpu.memory_space<any>>) target(%21 : memref<1x128xf32, #tpu.memory_space<vmem>>) target_semaphore(%23 : memref<!tpu.dma_semaphore, #tpu.memory_space<semaphore_mem>>)
    %c8_i32_14 = arith.constant 8 : i32
    %24 = arith.muli %arg0, %c8_i32_14 : i32
    %c3_i32 = arith.constant 3 : i32
    %25 = arith.addi %24, %c3_i32 : i32
    %26 = arith.index_cast %25 : i32 to index
    %27 = memref.load %arg1[%26] : memref<16xi32, #tpu.memory_space<smem>>
    %c3_i32_15 = arith.constant 3 : i32
    %c0_i32_16 = arith.constant 0 : i32
    %28 = tpu.memref_slice %arg4[%27, %c0_i32_16] : memref<512x128xf32, #tpu.memory_space<any>> -> memref<1x128xf32, #tpu.memory_space<any>>
    %c3_i32_17 = arith.constant 3 : i32
    %c0_i32_18 = arith.constant 0 : i32
    %29 = tpu.memref_slice %arg22[%c3_i32_17, %c0_i32_18] : memref<8x128xf32, #tpu.memory_space<vmem>> -> memref<1x128xf32, #tpu.memory_space<vmem>>
    %30 = tpu.memref_slice %arg23[%c3_i32_15] : memref<8x!tpu.dma_semaphore, #tpu.memory_space<semaphore_mem>> -> memref<1x!tpu.dma_semaphore, #tpu.memory_space<semaphore_mem>>
    %31 = tpu.memref_squeeze %30 : memref<1x!tpu.dma_semaphore, #tpu.memory_space<semaphore_mem>> -> memref<!tpu.dma_semaphore, #tpu.memory_space<semaphore_mem>>
    tpu.enqueue_dma source(%28 : memref<1x128xf32, #tpu.memory_space<any>>) target(%29 : memref<1x128xf32, #tpu.memory_space<vmem>>) target_semaphore(%31 : memref<!tpu.dma_semaphore, #tpu.memory_space<semaphore_mem>>)
    %c8_i32_19 = arith.constant 8 : i32
    %32 = arith.muli %arg0, %c8_i32_19 : i32
    %c4_i32 = arith.constant 4 : i32
    %33 = arith.addi %32, %c4_i32 : i32
    %34 = arith.index_cast %33 : i32 to index
    %35 = memref.load %arg1[%34] : memref<16xi32, #tpu.memory_space<smem>>
    %c4_i32_20 = arith.constant 4 : i32
    %c0_i32_21 = arith.constant 0 : i32
    %36 = tpu.memref_slice %arg4[%35, %c0_i32_21] : memref<512x128xf32, #tpu.memory_space<any>> -> memref<1x128xf32, #tpu.memory_space<any>>
    %c4_i32_22 = arith.constant 4 : i32
    %c0_i32_23 = arith.constant 0 : i32
    %37 = tpu.memref_slice %arg22[%c4_i32_22, %c0_i32_23] : memref<8x128xf32, #tpu.memory_space<vmem>> -> memref<1x128xf32, #tpu.memory_space<vmem>>
    %38 = tpu.memref_slice %arg23[%c4_i32_20] : memref<8x!tpu.dma_semaphore, #tpu.memory_space<semaphore_mem>> -> memref<1x!tpu.dma_semaphore, #tpu.memory_space<semaphore_mem>>
    %39 = tpu.memref_squeeze %38 : memref<1x!tpu.dma_semaphore, #tpu.memory_space<semaphore_mem>> -> memref<!tpu.dma_semaphore, #tpu.memory_space<semaphore_mem>>
    tpu.enqueue_dma source(%36 : memref<1x128xf32, #tpu.memory_space<any>>) target(%37 : memref<1x128xf32, #tpu.memory_space<vmem>>) target_semaphore(%39 : memref<!tpu.dma_semaphore, #tpu.memory_space<semaphore_mem>>)
    %c8_i32_24 = arith.constant 8 : i32
    %40 = arith.muli %arg0, %c8_i32_24 : i32
    %c5_i32 = arith.constant 5 : i32
    %41 = arith.addi %40, %c5_i32 : i32
    %42 = arith.index_cast %41 : i32 to index
    %43 = memref.load %arg1[%42] : memref<16xi32, #tpu.memory_space<smem>>
    %c5_i32_25 = arith.constant 5 : i32
    %c0_i32_26 = arith.constant 0 : i32
    %44 = tpu.memref_slice %arg4[%43, %c0_i32_26] : memref<512x128xf32, #tpu.memory_space<any>> -> memref<1x128xf32, #tpu.memory_space<any>>
    %c5_i32_27 = arith.constant 5 : i32
    %c0_i32_28 = arith.constant 0 : i32
    %45 = tpu.memref_slice %arg22[%c5_i32_27, %c0_i32_28] : memref<8x128xf32, #tpu.memory_space<vmem>> -> memref<1x128xf32, #tpu.memory_space<vmem>>
    %46 = tpu.memref_slice %arg23[%c5_i32_25] : memref<8x!tpu.dma_semaphore, #tpu.memory_space<semaphore_mem>> -> memref<1x!tpu.dma_semaphore, #tpu.memory_space<semaphore_mem>>
    %47 = tpu.memref_squeeze %46 : memref<1x!tpu.dma_semaphore, #tpu.memory_space<semaphore_mem>> -> memref<!tpu.dma_semaphore, #tpu.memory_space<semaphore_mem>>
    tpu.enqueue_dma source(%44 : memref<1x128xf32, #tpu.memory_space<any>>) target(%45 : memref<1x128xf32, #tpu.memory_space<vmem>>) target_semaphore(%47 : memref<!tpu.dma_semaphore, #tpu.memory_space<semaphore_mem>>)
    %c8_i32_29 = arith.constant 8 : i32
    %48 = arith.muli %arg0, %c8_i32_29 : i32
    %c6_i32 = arith.constant 6 : i32
    %49 = arith.addi %48, %c6_i32 : i32
    %50 = arith.index_cast %49 : i32 to index
    %51 = memref.load %arg1[%50] : memref<16xi32, #tpu.memory_space<smem>>
    %c6_i32_30 = arith.constant 6 : i32
    %c0_i32_31 = arith.constant 0 : i32
    %52 = tpu.memref_slice %arg4[%51, %c0_i32_31] : memref<512x128xf32, #tpu.memory_space<any>> -> memref<1x128xf32, #tpu.memory_space<any>>
    %c6_i32_32 = arith.constant 6 : i32
    %c0_i32_33 = arith.constant 0 : i32
    %53 = tpu.memref_slice %arg22[%c6_i32_32, %c0_i32_33] : memref<8x128xf32, #tpu.memory_space<vmem>> -> memref<1x128xf32, #tpu.memory_space<vmem>>
    %54 = tpu.memref_slice %arg23[%c6_i32_30] : memref<8x!tpu.dma_semaphore, #tpu.memory_space<semaphore_mem>> -> memref<1x!tpu.dma_semaphore, #tpu.memory_space<semaphore_mem>>
    %55 = tpu.memref_squeeze %54 : memref<1x!tpu.dma_semaphore, #tpu.memory_space<semaphore_mem>> -> memref<!tpu.dma_semaphore, #tpu.memory_space<semaphore_mem>>
    tpu.enqueue_dma source(%52 : memref<1x128xf32, #tpu.memory_space<any>>) target(%53 : memref<1x128xf32, #tpu.memory_space<vmem>>) target_semaphore(%55 : memref<!tpu.dma_semaphore, #tpu.memory_space<semaphore_mem>>)
    %c8_i32_34 = arith.constant 8 : i32
    %56 = arith.muli %arg0, %c8_i32_34 : i32
    %c7_i32 = arith.constant 7 : i32
    %57 = arith.addi %56, %c7_i32 : i32
    %58 = arith.index_cast %57 : i32 to index
    %59 = memref.load %arg1[%58] : memref<16xi32, #tpu.memory_space<smem>>
    %c7_i32_35 = arith.constant 7 : i32
    %c0_i32_36 = arith.constant 0 : i32
    %60 = tpu.memref_slice %arg4[%59, %c0_i32_36] : memref<512x128xf32, #tpu.memory_space<any>> -> memref<1x128xf32, #tpu.memory_space<any>>
    %c7_i32_37 = arith.constant 7 : i32
    %c0_i32_38 = arith.constant 0 : i32
    %61 = tpu.memref_slice %arg22[%c7_i32_37, %c0_i32_38] : memref<8x128xf32, #tpu.memory_space<vmem>> -> memref<1x128xf32, #tpu.memory_space<vmem>>
    %62 = tpu.memref_slice %arg23[%c7_i32_35] : memref<8x!tpu.dma_semaphore, #tpu.memory_space<semaphore_mem>> -> memref<1x!tpu.dma_semaphore, #tpu.memory_space<semaphore_mem>>
    %63 = tpu.memref_squeeze %62 : memref<1x!tpu.dma_semaphore, #tpu.memory_space<semaphore_mem>> -> memref<!tpu.dma_semaphore, #tpu.memory_space<semaphore_mem>>
    tpu.enqueue_dma source(%60 : memref<1x128xf32, #tpu.memory_space<any>>) target(%61 : memref<1x128xf32, #tpu.memory_space<vmem>>) target_semaphore(%63 : memref<!tpu.dma_semaphore, #tpu.memory_space<semaphore_mem>>)
    %c0_i32_39 = arith.constant 0 : i32
    %c0_i32_40 = arith.constant 0 : i32
    %64 = tpu.memref_slice %arg4[%3, %c0_i32_40] : memref<512x128xf32, #tpu.memory_space<any>> -> memref<1x128xf32, #tpu.memory_space<any>>
    %c0_i32_41 = arith.constant 0 : i32
    %c0_i32_42 = arith.constant 0 : i32
    %65 = tpu.memref_slice %arg22[%c0_i32_41, %c0_i32_42] : memref<8x128xf32, #tpu.memory_space<vmem>> -> memref<1x128xf32, #tpu.memory_space<vmem>>
    %66 = tpu.memref_slice %arg23[%c0_i32_39] : memref<8x!tpu.dma_semaphore, #tpu.memory_space<semaphore_mem>> -> memref<1x!tpu.dma_semaphore, #tpu.memory_space<semaphore_mem>>
    %67 = tpu.memref_squeeze %66 : memref<1x!tpu.dma_semaphore, #tpu.memory_space<semaphore_mem>> -> memref<!tpu.dma_semaphore, #tpu.memory_space<semaphore_mem>>
    tpu.wait_dma2 semaphore(%67 : memref<!tpu.dma_semaphore, #tpu.memory_space<semaphore_mem>>) src(%64 : memref<1x128xf32, #tpu.memory_space<any>>) dst(%65 : memref<1x128xf32, #tpu.memory_space<vmem>>)
    %c1_i32_43 = arith.constant 1 : i32
    %c0_i32_44 = arith.constant 0 : i32
    %68 = tpu.memref_slice %arg4[%11, %c0_i32_44] : memref<512x128xf32, #tpu.memory_space<any>> -> memref<1x128xf32, #tpu.memory_space<any>>
    %c1_i32_45 = arith.constant 1 : i32
    %c0_i32_46 = arith.constant 0 : i32
    %69 = tpu.memref_slice %arg22[%c1_i32_45, %c0_i32_46] : memref<8x128xf32, #tpu.memory_space<vmem>> -> memref<1x128xf32, #tpu.memory_space<vmem>>
    %70 = tpu.memref_slice %arg23[%c1_i32_43] : memref<8x!tpu.dma_semaphore, #tpu.memory_space<semaphore_mem>> -> memref<1x!tpu.dma_semaphore, #tpu.memory_space<semaphore_mem>>
    %71 = tpu.memref_squeeze %70 : memref<1x!tpu.dma_semaphore, #tpu.memory_space<semaphore_mem>> -> memref<!tpu.dma_semaphore, #tpu.memory_space<semaphore_mem>>
    tpu.wait_dma2 semaphore(%71 : memref<!tpu.dma_semaphore, #tpu.memory_space<semaphore_mem>>) src(%68 : memref<1x128xf32, #tpu.memory_space<any>>) dst(%69 : memref<1x128xf32, #tpu.memory_space<vmem>>)
    %c2_i32_47 = arith.constant 2 : i32
    %c0_i32_48 = arith.constant 0 : i32
    %72 = tpu.memref_slice %arg4[%19, %c0_i32_48] : memref<512x128xf32, #tpu.memory_space<any>> -> memref<1x128xf32, #tpu.memory_space<any>>
    %c2_i32_49 = arith.constant 2 : i32
    %c0_i32_50 = arith.constant 0 : i32
    %73 = tpu.memref_slice %arg22[%c2_i32_49, %c0_i32_50] : memref<8x128xf32, #tpu.memory_space<vmem>> -> memref<1x128xf32, #tpu.memory_space<vmem>>
    %74 = tpu.memref_slice %arg23[%c2_i32_47] : memref<8x!tpu.dma_semaphore, #tpu.memory_space<semaphore_mem>> -> memref<1x!tpu.dma_semaphore, #tpu.memory_space<semaphore_mem>>
    %75 = tpu.memref_squeeze %74 : memref<1x!tpu.dma_semaphore, #tpu.memory_space<semaphore_mem>> -> memref<!tpu.dma_semaphore, #tpu.memory_space<semaphore_mem>>
    tpu.wait_dma2 semaphore(%75 : memref<!tpu.dma_semaphore, #tpu.memory_space<semaphore_mem>>) src(%72 : memref<1x128xf32, #tpu.memory_space<any>>) dst(%73 : memref<1x128xf32, #tpu.memory_space<vmem>>)
    %c3_i32_51 = arith.constant 3 : i32
    %c0_i32_52 = arith.constant 0 : i32
    %76 = tpu.memref_slice %arg4[%27, %c0_i32_52] : memref<512x128xf32, #tpu.memory_space<any>> -> memref<1x128xf32, #tpu.memory_space<any>>
    %c3_i32_53 = arith.constant 3 : i32
    %c0_i32_54 = arith.constant 0 : i32
    %77 = tpu.memref_slice %arg22[%c3_i32_53, %c0_i32_54] : memref<8x128xf32, #tpu.memory_space<vmem>> -> memref<1x128xf32, #tpu.memory_space<vmem>>
    %78 = tpu.memref_slice %arg23[%c3_i32_51] : memref<8x!tpu.dma_semaphore, #tpu.memory_space<semaphore_mem>> -> memref<1x!tpu.dma_semaphore, #tpu.memory_space<semaphore_mem>>
    %79 = tpu.memref_squeeze %78 : memref<1x!tpu.dma_semaphore, #tpu.memory_space<semaphore_mem>> -> memref<!tpu.dma_semaphore, #tpu.memory_space<semaphore_mem>>
    tpu.wait_dma2 semaphore(%79 : memref<!tpu.dma_semaphore, #tpu.memory_space<semaphore_mem>>) src(%76 : memref<1x128xf32, #tpu.memory_space<any>>) dst(%77 : memref<1x128xf32, #tpu.memory_space<vmem>>)
    %c4_i32_55 = arith.constant 4 : i32
    %c0_i32_56 = arith.constant 0 : i32
    %80 = tpu.memref_slice %arg4[%35, %c0_i32_56] : memref<512x128xf32, #tpu.memory_space<any>> -> memref<1x128xf32, #tpu.memory_space<any>>
    %c4_i32_57 = arith.constant 4 : i32
    %c0_i32_58 = arith.constant 0 : i32
    %81 = tpu.memref_slice %arg22[%c4_i32_57, %c0_i32_58] : memref<8x128xf32, #tpu.memory_space<vmem>> -> memref<1x128xf32, #tpu.memory_space<vmem>>
    %82 = tpu.memref_slice %arg23[%c4_i32_55] : memref<8x!tpu.dma_semaphore, #tpu.memory_space<semaphore_mem>> -> memref<1x!tpu.dma_semaphore, #tpu.memory_space<semaphore_mem>>
    %83 = tpu.memref_squeeze %82 : memref<1x!tpu.dma_semaphore, #tpu.memory_space<semaphore_mem>> -> memref<!tpu.dma_semaphore, #tpu.memory_space<semaphore_mem>>
    tpu.wait_dma2 semaphore(%83 : memref<!tpu.dma_semaphore, #tpu.memory_space<semaphore_mem>>) src(%80 : memref<1x128xf32, #tpu.memory_space<any>>) dst(%81 : memref<1x128xf32, #tpu.memory_space<vmem>>)
    %c5_i32_59 = arith.constant 5 : i32
    %c0_i32_60 = arith.constant 0 : i32
    %84 = tpu.memref_slice %arg4[%43, %c0_i32_60] : memref<512x128xf32, #tpu.memory_space<any>> -> memref<1x128xf32, #tpu.memory_space<any>>
    %c5_i32_61 = arith.constant 5 : i32
    %c0_i32_62 = arith.constant 0 : i32
    %85 = tpu.memref_slice %arg22[%c5_i32_61, %c0_i32_62] : memref<8x128xf32, #tpu.memory_space<vmem>> -> memref<1x128xf32, #tpu.memory_space<vmem>>
    %86 = tpu.memref_slice %arg23[%c5_i32_59] : memref<8x!tpu.dma_semaphore, #tpu.memory_space<semaphore_mem>> -> memref<1x!tpu.dma_semaphore, #tpu.memory_space<semaphore_mem>>
    %87 = tpu.memref_squeeze %86 : memref<1x!tpu.dma_semaphore, #tpu.memory_space<semaphore_mem>> -> memref<!tpu.dma_semaphore, #tpu.memory_space<semaphore_mem>>
    tpu.wait_dma2 semaphore(%87 : memref<!tpu.dma_semaphore, #tpu.memory_space<semaphore_mem>>) src(%84 : memref<1x128xf32, #tpu.memory_space<any>>) dst(%85 : memref<1x128xf32, #tpu.memory_space<vmem>>)
    %c6_i32_63 = arith.constant 6 : i32
    %c0_i32_64 = arith.constant 0 : i32
    %88 = tpu.memref_slice %arg4[%51, %c0_i32_64] : memref<512x128xf32, #tpu.memory_space<any>> -> memref<1x128xf32, #tpu.memory_space<any>>
    %c6_i32_65 = arith.constant 6 : i32
    %c0_i32_66 = arith.constant 0 : i32
    %89 = tpu.memref_slice %arg22[%c6_i32_65, %c0_i32_66] : memref<8x128xf32, #tpu.memory_space<vmem>> -> memref<1x128xf32, #tpu.memory_space<vmem>>
    %90 = tpu.memref_slice %arg23[%c6_i32_63] : memref<8x!tpu.dma_semaphore, #tpu.memory_space<semaphore_mem>> -> memref<1x!tpu.dma_semaphore, #tpu.memory_space<semaphore_mem>>
    %91 = tpu.memref_squeeze %90 : memref<1x!tpu.dma_semaphore, #tpu.memory_space<semaphore_mem>> -> memref<!tpu.dma_semaphore, #tpu.memory_space<semaphore_mem>>
    tpu.wait_dma2 semaphore(%91 : memref<!tpu.dma_semaphore, #tpu.memory_space<semaphore_mem>>) src(%88 : memref<1x128xf32, #tpu.memory_space<any>>) dst(%89 : memref<1x128xf32, #tpu.memory_space<vmem>>)
    %c7_i32_67 = arith.constant 7 : i32
    %c0_i32_68 = arith.constant 0 : i32
    %92 = tpu.memref_slice %arg4[%59, %c0_i32_68] : memref<512x128xf32, #tpu.memory_space<any>> -> memref<1x128xf32, #tpu.memory_space<any>>
    %c7_i32_69 = arith.constant 7 : i32
    %c0_i32_70 = arith.constant 0 : i32
    %93 = tpu.memref_slice %arg22[%c7_i32_69, %c0_i32_70] : memref<8x128xf32, #tpu.memory_space<vmem>> -> memref<1x128xf32, #tpu.memory_space<vmem>>
    %94 = tpu.memref_slice %arg23[%c7_i32_67] : memref<8x!tpu.dma_semaphore, #tpu.memory_space<semaphore_mem>> -> memref<1x!tpu.dma_semaphore, #tpu.memory_space<semaphore_mem>>
    %95 = tpu.memref_squeeze %94 : memref<1x!tpu.dma_semaphore, #tpu.memory_space<semaphore_mem>> -> memref<!tpu.dma_semaphore, #tpu.memory_space<semaphore_mem>>
    tpu.wait_dma2 semaphore(%95 : memref<!tpu.dma_semaphore, #tpu.memory_space<semaphore_mem>>) src(%92 : memref<1x128xf32, #tpu.memory_space<any>>) dst(%93 : memref<1x128xf32, #tpu.memory_space<vmem>>)
    %c0 = arith.constant 0 : index
    %c0_71 = arith.constant 0 : index
    %96 = vector.load %arg22[%c0, %c0_71] : memref<8x128xf32, #tpu.memory_space<vmem>>, vector<8x128xf32>
    %c0_72 = arith.constant 0 : index
    %c0_73 = arith.constant 0 : index
    %97 = vector.load %arg2[%c0_72, %c0_73] : memref<8x128xf32, #tpu.memory_space<vmem>>, vector<8x128xf32>
    %98 = arith.addf %96, %97 : vector<8x128xf32>
    %c0_74 = arith.constant 0 : index
    %c0_75 = arith.constant 0 : index
    %99 = vector.load %arg5[%c0_74, %c0_75] : memref<1x128xf32, #tpu.memory_space<vmem>>, vector<1x128xf32>
    %c0_76 = arith.constant 0 : index
    %c0_77 = arith.constant 0 : index
    %100 = vector.load %arg6[%c0_76, %c0_77] : memref<1x128xf32, #tpu.memory_space<vmem>>, vector<1x128xf32>
    %cst = arith.constant dense<0.000000e+00> : vector<8xf32>
    %101 = vector.multi_reduction <add>, %98, %cst [1] : vector<8x128xf32> to vector<8xf32>
    %102 = vector.shape_cast %101 : vector<8xf32> to vector<8x1xf32>
    %cst_78 = arith.constant 1.280000e+02 : f32
    %103 = vector.broadcast %cst_78 : f32 to vector<8x1xf32>
    %104 = arith.divf %102, %103 : vector<8x1xf32>
    %105 = vector.broadcast %104 : vector<8x1xf32> to vector<8x128xf32>
    %106 = arith.subf %98, %105 : vector<8x128xf32>
    %107 = arith.mulf %106, %106 : vector<8x128xf32>
    %cst_79 = arith.constant dense<0.000000e+00> : vector<8xf32>
    %108 = vector.multi_reduction <add>, %107, %cst_79 [1] : vector<8x128xf32> to vector<8xf32>
    %109 = vector.shape_cast %108 : vector<8xf32> to vector<8x1xf32>
    %cst_80 = arith.constant 1.280000e+02 : f32
    %110 = vector.broadcast %cst_80 : f32 to vector<8x1xf32>
    %111 = arith.divf %109, %110 : vector<8x1xf32>
    %cst_81 = arith.constant 9.99999996E-13 : f32
    %112 = vector.broadcast %cst_81 : f32 to vector<8x1xf32>
    %113 = arith.addf %111, %112 : vector<8x1xf32>
    %114 = math.rsqrt %113 : vector<8x1xf32>
    %115 = vector.broadcast %114 : vector<8x1xf32> to vector<8x128xf32>
    %116 = arith.mulf %106, %115 : vector<8x128xf32>
    %117 = vector.broadcast %99 : vector<1x128xf32> to vector<8x128xf32>
    %118 = arith.mulf %116, %117 : vector<8x128xf32>
    %119 = vector.broadcast %100 : vector<1x128xf32> to vector<8x128xf32>
    %120 = arith.addf %118, %119 : vector<8x128xf32>
    %121 = arith.index_cast %arg0 : i32 to index
    %c0_82 = arith.constant 0 : index
    %122 = vector.load %arg3[%121, %c0_82] : memref<2x8xf32, #tpu.memory_space<vmem>>, vector<1x8xf32>
    %123 = arith.truncf %120 : vector<8x128xf32> to vector<8x128xbf16>
    %c0_83 = arith.constant 0 : index
    %c0_84 = arith.constant 0 : index
    %c0_85 = arith.constant 0 : index
    %124 = vector.load %arg7[%c0_83, %c0_84, %c0_85] : memref<2x128x384xbf16, #tpu.memory_space<vmem>>, vector<1x128x384xbf16>
    %125 = vector.shape_cast %124 : vector<1x128x384xbf16> to vector<128x384xbf16>
    %cst_86 = arith.constant dense<0.000000e+00> : vector<8x384xf32>
    %126 = tpu.matmul %123, %125, %cst_86 {dimension_numbers = #tpu.dot_dimension_numbers<[1], [0], [0], [1], [0, 0, 1, 1], [], []>} : vector<8x128xbf16>, vector<128x384xbf16>, vector<8x384xf32> -> vector<8x384xf32>
    %c0_87 = arith.constant 0 : index
    %c0_88 = arith.constant 0 : index
    %c0_89 = arith.constant 0 : index
    %127 = vector.load %arg8[%c0_87, %c0_88, %c0_89] : memref<2x1x384xf32, #tpu.memory_space<vmem>>, vector<1x1x384xf32>
    %128 = vector.shape_cast %127 : vector<1x1x384xf32> to vector<1x384xf32>
    %129 = vector.broadcast %128 : vector<1x384xf32> to vector<8x384xf32>
    %130 = arith.addf %126, %129 : vector<8x384xf32>
    %131 = vector.extract_strided_slice %130 {offsets = [0, 0], sizes = [8, 64], strides = [1, 1]} : vector<8x384xf32> to vector<8x64xf32>
    %132 = arith.truncf %131 : vector<8x64xf32> to vector<8x64xbf16>
    %133 = vector.extract_strided_slice %130 {offsets = [0, 128], sizes = [8, 64], strides = [1, 1]} : vector<8x384xf32> to vector<8x64xf32>
    %134 = arith.truncf %133 : vector<8x64xf32> to vector<8x64xbf16>
    %135 = vector.extract_strided_slice %130 {offsets = [0, 256], sizes = [8, 64], strides = [1, 1]} : vector<8x384xf32> to vector<8x64xf32>
    %136 = arith.truncf %135 : vector<8x64xf32> to vector<8x64xbf16>
    %cst_90 = arith.constant dense<0.000000e+00> : vector<8x8xf32>
    %137 = tpu.matmul %132, %134, %cst_90 {dimension_numbers = #tpu.dot_dimension_numbers<[1], [1], [0], [0], [0, 0, 1, 0], [], []>} : vector<8x64xbf16>, vector<8x64xbf16>, vector<8x8xf32> -> vector<8x8xf32>
    %cst_91 = arith.constant 1.250000e-01 : f32
    %138 = vector.broadcast %cst_91 : f32 to vector<8x8xf32>
    %139 = arith.mulf %137, %138 : vector<8x8xf32>
    %140 = vector.broadcast %122 : vector<1x8xf32> to vector<8x8xf32>
    %141 = arith.addf %139, %140 : vector<8x8xf32>
    %cst_92 = arith.constant dense<0xFF800000> : vector<8xf32>
    %142 = vector.multi_reduction <maximumf>, %141, %cst_92 [1] : vector<8x8xf32> to vector<8xf32>
    %143 = vector.shape_cast %142 : vector<8xf32> to vector<8x1xf32>
    %144 = vector.broadcast %143 : vector<8x1xf32> to vector<8x8xf32>
    %145 = arith.subf %141, %144 : vector<8x8xf32>
    %146 = math.exp %145 : vector<8x8xf32>
    %cst_93 = arith.constant dense<0.000000e+00> : vector<8xf32>
    %147 = vector.multi_reduction <add>, %146, %cst_93 [1] : vector<8x8xf32> to vector<8xf32>
    %148 = vector.shape_cast %147 : vector<8xf32> to vector<8x1xf32>
    %149 = tpu.reciprocal %148 {approx = true} : vector<8x1xf32> -> vector<8x1xf32>
    %150 = vector.broadcast %149 : vector<8x1xf32> to vector<8x8xf32>
    %151 = arith.mulf %146, %150 : vector<8x8xf32>
    %152 = arith.truncf %151 : vector<8x8xf32> to vector<8x8xbf16>
    %cst_94 = arith.constant dense<0.000000e+00> : vector<8x64xf32>
    %153 = tpu.matmul %152, %136, %cst_94 {dimension_numbers = #tpu.dot_dimension_numbers<[1], [0], [0], [1], [0, 0, 1, 1], [], []>} : vector<8x8xbf16>, vector<8x64xbf16>, vector<8x64xf32> -> vector<8x64xf32>
    %154 = vector.extract_strided_slice %130 {offsets = [0, 64], sizes = [8, 64], strides = [1, 1]} : vector<8x384xf32> to vector<8x64xf32>
    %155 = arith.truncf %154 : vector<8x64xf32> to vector<8x64xbf16>
    %156 = vector.extract_strided_slice %130 {offsets = [0, 192], sizes = [8, 64], strides = [1, 1]} : vector<8x384xf32> to vector<8x64xf32>
    %157 = arith.truncf %156 : vector<8x64xf32> to vector<8x64xbf16>
    %158 = vector.extract_strided_slice %130 {offsets = [0, 320], sizes = [8, 64], strides = [1, 1]} : vector<8x384xf32> to vector<8x64xf32>
    %159 = arith.truncf %158 : vector<8x64xf32> to vector<8x64xbf16>
    %cst_95 = arith.constant dense<0.000000e+00> : vector<8x8xf32>
    %160 = tpu.matmul %155, %157, %cst_95 {dimension_numbers = #tpu.dot_dimension_numbers<[1], [1], [0], [0], [0, 0, 1, 0], [], []>} : vector<8x64xbf16>, vector<8x64xbf16>, vector<8x8xf32> -> vector<8x8xf32>
    %cst_96 = arith.constant 1.250000e-01 : f32
    %161 = vector.broadcast %cst_96 : f32 to vector<8x8xf32>
    %162 = arith.mulf %160, %161 : vector<8x8xf32>
    %163 = vector.broadcast %122 : vector<1x8xf32> to vector<8x8xf32>
    %164 = arith.addf %162, %163 : vector<8x8xf32>
    %cst_97 = arith.constant dense<0xFF800000> : vector<8xf32>
    %165 = vector.multi_reduction <maximumf>, %164, %cst_97 [1] : vector<8x8xf32> to vector<8xf32>
    %166 = vector.shape_cast %165 : vector<8xf32> to vector<8x1xf32>
    %167 = vector.broadcast %166 : vector<8x1xf32> to vector<8x8xf32>
    %168 = arith.subf %164, %167 : vector<8x8xf32>
    %169 = math.exp %168 : vector<8x8xf32>
    %cst_98 = arith.constant dense<0.000000e+00> : vector<8xf32>
    %170 = vector.multi_reduction <add>, %169, %cst_98 [1] : vector<8x8xf32> to vector<8xf32>
    %171 = vector.shape_cast %170 : vector<8xf32> to vector<8x1xf32>
    %172 = tpu.reciprocal %171 {approx = true} : vector<8x1xf32> -> vector<8x1xf32>
    %173 = vector.broadcast %172 : vector<8x1xf32> to vector<8x8xf32>
    %174 = arith.mulf %169, %173 : vector<8x8xf32>
    %175 = arith.truncf %174 : vector<8x8xf32> to vector<8x8xbf16>
    %cst_99 = arith.constant dense<0.000000e+00> : vector<8x64xf32>
    %176 = tpu.matmul %175, %159, %cst_99 {dimension_numbers = #tpu.dot_dimension_numbers<[1], [0], [0], [1], [0, 0, 1, 1], [], []>} : vector<8x8xbf16>, vector<8x64xbf16>, vector<8x64xf32> -> vector<8x64xf32>
    %177 = tpu.concatenate %153, %176 in 1 : vector<8x64xf32>, vector<8x64xf32> -> vector<8x128xf32>
    %178 = arith.truncf %177 : vector<8x128xf32> to vector<8x128xbf16>
    %c0_100 = arith.constant 0 : index
    %c0_101 = arith.constant 0 : index
    %c0_102 = arith.constant 0 : index
    %179 = vector.load %arg9[%c0_100, %c0_101, %c0_102] : memref<2x128x128xbf16, #tpu.memory_space<vmem>>, vector<1x128x128xbf16>
    %180 = vector.shape_cast %179 : vector<1x128x128xbf16> to vector<128x128xbf16>
    %cst_103 = arith.constant dense<0.000000e+00> : vector<8x128xf32>
    %181 = tpu.matmul %178, %180, %cst_103 {dimension_numbers = #tpu.dot_dimension_numbers<[1], [0], [0], [1], [0, 0, 1, 1], [], []>} : vector<8x128xbf16>, vector<128x128xbf16>, vector<8x128xf32> -> vector<8x128xf32>
    %c0_104 = arith.constant 0 : index
    %c0_105 = arith.constant 0 : index
    %c0_106 = arith.constant 0 : index
    %182 = vector.load %arg10[%c0_104, %c0_105, %c0_106] : memref<2x1x128xf32, #tpu.memory_space<vmem>>, vector<1x1x128xf32>
    %183 = vector.shape_cast %182 : vector<1x1x128xf32> to vector<1x128xf32>
    %184 = vector.broadcast %183 : vector<1x128xf32> to vector<8x128xf32>
    %185 = arith.addf %181, %184 : vector<8x128xf32>
    %186 = arith.addf %185, %120 : vector<8x128xf32>
    %c0_107 = arith.constant 0 : index
    %c0_108 = arith.constant 0 : index
    %c0_109 = arith.constant 0 : index
    %187 = vector.load %arg11[%c0_107, %c0_108, %c0_109] : memref<2x1x128xf32, #tpu.memory_space<vmem>>, vector<1x1x128xf32>
    %188 = vector.shape_cast %187 : vector<1x1x128xf32> to vector<1x128xf32>
    %c0_110 = arith.constant 0 : index
    %c0_111 = arith.constant 0 : index
    %c0_112 = arith.constant 0 : index
    %189 = vector.load %arg12[%c0_110, %c0_111, %c0_112] : memref<2x1x128xf32, #tpu.memory_space<vmem>>, vector<1x1x128xf32>
    %190 = vector.shape_cast %189 : vector<1x1x128xf32> to vector<1x128xf32>
    %cst_113 = arith.constant dense<0.000000e+00> : vector<8xf32>
    %191 = vector.multi_reduction <add>, %186, %cst_113 [1] : vector<8x128xf32> to vector<8xf32>
    %192 = vector.shape_cast %191 : vector<8xf32> to vector<8x1xf32>
    %cst_114 = arith.constant 1.280000e+02 : f32
    %193 = vector.broadcast %cst_114 : f32 to vector<8x1xf32>
    %194 = arith.divf %192, %193 : vector<8x1xf32>
    %195 = vector.broadcast %194 : vector<8x1xf32> to vector<8x128xf32>
    %196 = arith.subf %186, %195 : vector<8x128xf32>
    %197 = arith.mulf %196, %196 : vector<8x128xf32>
    %cst_115 = arith.constant dense<0.000000e+00> : vector<8xf32>
    %198 = vector.multi_reduction <add>, %197, %cst_115 [1] : vector<8x128xf32> to vector<8xf32>
    %199 = vector.shape_cast %198 : vector<8xf32> to vector<8x1xf32>
    %cst_116 = arith.constant 1.280000e+02 : f32
    %200 = vector.broadcast %cst_116 : f32 to vector<8x1xf32>
    %201 = arith.divf %199, %200 : vector<8x1xf32>
    %cst_117 = arith.constant 9.99999996E-13 : f32
    %202 = vector.broadcast %cst_117 : f32 to vector<8x1xf32>
    %203 = arith.addf %201, %202 : vector<8x1xf32>
    %204 = math.rsqrt %203 : vector<8x1xf32>
    %205 = vector.broadcast %204 : vector<8x1xf32> to vector<8x128xf32>
    %206 = arith.mulf %196, %205 : vector<8x128xf32>
    %207 = vector.broadcast %188 : vector<1x128xf32> to vector<8x128xf32>
    %208 = arith.mulf %206, %207 : vector<8x128xf32>
    %209 = vector.broadcast %190 : vector<1x128xf32> to vector<8x128xf32>
    %210 = arith.addf %208, %209 : vector<8x128xf32>
    %211 = arith.truncf %210 : vector<8x128xf32> to vector<8x128xbf16>
    %c0_118 = arith.constant 0 : index
    %c0_119 = arith.constant 0 : index
    %c0_120 = arith.constant 0 : index
    %212 = vector.load %arg13[%c0_118, %c0_119, %c0_120] : memref<2x128x256xbf16, #tpu.memory_space<vmem>>, vector<1x128x256xbf16>
    %213 = vector.shape_cast %212 : vector<1x128x256xbf16> to vector<128x256xbf16>
    %cst_121 = arith.constant dense<0.000000e+00> : vector<8x256xf32>
    %214 = tpu.matmul %211, %213, %cst_121 {dimension_numbers = #tpu.dot_dimension_numbers<[1], [0], [0], [1], [0, 0, 1, 1], [], []>} : vector<8x128xbf16>, vector<128x256xbf16>, vector<8x256xf32> -> vector<8x256xf32>
    %c0_122 = arith.constant 0 : index
    %c0_123 = arith.constant 0 : index
    %c0_124 = arith.constant 0 : index
    %215 = vector.load %arg14[%c0_122, %c0_123, %c0_124] : memref<2x1x256xf32, #tpu.memory_space<vmem>>, vector<1x1x256xf32>
    %216 = vector.shape_cast %215 : vector<1x1x256xf32> to vector<1x256xf32>
    %217 = vector.broadcast %216 : vector<1x256xf32> to vector<8x256xf32>
    %218 = arith.addf %214, %217 : vector<8x256xf32>
    %cst_125 = arith.constant 5.000000e-01 : f32
    %219 = vector.broadcast %cst_125 : f32 to vector<8x256xf32>
    %220 = arith.mulf %219, %218 : vector<8x256xf32>
    %cst_126 = arith.constant 4.471500e-02 : f32
    %221 = vector.broadcast %cst_126 : f32 to vector<8x256xf32>
    %222 = arith.mulf %221, %218 : vector<8x256xf32>
    %223 = arith.mulf %222, %218 : vector<8x256xf32>
    %224 = arith.mulf %223, %218 : vector<8x256xf32>
    %225 = arith.addf %218, %224 : vector<8x256xf32>
    %cst_127 = arith.constant 0.797884583 : f32
    %226 = vector.broadcast %cst_127 : f32 to vector<8x256xf32>
    %227 = arith.mulf %226, %225 : vector<8x256xf32>
    %228 = math.tanh %227 : vector<8x256xf32>
    %cst_128 = arith.constant 1.000000e+00 : f32
    %229 = vector.broadcast %cst_128 : f32 to vector<8x256xf32>
    %230 = arith.addf %229, %228 : vector<8x256xf32>
    %231 = arith.mulf %220, %230 : vector<8x256xf32>
    %232 = arith.truncf %231 : vector<8x256xf32> to vector<8x256xbf16>
    %c0_129 = arith.constant 0 : index
    %c0_130 = arith.constant 0 : index
    %c0_131 = arith.constant 0 : index
    %233 = vector.load %arg15[%c0_129, %c0_130, %c0_131] : memref<2x256x128xbf16, #tpu.memory_space<vmem>>, vector<1x256x128xbf16>
    %234 = vector.shape_cast %233 : vector<1x256x128xbf16> to vector<256x128xbf16>
    %cst_132 = arith.constant dense<0.000000e+00> : vector<8x128xf32>
    %235 = tpu.matmul %232, %234, %cst_132 {dimension_numbers = #tpu.dot_dimension_numbers<[1], [0], [0], [1], [0, 0, 1, 1], [], []>} : vector<8x256xbf16>, vector<256x128xbf16>, vector<8x128xf32> -> vector<8x128xf32>
    %c0_133 = arith.constant 0 : index
    %c0_134 = arith.constant 0 : index
    %c0_135 = arith.constant 0 : index
    %236 = vector.load %arg16[%c0_133, %c0_134, %c0_135] : memref<2x1x128xf32, #tpu.memory_space<vmem>>, vector<1x1x128xf32>
    %237 = vector.shape_cast %236 : vector<1x1x128xf32> to vector<1x128xf32>
    %238 = vector.broadcast %237 : vector<1x128xf32> to vector<8x128xf32>
    %239 = arith.addf %235, %238 : vector<8x128xf32>
    %240 = arith.addf %239, %210 : vector<8x128xf32>
    %c0_136 = arith.constant 0 : index
    %c0_137 = arith.constant 0 : index
    %c0_138 = arith.constant 0 : index
    %241 = vector.load %arg17[%c0_136, %c0_137, %c0_138] : memref<2x1x128xf32, #tpu.memory_space<vmem>>, vector<1x1x128xf32>
    %242 = vector.shape_cast %241 : vector<1x1x128xf32> to vector<1x128xf32>
    %c0_139 = arith.constant 0 : index
    %c0_140 = arith.constant 0 : index
    %c0_141 = arith.constant 0 : index
    %243 = vector.load %arg18[%c0_139, %c0_140, %c0_141] : memref<2x1x128xf32, #tpu.memory_space<vmem>>, vector<1x1x128xf32>
    %244 = vector.shape_cast %243 : vector<1x1x128xf32> to vector<1x128xf32>
    %cst_142 = arith.constant dense<0.000000e+00> : vector<8xf32>
    %245 = vector.multi_reduction <add>, %240, %cst_142 [1] : vector<8x128xf32> to vector<8xf32>
    %246 = vector.shape_cast %245 : vector<8xf32> to vector<8x1xf32>
    %cst_143 = arith.constant 1.280000e+02 : f32
    %247 = vector.broadcast %cst_143 : f32 to vector<8x1xf32>
    %248 = arith.divf %246, %247 : vector<8x1xf32>
    %249 = vector.broadcast %248 : vector<8x1xf32> to vector<8x128xf32>
    %250 = arith.subf %240, %249 : vector<8x128xf32>
    %251 = arith.mulf %250, %250 : vector<8x128xf32>
    %cst_144 = arith.constant dense<0.000000e+00> : vector<8xf32>
    %252 = vector.multi_reduction <add>, %251, %cst_144 [1] : vector<8x128xf32> to vector<8xf32>
    %253 = vector.shape_cast %252 : vector<8xf32> to vector<8x1xf32>
    %cst_145 = arith.constant 1.280000e+02 : f32
    %254 = vector.broadcast %cst_145 : f32 to vector<8x1xf32>
    %255 = arith.divf %253, %254 : vector<8x1xf32>
    %cst_146 = arith.constant 9.99999996E-13 : f32
    %256 = vector.broadcast %cst_146 : f32 to vector<8x1xf32>
    %257 = arith.addf %255, %256 : vector<8x1xf32>
    %258 = math.rsqrt %257 : vector<8x1xf32>
    %259 = vector.broadcast %258 : vector<8x1xf32> to vector<8x128xf32>
    %260 = arith.mulf %250, %259 : vector<8x128xf32>
    %261 = vector.broadcast %242 : vector<1x128xf32> to vector<8x128xf32>
    %262 = arith.mulf %260, %261 : vector<8x128xf32>
    %263 = vector.broadcast %244 : vector<1x128xf32> to vector<8x128xf32>
    %264 = arith.addf %262, %263 : vector<8x128xf32>
    %265 = arith.truncf %264 : vector<8x128xf32> to vector<8x128xbf16>
    %c1 = arith.constant 1 : index
    %c0_147 = arith.constant 0 : index
    %c0_148 = arith.constant 0 : index
    %266 = vector.load %arg7[%c1, %c0_147, %c0_148] : memref<2x128x384xbf16, #tpu.memory_space<vmem>>, vector<1x128x384xbf16>
    %267 = vector.shape_cast %266 : vector<1x128x384xbf16> to vector<128x384xbf16>
    %cst_149 = arith.constant dense<0.000000e+00> : vector<8x384xf32>
    %268 = tpu.matmul %265, %267, %cst_149 {dimension_numbers = #tpu.dot_dimension_numbers<[1], [0], [0], [1], [0, 0, 1, 1], [], []>} : vector<8x128xbf16>, vector<128x384xbf16>, vector<8x384xf32> -> vector<8x384xf32>
    %c1_150 = arith.constant 1 : index
    %c0_151 = arith.constant 0 : index
    %c0_152 = arith.constant 0 : index
    %269 = vector.load %arg8[%c1_150, %c0_151, %c0_152] : memref<2x1x384xf32, #tpu.memory_space<vmem>>, vector<1x1x384xf32>
    %270 = vector.shape_cast %269 : vector<1x1x384xf32> to vector<1x384xf32>
    %271 = vector.broadcast %270 : vector<1x384xf32> to vector<8x384xf32>
    %272 = arith.addf %268, %271 : vector<8x384xf32>
    %273 = vector.extract_strided_slice %272 {offsets = [0, 0], sizes = [8, 64], strides = [1, 1]} : vector<8x384xf32> to vector<8x64xf32>
    %274 = arith.truncf %273 : vector<8x64xf32> to vector<8x64xbf16>
    %275 = vector.extract_strided_slice %272 {offsets = [0, 128], sizes = [8, 64], strides = [1, 1]} : vector<8x384xf32> to vector<8x64xf32>
    %276 = arith.truncf %275 : vector<8x64xf32> to vector<8x64xbf16>
    %277 = vector.extract_strided_slice %272 {offsets = [0, 256], sizes = [8, 64], strides = [1, 1]} : vector<8x384xf32> to vector<8x64xf32>
    %278 = arith.truncf %277 : vector<8x64xf32> to vector<8x64xbf16>
    %cst_153 = arith.constant dense<0.000000e+00> : vector<8x8xf32>
    %279 = tpu.matmul %274, %276, %cst_153 {dimension_numbers = #tpu.dot_dimension_numbers<[1], [1], [0], [0], [0, 0, 1, 0], [], []>} : vector<8x64xbf16>, vector<8x64xbf16>, vector<8x8xf32> -> vector<8x8xf32>
    %cst_154 = arith.constant 1.250000e-01 : f32
    %280 = vector.broadcast %cst_154 : f32 to vector<8x8xf32>
    %281 = arith.mulf %279, %280 : vector<8x8xf32>
    %282 = vector.broadcast %122 : vector<1x8xf32> to vector<8x8xf32>
    %283 = arith.addf %281, %282 : vector<8x8xf32>
    %cst_155 = arith.constant dense<0xFF800000> : vector<8xf32>
    %284 = vector.multi_reduction <maximumf>, %283, %cst_155 [1] : vector<8x8xf32> to vector<8xf32>
    %285 = vector.shape_cast %284 : vector<8xf32> to vector<8x1xf32>
    %286 = vector.broadcast %285 : vector<8x1xf32> to vector<8x8xf32>
    %287 = arith.subf %283, %286 : vector<8x8xf32>
    %288 = math.exp %287 : vector<8x8xf32>
    %cst_156 = arith.constant dense<0.000000e+00> : vector<8xf32>
    %289 = vector.multi_reduction <add>, %288, %cst_156 [1] : vector<8x8xf32> to vector<8xf32>
    %290 = vector.shape_cast %289 : vector<8xf32> to vector<8x1xf32>
    %291 = tpu.reciprocal %290 {approx = true} : vector<8x1xf32> -> vector<8x1xf32>
    %292 = vector.broadcast %291 : vector<8x1xf32> to vector<8x8xf32>
    %293 = arith.mulf %288, %292 : vector<8x8xf32>
    %294 = arith.truncf %293 : vector<8x8xf32> to vector<8x8xbf16>
    %cst_157 = arith.constant dense<0.000000e+00> : vector<8x64xf32>
    %295 = tpu.matmul %294, %278, %cst_157 {dimension_numbers = #tpu.dot_dimension_numbers<[1], [0], [0], [1], [0, 0, 1, 1], [], []>} : vector<8x8xbf16>, vector<8x64xbf16>, vector<8x64xf32> -> vector<8x64xf32>
    %296 = vector.extract_strided_slice %272 {offsets = [0, 64], sizes = [8, 64], strides = [1, 1]} : vector<8x384xf32> to vector<8x64xf32>
    %297 = arith.truncf %296 : vector<8x64xf32> to vector<8x64xbf16>
    %298 = vector.extract_strided_slice %272 {offsets = [0, 192], sizes = [8, 64], strides = [1, 1]} : vector<8x384xf32> to vector<8x64xf32>
    %299 = arith.truncf %298 : vector<8x64xf32> to vector<8x64xbf16>
    %300 = vector.extract_strided_slice %272 {offsets = [0, 320], sizes = [8, 64], strides = [1, 1]} : vector<8x384xf32> to vector<8x64xf32>
    %301 = arith.truncf %300 : vector<8x64xf32> to vector<8x64xbf16>
    %cst_158 = arith.constant dense<0.000000e+00> : vector<8x8xf32>
    %302 = tpu.matmul %297, %299, %cst_158 {dimension_numbers = #tpu.dot_dimension_numbers<[1], [1], [0], [0], [0, 0, 1, 0], [], []>} : vector<8x64xbf16>, vector<8x64xbf16>, vector<8x8xf32> -> vector<8x8xf32>
    %cst_159 = arith.constant 1.250000e-01 : f32
    %303 = vector.broadcast %cst_159 : f32 to vector<8x8xf32>
    %304 = arith.mulf %302, %303 : vector<8x8xf32>
    %305 = vector.broadcast %122 : vector<1x8xf32> to vector<8x8xf32>
    %306 = arith.addf %304, %305 : vector<8x8xf32>
    %cst_160 = arith.constant dense<0xFF800000> : vector<8xf32>
    %307 = vector.multi_reduction <maximumf>, %306, %cst_160 [1] : vector<8x8xf32> to vector<8xf32>
    %308 = vector.shape_cast %307 : vector<8xf32> to vector<8x1xf32>
    %309 = vector.broadcast %308 : vector<8x1xf32> to vector<8x8xf32>
    %310 = arith.subf %306, %309 : vector<8x8xf32>
    %311 = math.exp %310 : vector<8x8xf32>
    %cst_161 = arith.constant dense<0.000000e+00> : vector<8xf32>
    %312 = vector.multi_reduction <add>, %311, %cst_161 [1] : vector<8x8xf32> to vector<8xf32>
    %313 = vector.shape_cast %312 : vector<8xf32> to vector<8x1xf32>
    %314 = tpu.reciprocal %313 {approx = true} : vector<8x1xf32> -> vector<8x1xf32>
    %315 = vector.broadcast %314 : vector<8x1xf32> to vector<8x8xf32>
    %316 = arith.mulf %311, %315 : vector<8x8xf32>
    %317 = arith.truncf %316 : vector<8x8xf32> to vector<8x8xbf16>
    %cst_162 = arith.constant dense<0.000000e+00> : vector<8x64xf32>
    %318 = tpu.matmul %317, %301, %cst_162 {dimension_numbers = #tpu.dot_dimension_numbers<[1], [0], [0], [1], [0, 0, 1, 1], [], []>} : vector<8x8xbf16>, vector<8x64xbf16>, vector<8x64xf32> -> vector<8x64xf32>
    %319 = tpu.concatenate %295, %318 in 1 : vector<8x64xf32>, vector<8x64xf32> -> vector<8x128xf32>
    %320 = arith.truncf %319 : vector<8x128xf32> to vector<8x128xbf16>
    %c1_163 = arith.constant 1 : index
    %c0_164 = arith.constant 0 : index
    %c0_165 = arith.constant 0 : index
    %321 = vector.load %arg9[%c1_163, %c0_164, %c0_165] : memref<2x128x128xbf16, #tpu.memory_space<vmem>>, vector<1x128x128xbf16>
    %322 = vector.shape_cast %321 : vector<1x128x128xbf16> to vector<128x128xbf16>
    %cst_166 = arith.constant dense<0.000000e+00> : vector<8x128xf32>
    %323 = tpu.matmul %320, %322, %cst_166 {dimension_numbers = #tpu.dot_dimension_numbers<[1], [0], [0], [1], [0, 0, 1, 1], [], []>} : vector<8x128xbf16>, vector<128x128xbf16>, vector<8x128xf32> -> vector<8x128xf32>
    %c1_167 = arith.constant 1 : index
    %c0_168 = arith.constant 0 : index
    %c0_169 = arith.constant 0 : index
    %324 = vector.load %arg10[%c1_167, %c0_168, %c0_169] : memref<2x1x128xf32, #tpu.memory_space<vmem>>, vector<1x1x128xf32>
    %325 = vector.shape_cast %324 : vector<1x1x128xf32> to vector<1x128xf32>
    %326 = vector.broadcast %325 : vector<1x128xf32> to vector<8x128xf32>
    %327 = arith.addf %323, %326 : vector<8x128xf32>
    %328 = arith.addf %327, %264 : vector<8x128xf32>
    %c1_170 = arith.constant 1 : index
    %c0_171 = arith.constant 0 : index
    %c0_172 = arith.constant 0 : index
    %329 = vector.load %arg11[%c1_170, %c0_171, %c0_172] : memref<2x1x128xf32, #tpu.memory_space<vmem>>, vector<1x1x128xf32>
    %330 = vector.shape_cast %329 : vector<1x1x128xf32> to vector<1x128xf32>
    %c1_173 = arith.constant 1 : index
    %c0_174 = arith.constant 0 : index
    %c0_175 = arith.constant 0 : index
    %331 = vector.load %arg12[%c1_173, %c0_174, %c0_175] : memref<2x1x128xf32, #tpu.memory_space<vmem>>, vector<1x1x128xf32>
    %332 = vector.shape_cast %331 : vector<1x1x128xf32> to vector<1x128xf32>
    %cst_176 = arith.constant dense<0.000000e+00> : vector<8xf32>
    %333 = vector.multi_reduction <add>, %328, %cst_176 [1] : vector<8x128xf32> to vector<8xf32>
    %334 = vector.shape_cast %333 : vector<8xf32> to vector<8x1xf32>
    %cst_177 = arith.constant 1.280000e+02 : f32
    %335 = vector.broadcast %cst_177 : f32 to vector<8x1xf32>
    %336 = arith.divf %334, %335 : vector<8x1xf32>
    %337 = vector.broadcast %336 : vector<8x1xf32> to vector<8x128xf32>
    %338 = arith.subf %328, %337 : vector<8x128xf32>
    %339 = arith.mulf %338, %338 : vector<8x128xf32>
    %cst_178 = arith.constant dense<0.000000e+00> : vector<8xf32>
    %340 = vector.multi_reduction <add>, %339, %cst_178 [1] : vector<8x128xf32> to vector<8xf32>
    %341 = vector.shape_cast %340 : vector<8xf32> to vector<8x1xf32>
    %cst_179 = arith.constant 1.280000e+02 : f32
    %342 = vector.broadcast %cst_179 : f32 to vector<8x1xf32>
    %343 = arith.divf %341, %342 : vector<8x1xf32>
    %cst_180 = arith.constant 9.99999996E-13 : f32
    %344 = vector.broadcast %cst_180 : f32 to vector<8x1xf32>
    %345 = arith.addf %343, %344 : vector<8x1xf32>
    %346 = math.rsqrt %345 : vector<8x1xf32>
    %347 = vector.broadcast %346 : vector<8x1xf32> to vector<8x128xf32>
    %348 = arith.mulf %338, %347 : vector<8x128xf32>
    %349 = vector.broadcast %330 : vector<1x128xf32> to vector<8x128xf32>
    %350 = arith.mulf %348, %349 : vector<8x128xf32>
    %351 = vector.broadcast %332 : vector<1x128xf32> to vector<8x128xf32>
    %352 = arith.addf %350, %351 : vector<8x128xf32>
    %353 = arith.truncf %352 : vector<8x128xf32> to vector<8x128xbf16>
    %c1_181 = arith.constant 1 : index
    %c0_182 = arith.constant 0 : index
    %c0_183 = arith.constant 0 : index
    %354 = vector.load %arg13[%c1_181, %c0_182, %c0_183] : memref<2x128x256xbf16, #tpu.memory_space<vmem>>, vector<1x128x256xbf16>
    %355 = vector.shape_cast %354 : vector<1x128x256xbf16> to vector<128x256xbf16>
    %cst_184 = arith.constant dense<0.000000e+00> : vector<8x256xf32>
    %356 = tpu.matmul %353, %355, %cst_184 {dimension_numbers = #tpu.dot_dimension_numbers<[1], [0], [0], [1], [0, 0, 1, 1], [], []>} : vector<8x128xbf16>, vector<128x256xbf16>, vector<8x256xf32> -> vector<8x256xf32>
    %c1_185 = arith.constant 1 : index
    %c0_186 = arith.constant 0 : index
    %c0_187 = arith.constant 0 : index
    %357 = vector.load %arg14[%c1_185, %c0_186, %c0_187] : memref<2x1x256xf32, #tpu.memory_space<vmem>>, vector<1x1x256xf32>
    %358 = vector.shape_cast %357 : vector<1x1x256xf32> to vector<1x256xf32>
    %359 = vector.broadcast %358 : vector<1x256xf32> to vector<8x256xf32>
    %360 = arith.addf %356, %359 : vector<8x256xf32>
    %cst_188 = arith.constant 5.000000e-01 : f32
    %361 = vector.broadcast %cst_188 : f32 to vector<8x256xf32>
    %362 = arith.mulf %361, %360 : vector<8x256xf32>
    %cst_189 = arith.constant 4.471500e-02 : f32
    %363 = vector.broadcast %cst_189 : f32 to vector<8x256xf32>
    %364 = arith.mulf %363, %360 : vector<8x256xf32>
    %365 = arith.mulf %364, %360 : vector<8x256xf32>
    %366 = arith.mulf %365, %360 : vector<8x256xf32>
    %367 = arith.addf %360, %366 : vector<8x256xf32>
    %cst_190 = arith.constant 0.797884583 : f32
    %368 = vector.broadcast %cst_190 : f32 to vector<8x256xf32>
    %369 = arith.mulf %368, %367 : vector<8x256xf32>
    %370 = math.tanh %369 : vector<8x256xf32>
    %cst_191 = arith.constant 1.000000e+00 : f32
    %371 = vector.broadcast %cst_191 : f32 to vector<8x256xf32>
    %372 = arith.addf %371, %370 : vector<8x256xf32>
    %373 = arith.mulf %362, %372 : vector<8x256xf32>
    %374 = arith.truncf %373 : vector<8x256xf32> to vector<8x256xbf16>
    %c1_192 = arith.constant 1 : index
    %c0_193 = arith.constant 0 : index
    %c0_194 = arith.constant 0 : index
    %375 = vector.load %arg15[%c1_192, %c0_193, %c0_194] : memref<2x256x128xbf16, #tpu.memory_space<vmem>>, vector<1x256x128xbf16>
    %376 = vector.shape_cast %375 : vector<1x256x128xbf16> to vector<256x128xbf16>
    %cst_195 = arith.constant dense<0.000000e+00> : vector<8x128xf32>
    %377 = tpu.matmul %374, %376, %cst_195 {dimension_numbers = #tpu.dot_dimension_numbers<[1], [0], [0], [1], [0, 0, 1, 1], [], []>} : vector<8x256xbf16>, vector<256x128xbf16>, vector<8x128xf32> -> vector<8x128xf32>
    %c1_196 = arith.constant 1 : index
    %c0_197 = arith.constant 0 : index
    %c0_198 = arith.constant 0 : index
    %378 = vector.load %arg16[%c1_196, %c0_197, %c0_198] : memref<2x1x128xf32, #tpu.memory_space<vmem>>, vector<1x1x128xf32>
    %379 = vector.shape_cast %378 : vector<1x1x128xf32> to vector<1x128xf32>
    %380 = vector.broadcast %379 : vector<1x128xf32> to vector<8x128xf32>
    %381 = arith.addf %377, %380 : vector<8x128xf32>
    %382 = arith.addf %381, %352 : vector<8x128xf32>
    %c1_199 = arith.constant 1 : index
    %c0_200 = arith.constant 0 : index
    %c0_201 = arith.constant 0 : index
    %383 = vector.load %arg17[%c1_199, %c0_200, %c0_201] : memref<2x1x128xf32, #tpu.memory_space<vmem>>, vector<1x1x128xf32>
    %384 = vector.shape_cast %383 : vector<1x1x128xf32> to vector<1x128xf32>
    %c1_202 = arith.constant 1 : index
    %c0_203 = arith.constant 0 : index
    %c0_204 = arith.constant 0 : index
    %385 = vector.load %arg18[%c1_202, %c0_203, %c0_204] : memref<2x1x128xf32, #tpu.memory_space<vmem>>, vector<1x1x128xf32>
    %386 = vector.shape_cast %385 : vector<1x1x128xf32> to vector<1x128xf32>
    %cst_205 = arith.constant dense<0.000000e+00> : vector<8xf32>
    %387 = vector.multi_reduction <add>, %382, %cst_205 [1] : vector<8x128xf32> to vector<8xf32>
    %388 = vector.shape_cast %387 : vector<8xf32> to vector<8x1xf32>
    %cst_206 = arith.constant 1.280000e+02 : f32
    %389 = vector.broadcast %cst_206 : f32 to vector<8x1xf32>
    %390 = arith.divf %388, %389 : vector<8x1xf32>
    %391 = vector.broadcast %390 : vector<8x1xf32> to vector<8x128xf32>
    %392 = arith.subf %382, %391 : vector<8x128xf32>
    %393 = arith.mulf %392, %392 : vector<8x128xf32>
    %cst_207 = arith.constant dense<0.000000e+00> : vector<8xf32>
    %394 = vector.multi_reduction <add>, %393, %cst_207 [1] : vector<8x128xf32> to vector<8xf32>
    %395 = vector.shape_cast %394 : vector<8xf32> to vector<8x1xf32>
    %cst_208 = arith.constant 1.280000e+02 : f32
    %396 = vector.broadcast %cst_208 : f32 to vector<8x1xf32>
    %397 = arith.divf %395, %396 : vector<8x1xf32>
    %cst_209 = arith.constant 9.99999996E-13 : f32
    %398 = vector.broadcast %cst_209 : f32 to vector<8x1xf32>
    %399 = arith.addf %397, %398 : vector<8x1xf32>
    %400 = math.rsqrt %399 : vector<8x1xf32>
    %401 = vector.broadcast %400 : vector<8x1xf32> to vector<8x128xf32>
    %402 = arith.mulf %392, %401 : vector<8x128xf32>
    %403 = vector.broadcast %384 : vector<1x128xf32> to vector<8x128xf32>
    %404 = arith.mulf %402, %403 : vector<8x128xf32>
    %405 = vector.broadcast %386 : vector<1x128xf32> to vector<8x128xf32>
    %406 = arith.addf %404, %405 : vector<8x128xf32>
    %407 = vector.extract_strided_slice %406 {offsets = [0, 0], sizes = [1, 128], strides = [1, 1]} : vector<8x128xf32> to vector<1x128xf32>
    %c0_210 = arith.constant 0 : index
    %c0_211 = arith.constant 0 : index
    %408 = vector.load %arg19[%c0_210, %c0_211] : memref<128x128xf32, #tpu.memory_space<vmem>>, vector<128x128xf32>
    %cst_212 = arith.constant dense<0.000000e+00> : vector<1x128xf32>
    %409 = tpu.matmul %407, %408, %cst_212 {dimension_numbers = #tpu.dot_dimension_numbers<[1], [0], [0], [1], [0, 0, 1, 1], [], []>} : vector<1x128xf32>, vector<128x128xf32>, vector<1x128xf32> -> vector<1x128xf32>
    %c0_213 = arith.constant 0 : index
    %c0_214 = arith.constant 0 : index
    %410 = vector.load %arg20[%c0_213, %c0_214] : memref<1x128xf32, #tpu.memory_space<vmem>>, vector<1x128xf32>
    %411 = arith.addf %409, %410 : vector<1x128xf32>
    %c0_215 = arith.constant 0 : index
    %c0_216 = arith.constant 0 : index
    %c0_217 = arith.constant 0 : index
    %412 = vector.load %arg21[%c0_215, %c0_216, %c0_217] : memref<1x1x128xf32, #tpu.memory_space<vmem>>, vector<1x1x128xf32>
    %413 = vector.shape_cast %412 : vector<1x1x128xf32> to vector<1x128xf32>
    %414 = vector.shape_cast %411 : vector<1x128xf32> to vector<1x1x128xf32>
    tpu.vector_store %arg21[%c0_215, %c0_216, %c0_217], %414 {strides = array<i32>} : memref<1x1x128xf32, #tpu.memory_space<vmem>>, vector<1x1x128xf32>,
    return
  }
  func.func @transform_0(%arg0: i32, %arg1: memref<16xi32, #tpu.memory_space<smem>>) -> (i32, i32) {
    %c0_i32 = arith.constant 0 : i32
    %c0_i32_0 = arith.constant 0 : i32
    %c0_i32_1 = arith.constant 0 : i32
    return %c0_i32, %c0_i32_0 : i32, i32
  }
  func.func @transform_1(%arg0: i32, %arg1: memref<16xi32, #tpu.memory_space<smem>>) -> (i32, i32) {
    %c0_i32 = arith.constant 0 : i32
    %c0_i32_0 = arith.constant 0 : i32
    %c0_i32_1 = arith.constant 0 : i32
    return %c0_i32, %c0_i32_0 : i32, i32
  }
  func.func @transform_3(%arg0: i32, %arg1: memref<16xi32, #tpu.memory_space<smem>>) -> (i32, i32) {
    %c0_i32 = arith.constant 0 : i32
    %c0_i32_0 = arith.constant 0 : i32
    %c0_i32_1 = arith.constant 0 : i32
    return %c0_i32, %c0_i32_0 : i32, i32
  }
  func.func @transform_4(%arg0: i32, %arg1: memref<16xi32, #tpu.memory_space<smem>>) -> (i32, i32) {
    %c0_i32 = arith.constant 0 : i32
    %c0_i32_0 = arith.constant 0 : i32
    %c0_i32_1 = arith.constant 0 : i32
    return %c0_i32, %c0_i32_0 : i32, i32
  }
  func.func @transform_5(%arg0: i32, %arg1: memref<16xi32, #tpu.memory_space<smem>>) -> (i32, i32, i32) {
    %c0_i32 = arith.constant 0 : i32
    %c0_i32_0 = arith.constant 0 : i32
    %c0_i32_1 = arith.constant 0 : i32
    %c0_i32_2 = arith.constant 0 : i32
    return %c0_i32, %c0_i32_0, %c0_i32_1 : i32, i32, i32
  }
  func.func @transform_6(%arg0: i32, %arg1: memref<16xi32, #tpu.memory_space<smem>>) -> (i32, i32, i32) {
    %c0_i32 = arith.constant 0 : i32
    %c0_i32_0 = arith.constant 0 : i32
    %c0_i32_1 = arith.constant 0 : i32
    %c0_i32_2 = arith.constant 0 : i32
    return %c0_i32, %c0_i32_0, %c0_i32_1 : i32, i32, i32
  }
  func.func @transform_7(%arg0: i32, %arg1: memref<16xi32, #tpu.memory_space<smem>>) -> (i32, i32, i32) {
    %c0_i32 = arith.constant 0 : i32
    %c0_i32_0 = arith.constant 0 : i32
    %c0_i32_1 = arith.constant 0 : i32
    %c0_i32_2 = arith.constant 0 : i32
    return %c0_i32, %c0_i32_0, %c0_i32_1 : i32, i32, i32
  }
  func.func @transform_8(%arg0: i32, %arg1: memref<16xi32, #tpu.memory_space<smem>>) -> (i32, i32, i32) {
    %c0_i32 = arith.constant 0 : i32
    %c0_i32_0 = arith.constant 0 : i32
    %c0_i32_1 = arith.constant 0 : i32
    %c0_i32_2 = arith.constant 0 : i32
    return %c0_i32, %c0_i32_0, %c0_i32_1 : i32, i32, i32
  }
  func.func @transform_9(%arg0: i32, %arg1: memref<16xi32, #tpu.memory_space<smem>>) -> (i32, i32, i32) {
    %c0_i32 = arith.constant 0 : i32
    %c0_i32_0 = arith.constant 0 : i32
    %c0_i32_1 = arith.constant 0 : i32
    %c0_i32_2 = arith.constant 0 : i32
    return %c0_i32, %c0_i32_0, %c0_i32_1 : i32, i32, i32
  }
  func.func @transform_10(%arg0: i32, %arg1: memref<16xi32, #tpu.memory_space<smem>>) -> (i32, i32, i32) {
    %c0_i32 = arith.constant 0 : i32
    %c0_i32_0 = arith.constant 0 : i32
    %c0_i32_1 = arith.constant 0 : i32
    %c0_i32_2 = arith.constant 0 : i32
    return %c0_i32, %c0_i32_0, %c0_i32_1 : i32, i32, i32
  }
  func.func @transform_11(%arg0: i32, %arg1: memref<16xi32, #tpu.memory_space<smem>>) -> (i32, i32, i32) {
    %c0_i32 = arith.constant 0 : i32
    %c0_i32_0 = arith.constant 0 : i32
    %c0_i32_1 = arith.constant 0 : i32
    %c0_i32_2 = arith.constant 0 : i32
    return %c0_i32, %c0_i32_0, %c0_i32_1 : i32, i32, i32
  }
  func.func @transform_12(%arg0: i32, %arg1: memref<16xi32, #tpu.memory_space<smem>>) -> (i32, i32, i32) {
    %c0_i32 = arith.constant 0 : i32
    %c0_i32_0 = arith.constant 0 : i32
    %c0_i32_1 = arith.constant 0 : i32
    %c0_i32_2 = arith.constant 0 : i32
    return %c0_i32, %c0_i32_0, %c0_i32_1 : i32, i32, i32
  }
  func.func @transform_13(%arg0: i32, %arg1: memref<16xi32, #tpu.memory_space<smem>>) -> (i32, i32, i32) {
    %c0_i32 = arith.constant 0 : i32
    %c0_i32_0 = arith.constant 0 : i32
    %c0_i32_1 = arith.constant 0 : i32
    %c0_i32_2 = arith.constant 0 : i32
    return %c0_i32, %c0_i32_0, %c0_i32_1 : i32, i32, i32
  }
  func.func @transform_14(%arg0: i32, %arg1: memref<16xi32, #tpu.memory_space<smem>>) -> (i32, i32, i32) {
    %c0_i32 = arith.constant 0 : i32
    %c0_i32_0 = arith.constant 0 : i32
    %c0_i32_1 = arith.constant 0 : i32
    %c0_i32_2 = arith.constant 0 : i32
    return %c0_i32, %c0_i32_0, %c0_i32_1 : i32, i32, i32
  }
  func.func @transform_15(%arg0: i32, %arg1: memref<16xi32, #tpu.memory_space<smem>>) -> (i32, i32, i32) {
    %c0_i32 = arith.constant 0 : i32
    %c0_i32_0 = arith.constant 0 : i32
    %c0_i32_1 = arith.constant 0 : i32
    %c0_i32_2 = arith.constant 0 : i32
    return %c0_i32, %c0_i32_0, %c0_i32_1 : i32, i32, i32
  }
  func.func @transform_16(%arg0: i32, %arg1: memref<16xi32, #tpu.memory_space<smem>>) -> (i32, i32, i32) {
    %c0_i32 = arith.constant 0 : i32
    %c0_i32_0 = arith.constant 0 : i32
    %c0_i32_1 = arith.constant 0 : i32
    %c0_i32_2 = arith.constant 0 : i32
    return %c0_i32, %c0_i32_0, %c0_i32_1 : i32, i32, i32
  }
  func.func @transform_17(%arg0: i32, %arg1: memref<16xi32, #tpu.memory_space<smem>>) -> (i32, i32) {
    %c0_i32 = arith.constant 0 : i32
    %c0_i32_0 = arith.constant 0 : i32
    %c0_i32_1 = arith.constant 0 : i32
    return %c0_i32, %c0_i32_0 : i32, i32
  }
  func.func @transform_18(%arg0: i32, %arg1: memref<16xi32, #tpu.memory_space<smem>>) -> (i32, i32) {
    %c0_i32 = arith.constant 0 : i32
    %c0_i32_0 = arith.constant 0 : i32
    %c0_i32_1 = arith.constant 0 : i32
    return %c0_i32, %c0_i32_0 : i32, i32
  }
  func.func @transform_19(%arg0: i32, %arg1: memref<16xi32, #tpu.memory_space<smem>>) -> (i32, i32, i32) {
    %c0_i32 = arith.constant 0 : i32
    %c0_i32_0 = arith.constant 0 : i32
    %c0_i32_1 = arith.constant 0 : i32
    return %arg0, %c0_i32, %c0_i32_0 : i32, i32, i32
  }
}

</mosaic_0001>

<llo_original>
// kernel: text_classification_forward.1
$region0: #{text_classification_forward.1}
  #allocation0 [shape = 'u32[]', space=smem, size = 0x4, offset = 0x4, fixed_abs, tag = 'smem constant byte address 0x4 - core index']
  #allocation1 [shape = 'u32[144,128]{1,0:T(1,128)}', space=vmem, size = 0x12000, scoped, tag = 'internal scratch']
  #allocation2 [shape = 'f32[8,128]{1,0:T(8,128)}', space=vmem, size = 0x1000, scoped, tag = 'scratch operand']
  #allocation3 [shape = 's32[8]{0}', space=sflag, size = 0x20, scoped, tag = 'scratch operand']
  #allocation4 [shape = 's32[1]{0}', space=sflag, size = 0x4, scoped, tag = 'scoped memory for text_classification_forward.1']
  #allocation5 [shape = 'u8[512]{0}', space=smem, size = 0x200, scoped, tag = 'prefetched SMEM operand 0']
  #allocation16 [shape = 's32[]', space=sflag, size = 0x4, offset = 0, fixed_abs, tag = 'sflag constant byte address 0x0 - dummy sync flag']
  #allocation17 [shape = 's32[]', space=sflag, size = 0x4, offset = 0, fixed_abs, tag = 'sflag constant byte address 0x0 - dummy sync flag']
  #allocation18 [shape = 'u32[]', space=smem, size = 0x4, offset = 0x44, fixed_abs, tag = 'smem constant byte address 0x44 - assertion arg 0']
  #allocation19 [shape = 'u32[]', space=smem, size = 0x4, offset = 0x48, fixed_abs, tag = 'smem constant byte address 0x48 - assertion arg 1']
  #allocation20 [shape = 's32[]', space=sflag, size = 0x4, offset = 0, fixed_abs, tag = 'sflag constant byte address 0x0 - dummy sync flag']
  #allocation21 [shape = 's32[]', space=sflag, size = 0x4, offset = 0, fixed_abs, tag = 'sflag constant byte address 0x0 - dummy sync flag']
  #allocation22 [shape = 's32[]', space=sflag, size = 0x4, offset = 0, fixed_abs, tag = 'sflag constant byte address 0x0 - dummy sync flag']
  #allocation23 [shape = 's32[]', space=sflag, size = 0x4, offset = 0, fixed_abs, tag = 'sflag constant byte address 0x0 - dummy sync flag']
  #allocation24 [shape = 's32[]', space=sflag, size = 0x4, offset = 0, fixed_abs, tag = 'sflag constant byte address 0x0 - dummy sync flag']
  #allocation25 [shape = 's32[]', space=sflag, size = 0x4, offset = 0, fixed_abs, tag = 'sflag constant byte address 0x0 - dummy sync flag']
  #allocation26 [shape = 's32[]', space=sflag, size = 0x4, offset = 0, fixed_abs, tag = 'sflag constant byte address 0x0 - dummy sync flag']
  #allocation27 [shape = 's32[]', space=sflag, size = 0x4, offset = 0, fixed_abs, tag = 'sflag constant byte address 0x0 - dummy sync flag']
  #allocation28 [shape = 's32[]', space=sflag, size = 0x4, offset = 0, fixed_abs, tag = 'sflag constant byte address 0x0 - dummy sync flag']
  #allocation29 [shape = 's32[]', space=sflag, size = 0x4, offset = 0, fixed_abs, tag = 'sflag constant byte address 0x0 - dummy sync flag']
  #allocation30 [shape = 's32[]', space=sflag, size = 0x4, offset = 0, fixed_abs, tag = 'sflag constant byte address 0x0 - dummy sync flag']
  #allocation31 [shape = 's32[]', space=sflag, size = 0x4, offset = 0, fixed_abs, tag = 'sflag constant byte address 0x0 - dummy sync flag']
  #allocation32 [shape = 's32[]', space=sflag, size = 0x4, offset = 0, fixed_abs, tag = 'sflag constant byte address 0x0 - dummy sync flag']
  #allocation33 [shape = 's32[]', space=sflag, size = 0x4, offset = 0, fixed_abs, tag = 'sflag constant byte address 0x0 - dummy sync flag']
  %s0 = inlined_call_operand.vmem [shape: s32[16], index: 0, kind: input, shape index: {}]
  %s1 = inlined_call_operand.hbm [shape: f32[64,128], index: 1, kind: input, shape index: {}]
  %s2 = inlined_call_operand.vmem [shape: f32[2,8], index: 2, kind: input, shape index: {}]
  %s3 = inlined_call_operand.hbm [shape: f32[512,128], index: 3, kind: input, shape index: {}]
  %s4 = inlined_call_operand.vmem [shape: f32[1,128], index: 4, kind: input, shape index: {}]
  %s5 = inlined_call_operand.vmem [shape: f32[1,128], index: 5, kind: input, shape index: {}]
  %s6 = inlined_call_operand.vmem [shape: bf16[2,128,384], index: 6, kind: input, shape index: {}]
  %s7 = inlined_call_operand.vmem [shape: f32[2,1,384], index: 7, kind: input, shape index: {}]
  %s8 = inlined_call_operand.hbm [shape: bf16[2,128,128], index: 8, kind: input, shape index: {}]
  %s9 = inlined_call_operand.vmem [shape: f32[2,1,128], index: 9, kind: input, shape index: {}]
  %s10 = inlined_call_operand.vmem [shape: f32[2,1,128], index: 10, kind: input, shape index: {}]
  %s11 = inlined_call_operand.vmem [shape: f32[2,1,128], index: 11, kind: input, shape index: {}]
  %s12 = inlined_call_operand.hbm [shape: bf16[2,128,256], index: 12, kind: input, shape index: {}]
  %s13 = inlined_call_operand.vmem [shape: f32[2,1,256], index: 13, kind: input, shape index: {}]
  %s14 = inlined_call_operand.hbm [shape: bf16[2,256,128], index: 14, kind: input, shape index: {}]
  %s15 = inlined_call_operand.vmem [shape: f32[2,1,128], index: 15, kind: input, shape index: {}]
  %s16 = inlined_call_operand.hbm [shape: f32[2,1,128], index: 16, kind: input, shape index: {}]
  %s17 = inlined_call_operand.vmem [shape: f32[2,1,128], index: 17, kind: input, shape index: {}]
  %s18 = inlined_call_operand.vmem [shape: f32[128,128], index: 18, kind: input, shape index: {}]
  %s19 = inlined_call_operand.vmem [shape: f32[1,128], index: 19, kind: input, shape index: {}]
  %s20 = inlined_call_operand.hbm [shape: f32[2,1,128], index: 20, kind: output, shape index: {}]
  %s21 = sld [smem:[#allocation0]]
  $region157: #{text_classification_forward.1} parent=0
    _
  %s23 = ssub.s32 1, %s21
  %s24 = scalar_select 0, %s23, %s21
  %s25 = sshll.u32 %s0, 4
  %s26 = int_to_ptr.vmem [resolvable:$true] %s25
  %28 = dma.vmem_to_smem %s26, 16, [#allocation5], [#allocation4]
  %29 = dma.done [#allocation4], 16
  %30 = sfence
  $region1: #{text_classification_forward.1} parent=0
    #allocation6 [shape = 'u8[4096]{0}', space=vmem, size = 0x1000, scoped, tag = 'input window, operand 1, single buffered']
    #allocation7 [shape = 's32[2]{0}', space=sflag, size = 0x8, scoped, tag = 'scoped memory for text_classification_forward.1']
    #allocation8 [shape = 's32[2]{0}', space=sflag, size = 0x8, scoped, tag = 'scoped memory for text_classification_forward.1']
    #allocation9 [shape = 'u8[65536]{0}', space=vmem, size = 0x10000, scoped, tag = 'input window, operand 8, single buffered']
    #allocation10 [shape = 's32[1]{0}', space=sflag, size = 0x4, scoped, tag = 'scoped memory for text_classification_forward.1']
    #allocation11 [shape = 'u8[131072]{0}', space=vmem, size = 0x20000, scoped, tag = 'input window, operand 12, single buffered']
    #allocation12 [shape = 'u8[131072]{0}', space=vmem, size = 0x20000, scoped, tag = 'input window, operand 14, single buffered']
    #allocation13 [shape = 's32[1]{0}', space=sflag, size = 0x4, scoped, tag = 'scoped memory for text_classification_forward.1']
    #allocation14 [shape = 'u8[1024]{0}', space=vmem, size = 0x400, scoped, tag = 'input window, operand 16, single buffered']
    #allocation15 [shape = 'u8[1024]{0}', space=vmem, size = 0x400, scoped, tag = 'output window, operand 0']
    %31 = vsyncpa [#allocation7], 0
    %32 = vsyncpa [#allocation10], 0
    %33 = vsyncpa [#allocation13], 0
    %34 = vsyncpa [#allocation8], 0
    %s35 = scalar_lea.sflag [#allocation8], 1
    %36 = vsyncpa %s35, 0
    loop: start=0, step=1, limit=4
    $region2: #{text_classification_forward.1} parent=1 // loop_pre_header
      _
    $region3: #{text_classification_forward.1} parent=1 // loop_header
      %s38 = sphi 0, %s42
      %p39 = scmp.ge.s32.totalorder %s38, 4
      %s46 = sphi 0, %s46
      %s48 = sphi 0, %s46
      %s49 = sphi 0, %s48
      %s63 = sphi 0, %s49
      %s67 = sphi 0, %s67
      %s69 = sphi 0, %s67
      %s70 = sphi 0, %s69
      %s84 = sphi 0, %s70
      %s88 = sphi 0, %s88
      %s90 = sphi 0, %s88
      %s91 = sphi 0, %s90
      %s105 = sphi 0, %s91
      %s109 = sphi 0, %s109
      %s111 = sphi 0, %s109
      %s112 = sphi 0, %s111
      %s126 = sphi 0, %s112
      %s130 = sphi 0, %s130
      %s132 = sphi 0, %s130
      %s133 = sphi 0, %s132
      %s147 = sphi 0, %s133
      %s151 = sphi 0, %s151
      %s153 = sphi 0, %s151
      %s154 = sphi 0, %s153
      %s168 = sphi 0, %s154
      %s172 = sphi 0, %s172
      %s174 = sphi 0, %s172
      %s175 = sphi 0, %s174
      %s189 = sphi 0, %s175
      %s193 = sphi 0, %s193
      %s195 = sphi 0, %s193
      %s196 = sphi 0, %s195
      %s210 = sphi 0, %s196
      %s214 = sphi 0, %s214
      %s216 = sphi 0, %s214
      %s217 = sphi 0, %s216
      %s231 = sphi 0, %s217
      %s235 = sphi 0, %s235
      %s237 = sphi 0, %s235
      %s238 = sphi 0, %s237
      %s252 = sphi 0, %s238
      %s256 = sphi 0, %s256
      %s258 = sphi 0, %s256
      %s259 = sphi 0, %s258
      %s273 = sphi 0, %s259
      %s277 = sphi 0, %s277
      %s279 = sphi 0, %s277
      %s280 = sphi 0, %s279
      %s294 = sphi 0, %s280
      %s298 = sphi 0, %s298
      %s300 = sphi 0, %s298
      %s301 = sphi 0, %s300
      %s315 = sphi 0, %s301
      %s319 = sphi 0, %s319
      %s321 = sphi 0, %s319
      %s322 = sphi 0, %s321
      %s336 = sphi 0, %s322
      %s340 = sphi 0, %s340
      %s342 = sphi 0, %s340
      %s343 = sphi 0, %s342
      %s357 = sphi 0, %s343
      %s361 = sphi 0, %s361
      %s363 = sphi 0, %s361
      %s364 = sphi 0, %s363
      %s378 = sphi 0, %s364
      %s382 = sphi 0, %s382
      %s384 = sphi 0, %s382
      %s385 = sphi 0, %s384
      %s399 = sphi 0, %s385
      %s403 = sphi 0, %s403
      %s405 = sphi 0, %s403
      %s406 = sphi 0, %s405
      %s420 = sphi 0, %s406
      %s426 = sphi 0, %s428
      %s429 = sphi 0, %s426
      %s430 = sphi 0, %s429
      %s446 = sphi 0, %s430
    $region4: #{text_classification_forward.1} parent=1 // loop_header_branch
      %41 = sbr.rel (%p39) target = $region8
    $region5: #{text_classification_forward.1} parent=1 // loop_body
      %s43 = ssub.s32 %s38, 1
      %s44 = ssub.s32 %s38, 2
      %s45 = sadd.s32 %s38, 1
      %s47 = sadd.s32 %s46, 1
      %p50 = scmp.eq.s32.totalorder %s38, 1
      %p51 = scmp.ne.s32.totalorder %s46, %s48
      %p52 = scmp.eq.s32.totalorder %s38, 0
      %p53 = por %p51, %p52
      %p54 = scmp.ne.s32.totalorder %s46, %s48
      %p55 = scmp.eq.s32.totalorder %s43, 1
      %p56 = por %p54, %p55
      %p57 = scmp.ne.s32.totalorder %s48, %s49
      %p58 = scmp.eq.s32.totalorder %s43, 0
      %p59 = por %p57, %p58
      %p60 = scmp.ne.s32.totalorder %s48, %s49
      %p61 = scmp.eq.s32.totalorder %s44, 1
      %p62 = por %p60, %p61
      %p64 = scmp.ne.s32.totalorder %s49, %s63
      %p65 = scmp.eq.s32.totalorder %s44, 0
      %p66 = por %p64, %p65
      %s68 = sadd.s32 %s67, 1
      %p71 = scmp.eq.s32.totalorder %s38, 1
      %p72 = scmp.ne.s32.totalorder %s67, %s69
      %p73 = scmp.eq.s32.totalorder %s38, 0
      %p74 = por %p72, %p73
      %p75 = scmp.ne.s32.totalorder %s67, %s69
      %p76 = scmp.eq.s32.totalorder %s43, 1
      %p77 = por %p75, %p76
      %p78 = scmp.ne.s32.totalorder %s69, %s70
      %p79 = scmp.eq.s32.totalorder %s43, 0
      %p80 = por %p78, %p79
      %p81 = scmp.ne.s32.totalorder %s69, %s70
      %p82 = scmp.eq.s32.totalorder %s44, 1
      %p83 = por %p81, %p82
      %p85 = scmp.ne.s32.totalorder %s70, %s84
      %p86 = scmp.eq.s32.totalorder %s44, 0
      %p87 = por %p85, %p86
      %s89 = sadd.s32 %s88, 1
      %p92 = scmp.eq.s32.totalorder %s38, 1
      %p93 = scmp.ne.s32.totalorder %s88, %s90
      %p94 = scmp.eq.s32.totalorder %s38, 0
      %p95 = por %p93, %p94
      %p96 = scmp.ne.s32.totalorder %s88, %s90
      %p97 = scmp.eq.s32.totalorder %s43, 1
      %p98 = por %p96, %p97
      %p99 = scmp.ne.s32.totalorder %s90, %s91
      %p100 = scmp.eq.s32.totalorder %s43, 0
      %p101 = por %p99, %p100
      %p102 = scmp.ne.s32.totalorder %s90, %s91
      %p103 = scmp.eq.s32.totalorder %s44, 1
      %p104 = por %p102, %p103
      %p106 = scmp.ne.s32.totalorder %s91, %s105
      %p107 = scmp.eq.s32.totalorder %s44, 0
      %p108 = por %p106, %p107
      %s110 = sadd.s32 %s109, 1
      %p113 = scmp.eq.s32.totalorder %s38, 1
      %p114 = scmp.ne.s32.totalorder %s109, %s111
      %p115 = scmp.eq.s32.totalorder %s38, 0
      %p116 = por %p114, %p115
      %p117 = scmp.ne.s32.totalorder %s109, %s111
      %p118 = scmp.eq.s32.totalorder %s43, 1
      %p119 = por %p117, %p118
      %p120 = scmp.ne.s32.totalorder %s111, %s112
      %p121 = scmp.eq.s32.totalorder %s43, 0
      %p122 = por %p120, %p121
      %p123 = scmp.ne.s32.totalorder %s111, %s112
      %p124 = scmp.eq.s32.totalorder %s44, 1
      %p125 = por %p123, %p124
      %p127 = scmp.ne.s32.totalorder %s112, %s126
      %p128 = scmp.eq.s32.totalorder %s44, 0
      %p129 = por %p127, %p128
      %s131 = sadd.s32 %s130, 1
      %p134 = scmp.eq.s32.totalorder %s38, 1
      %p135 = scmp.ne.s32.totalorder %s130, %s132
      %p136 = scmp.eq.s32.totalorder %s38, 0
      %p137 = por %p135, %p136
      %p138 = scmp.ne.s32.totalorder %s130, %s132
      %p139 = scmp.eq.s32.totalorder %s43, 1
      %p140 = por %p138, %p139
      %p141 = scmp.ne.s32.totalorder %s132, %s133
      %p142 = scmp.eq.s32.totalorder %s43, 0
      %p143 = por %p141, %p142
      %p144 = scmp.ne.s32.totalorder %s132, %s133
      %p145 = scmp.eq.s32.totalorder %s44, 1
      %p146 = por %p144, %p145
      %p148 = scmp.ne.s32.totalorder %s133, %s147
      %p149 = scmp.eq.s32.totalorder %s44, 0
      %p150 = por %p148, %p149
      %s152 = sadd.s32 %s151, 1
      %p155 = scmp.eq.s32.totalorder %s38, 1
      %p156 = scmp.ne.s32.totalorder %s151, %s153
      %p157 = scmp.eq.s32.totalorder %s38, 0
      %p158 = por %p156, %p157
      %p159 = scmp.ne.s32.totalorder %s151, %s153
      %p160 = scmp.eq.s32.totalorder %s43, 1
      %p161 = por %p159, %p160
      %p162 = scmp.ne.s32.totalorder %s153, %s154
      %p163 = scmp.eq.s32.totalorder %s43, 0
      %p164 = por %p162, %p163
      %p165 = scmp.ne.s32.totalorder %s153, %s154
      %p166 = scmp.eq.s32.totalorder %s44, 1
      %p167 = por %p165, %p166
      %p169 = scmp.ne.s32.totalorder %s154, %s168
      %p170 = scmp.eq.s32.totalorder %s44, 0
      %p171 = por %p169, %p170
      %s173 = sadd.s32 %s172, 1
      %p176 = scmp.eq.s32.totalorder %s38, 1
      %p177 = scmp.ne.s32.totalorder %s172, %s174
      %p178 = scmp.eq.s32.totalorder %s38, 0
      %p179 = por %p177, %p178
      %p180 = scmp.ne.s32.totalorder %s172, %s174
      %p181 = scmp.eq.s32.totalorder %s43, 1
      %p182 = por %p180, %p181
      %p183 = scmp.ne.s32.totalorder %s174, %s175
      %p184 = scmp.eq.s32.totalorder %s43, 0
      %p185 = por %p183, %p184
      %p186 = scmp.ne.s32.totalorder %s174, %s175
      %p187 = scmp.eq.s32.totalorder %s44, 1
      %p188 = por %p186, %p187
      %p190 = scmp.ne.s32.totalorder %s175, %s189
      %p191 = scmp.eq.s32.totalorder %s44, 0
      %p192 = por %p190, %p191
      %s194 = sadd.s32 %s193, 1
      %p197 = scmp.eq.s32.totalorder %s38, 1
      %p198 = scmp.ne.s32.totalorder %s193, %s195
      %p199 = scmp.eq.s32.totalorder %s38, 0
      %p200 = por %p198, %p199
      %p201 = scmp.ne.s32.totalorder %s193, %s195
      %p202 = scmp.eq.s32.totalorder %s43, 1
      %p203 = por %p201, %p202
      %p204 = scmp.ne.s32.totalorder %s195, %s196
      %p205 = scmp.eq.s32.totalorder %s43, 0
      %p206 = por %p204, %p205
      %p207 = scmp.ne.s32.totalorder %s195, %s196
      %p208 = scmp.eq.s32.totalorder %s44, 1
      %p209 = por %p207, %p208
      %p211 = scmp.ne.s32.totalorder %s196, %s210
      %p212 = scmp.eq.s32.totalorder %s44, 0
      %p213 = por %p211, %p212
      %s215 = sadd.s32 %s214, 1
      %p218 = scmp.eq.s32.totalorder %s38, 1
      %p219 = scmp.ne.s32.totalorder %s214, %s216
      %p220 = scmp.eq.s32.totalorder %s38, 0
      %p221 = por %p219, %p220
      %p222 = scmp.ne.s32.totalorder %s214, %s216
      %p223 = scmp.eq.s32.totalorder %s43, 1
      %p224 = por %p222, %p223
      %p225 = scmp.ne.s32.totalorder %s216, %s217
      %p226 = scmp.eq.s32.totalorder %s43, 0
      %p227 = por %p225, %p226
      %p228 = scmp.ne.s32.totalorder %s216, %s217
      %p229 = scmp.eq.s32.totalorder %s44, 1
      %p230 = por %p228, %p229
      %p232 = scmp.ne.s32.totalorder %s217, %s231
      %p233 = scmp.eq.s32.totalorder %s44, 0
      %p234 = por %p232, %p233
      %s236 = sadd.s32 %s235, 1
      %p239 = scmp.eq.s32.totalorder %s38, 1
      %p240 = scmp.ne.s32.totalorder %s235, %s237
      %p241 = scmp.eq.s32.totalorder %s38, 0
      %p242 = por %p240, %p241
      %p243 = scmp.ne.s32.totalorder %s235, %s237
      %p244 = scmp.eq.s32.totalorder %s43, 1
      %p245 = por %p243, %p244
      %p246 = scmp.ne.s32.totalorder %s237, %s238
      %p247 = scmp.eq.s32.totalorder %s43, 0
      %p248 = por %p246, %p247
      %p249 = scmp.ne.s32.totalorder %s237, %s238
      %p250 = scmp.eq.s32.totalorder %s44, 1
      %p251 = por %p249, %p250
      %p253 = scmp.ne.s32.totalorder %s238, %s252
      %p254 = scmp.eq.s32.totalorder %s44, 0
      %p255 = por %p253, %p254
      %s257 = sadd.s32 %s256, 1
      %p260 = scmp.eq.s32.totalorder %s38, 1
      %p261 = scmp.ne.s32.totalorder %s256, %s258
      %p262 = scmp.eq.s32.totalorder %s38, 0
      %p263 = por %p261, %p262
      %p264 = scmp.ne.s32.totalorder %s256, %s258
      %p265 = scmp.eq.s32.totalorder %s43, 1
      %p266 = por %p264, %p265
      %p267 = scmp.ne.s32.totalorder %s258, %s259
      %p268 = scmp.eq.s32.totalorder %s43, 0
      %p269 = por %p267, %p268
      %p270 = scmp.ne.s32.totalorder %s258, %s259
      %p271 = scmp.eq.s32.totalorder %s44, 1
      %p272 = por %p270, %p271
      %p274 = scmp.ne.s32.totalorder %s259, %s273
      %p275 = scmp.eq.s32.totalorder %s44, 0
      %p276 = por %p274, %p275
      %s278 = sadd.s32 %s277, 1
      %p281 = scmp.eq.s32.totalorder %s38, 1
      %p282 = scmp.ne.s32.totalorder %s277, %s279
      %p283 = scmp.eq.s32.totalorder %s38, 0
      %p284 = por %p282, %p283
      %p285 = scmp.ne.s32.totalorder %s277, %s279
      %p286 = scmp.eq.s32.totalorder %s43, 1
      %p287 = por %p285, %p286
      %p288 = scmp.ne.s32.totalorder %s279, %s280
      %p289 = scmp.eq.s32.totalorder %s43, 0
      %p290 = por %p288, %p289
      %p291 = scmp.ne.s32.totalorder %s279, %s280
      %p292 = scmp.eq.s32.totalorder %s44, 1
      %p293 = por %p291, %p292
      %p295 = scmp.ne.s32.totalorder %s280, %s294
      %p296 = scmp.eq.s32.totalorder %s44, 0
      %p297 = por %p295, %p296
      %s299 = sadd.s32 %s298, 1
      %p302 = scmp.eq.s32.totalorder %s38, 1
      %p303 = scmp.ne.s32.totalorder %s298, %s300
      %p304 = scmp.eq.s32.totalorder %s38, 0
      %p305 = por %p303, %p304
      %p306 = scmp.ne.s32.totalorder %s298, %s300
      %p307 = scmp.eq.s32.totalorder %s43, 1
      %p308 = por %p306, %p307
      %p309 = scmp.ne.s32.totalorder %s300, %s301
      %p310 = scmp.eq.s32.totalorder %s43, 0
      %p311 = por %p309, %p310
      %p312 = scmp.ne.s32.totalorder %s300, %s301
      %p313 = scmp.eq.s32.totalorder %s44, 1
      %p314 = por %p312, %p313
      %p316 = scmp.ne.s32.totalorder %s301, %s315
      %p317 = scmp.eq.s32.totalorder %s44, 0
      %p318 = por %p316, %p317
      %s320 = sadd.s32 %s319, 1
      %p323 = scmp.eq.s32.totalorder %s38, 1
      %p324 = scmp.ne.s32.totalorder %s319, %s321
      %p325 = scmp.eq.s32.totalorder %s38, 0
      %p326 = por %p324, %p325
      %p327 = scmp.ne.s32.totalorder %s319, %s321
      %p328 = scmp.eq.s32.totalorder %s43, 1
      %p329 = por %p327, %p328
      %p330 = scmp.ne.s32.totalorder %s321, %s322
      %p331 = scmp.eq.s32.totalorder %s43, 0
      %p332 = por %p330, %p331
      %p333 = scmp.ne.s32.totalorder %s321, %s322
      %p334 = scmp.eq.s32.totalorder %s44, 1
      %p335 = por %p333, %p334
      %p337 = scmp.ne.s32.totalorder %s322, %s336
      %p338 = scmp.eq.s32.totalorder %s44, 0
      %p339 = por %p337, %p338
      %s341 = sadd.s32 %s340, 1
      %p344 = scmp.eq.s32.totalorder %s38, 1
      %p345 = scmp.ne.s32.totalorder %s340, %s342
      %p346 = scmp.eq.s32.totalorder %s38, 0
      %p347 = por %p345, %p346
      %p348 = scmp.ne.s32.totalorder %s340, %s342
      %p349 = scmp.eq.s32.totalorder %s43, 1
      %p350 = por %p348, %p349
      %p351 = scmp.ne.s32.totalorder %s342, %s343
      %p352 = scmp.eq.s32.totalorder %s43, 0
      %p353 = por %p351, %p352
      %p354 = scmp.ne.s32.totalorder %s342, %s343
      %p355 = scmp.eq.s32.totalorder %s44, 1
      %p356 = por %p354, %p355
      %p358 = scmp.ne.s32.totalorder %s343, %s357
      %p359 = scmp.eq.s32.totalorder %s44, 0
      %p360 = por %p358, %p359
      %s362 = sadd.s32 %s361, 1
      %p365 = scmp.eq.s32.totalorder %s38, 1
      %p366 = scmp.ne.s32.totalorder %s361, %s363
      %p367 = scmp.eq.s32.totalorder %s38, 0
      %p368 = por %p366, %p367
      %p369 = scmp.ne.s32.totalorder %s361, %s363
      %p370 = scmp.eq.s32.totalorder %s43, 1
      %p371 = por %p369, %p370
      %p372 = scmp.ne.s32.totalorder %s363, %s364
      %p373 = scmp.eq.s32.totalorder %s43, 0
      %p374 = por %p372, %p373
      %p375 = scmp.ne.s32.totalorder %s363, %s364
      %p376 = scmp.eq.s32.totalorder %s44, 1
      %p377 = por %p375, %p376
      %p379 = scmp.ne.s32.totalorder %s364, %s378
      %p380 = scmp.eq.s32.totalorder %s44, 0
      %p381 = por %p379, %p380
      %s383 = sadd.s32 %s382, 1
      %p386 = scmp.eq.s32.totalorder %s38, 1
      %p387 = scmp.ne.s32.totalorder %s382, %s384
      %p388 = scmp.eq.s32.totalorder %s38, 0
      %p389 = por %p387, %p388
      %p390 = scmp.ne.s32.totalorder %s382, %s384
      %p391 = scmp.eq.s32.totalorder %s43, 1
      %p392 = por %p390, %p391
      %p393 = scmp.ne.s32.totalorder %s384, %s385
      %p394 = scmp.eq.s32.totalorder %s43, 0
      %p395 = por %p393, %p394
      %p396 = scmp.ne.s32.totalorder %s384, %s385
      %p397 = scmp.eq.s32.totalorder %s44, 1
      %p398 = por %p396, %p397
      %p400 = scmp.ne.s32.totalorder %s385, %s399
      %p401 = scmp.eq.s32.totalorder %s44, 0
      %p402 = por %p400, %p401
      %s404 = sadd.s32 %s403, 1
      %p407 = scmp.eq.s32.totalorder %s38, 1
      %p408 = scmp.ne.s32.totalorder %s403, %s405
      %p409 = scmp.eq.s32.totalorder %s38, 0
      %p410 = por %p408, %p409
      %p411 = scmp.ne.s32.totalorder %s403, %s405
      %p412 = scmp.eq.s32.totalorder %s43, 1
      %p413 = por %p411, %p412
      %p414 = scmp.ne.s32.totalorder %s405, %s406
      %p415 = scmp.eq.s32.totalorder %s43, 0
      %p416 = por %p414, %p415
      %p417 = scmp.ne.s32.totalorder %s405, %s406
      %p418 = scmp.eq.s32.totalorder %s44, 1
      %p419 = por %p417, %p418
      %p421 = scmp.ne.s32.totalorder %s406, %s420
      %p422 = scmp.eq.s32.totalorder %s44, 0
      %p423 = por %p421, %p422
      %s424 = ssub.s32 %s38, %s45
      %p425 = scmp.eq.s32.totalorder %s424, 0
      %s427 = sadd.s32 %s426, 1
      %s428 = scalar_select %p425, %s426, %s427
      %p431 = pneg %p425
      %p432 = scmp.eq.s32.totalorder %s38, 1
      %p433 = por %p431, %p432
      %p434 = scmp.ne.s32.totalorder %s426, %s429
      %p435 = scmp.eq.s32.totalorder %s38, 0
      %p436 = por %p434, %p435
      %p437 = scmp.ne.s32.totalorder %s426, %s429
      %p438 = scmp.eq.s32.totalorder %s43, 1
      %p439 = por %p437, %p438
      %p440 = scmp.ne.s32.totalorder %s429, %s430
      %p441 = scmp.eq.s32.totalorder %s43, 0
      %p442 = por %p440, %p441
      %p443 = scmp.ne.s32.totalorder %s429, %s430
      %p444 = scmp.eq.s32.totalorder %s44, 1
      %p445 = por %p443, %p444
      %p447 = scmp.ne.s32.totalorder %s430, %s446
      %p448 = scmp.eq.s32.totalorder %s44, 0
      %p449 = por %p447, %p448
      %p450 = scmp.le.s32.totalorder 1, %s38
      %p451 = scmp.lt.s32.totalorder %s38, 3
      %p452 = pnand %p450, %p451
      %p453 = pneg %p452
      // Predicated region
      $region9: #{text_classification_forward.1} parent=5 // pred_check
        _
      $region10: #{text_classification_forward.1} parent=5 // pred_check_branch
        %455 = sbr.rel (%p452) target = $region12
      $region11: #{text_classification_forward.1} parent=5 // pred_region
        %s456 = ssub.s32 %s38, 1
        // Predicated region
        $region13: #{text_classification_forward.1} parent=11 // pred_check
          %p457 = pneg %p59
        $region14: #{text_classification_forward.1} parent=11 // pred_check_branch
          %459 = sbr.rel (%p457) target = $region16
        $region15: #{text_classification_forward.1} parent=11 // pred_region
          %s461 = ssub.s32 128, 128
          %462 = vsyncadd [#allocation7], %s461
          %s464 = sshll.u32 [#allocation6], 4
          %s465 = int_to_ptr.vmem [resolvable:$true] %s464
          %467 = dma.hbm_to_vmem [thread:$0]  %s1, 128, %s465, [#allocation7]
        $region16: #{text_classification_forward.1} parent=11 // pred_fallthru
          _
        // Predicated region
        $region17: #{text_classification_forward.1} parent=11 // pred_check
          %p468 = pneg %p80
        $region18: #{text_classification_forward.1} parent=11 // pred_check_branch
          %470 = sbr.rel (%p468) target = $region20
        $region19: #{text_classification_forward.1} parent=11 // pred_region
          _
        $region20: #{text_classification_forward.1} parent=11 // pred_fallthru
          _
        // Predicated region
        $region21: #{text_classification_forward.1} parent=11 // pred_check
          %p471 = pneg %p101
        $region22: #{text_classification_forward.1} parent=11 // pred_check_branch
          %473 = sbr.rel (%p471) target = $region24
        $region23: #{text_classification_forward.1} parent=11 // pred_region
          _
        $region24: #{text_classification_forward.1} parent=11 // pred_fallthru
          _
        // Predicated region
        $region25: #{text_classification_forward.1} parent=11 // pred_check
          %p474 = pneg %p122
        $region26: #{text_classification_forward.1} parent=11 // pred_check_branch
          %476 = sbr.rel (%p474) target = $region28
        $region27: #{text_classification_forward.1} parent=11 // pred_region
          _
        $region28: #{text_classification_forward.1} parent=11 // pred_fallthru
          _
        // Predicated region
        $region29: #{text_classification_forward.1} parent=11 // pred_check
          %p477 = pneg %p143
        $region30: #{text_classification_forward.1} parent=11 // pred_check_branch
          %479 = sbr.rel (%p477) target = $region32
        $region31: #{text_classification_forward.1} parent=11 // pred_region
          _
        $region32: #{text_classification_forward.1} parent=11 // pred_fallthru
          _
        // Predicated region
        $region33: #{text_classification_forward.1} parent=11 // pred_check
          %p480 = pneg %p164
        $region34: #{text_classification_forward.1} parent=11 // pred_check_branch
          %482 = sbr.rel (%p480) target = $region36
        $region35: #{text_classification_forward.1} parent=11 // pred_region
          _
        $region36: #{text_classification_forward.1} parent=11 // pred_fallthru
          _
        // Predicated region
        $region37: #{text_classification_forward.1} parent=11 // pred_check
          %p483 = pneg %p185
        $region38: #{text_classification_forward.1} parent=11 // pred_check_branch
          %485 = sbr.rel (%p483) target = $region40
        $region39: #{text_classification_forward.1} parent=11 // pred_region
          %s487 = ssub.s32 2048, 2048
          %488 = vsyncadd [#allocation10], %s487
          %s489 = sshll.u32 [#allocation9], 4
          %s490 = int_to_ptr.vmem [resolvable:$true] %s489
          %495 = dma.hbm_to_vmem [thread:$0]  %s8, 2048, %s490, [#allocation10], 64, 64, 4
        $region40: #{text_classification_forward.1} parent=11 // pred_fallthru
          _
        // Predicated region
        $region41: #{text_classification_forward.1} parent=11 // pred_check
          %p496 = pneg %p206
        $region42: #{text_classification_forward.1} parent=11 // pred_check_branch
          %498 = sbr.rel (%p496) target = $region44
        $region43: #{text_classification_forward.1} parent=11 // pred_region
          _
        $region44: #{text_classification_forward.1} parent=11 // pred_fallthru
          _
        // Predicated region
        $region45: #{text_classification_forward.1} parent=11 // pred_check
          %p499 = pneg %p227
        $region46: #{text_classification_forward.1} parent=11 // pred_check_branch
          %501 = sbr.rel (%p499) target = $region48
        $region47: #{text_classification_forward.1} parent=11 // pred_region
          _
        $region48: #{text_classification_forward.1} parent=11 // pred_fallthru
          _
        // Predicated region
        $region49: #{text_classification_forward.1} parent=11 // pred_check
          %p502 = pneg %p248
        $region50: #{text_classification_forward.1} parent=11 // pred_check_branch
          %504 = sbr.rel (%p502) target = $region52
        $region51: #{text_classification_forward.1} parent=11 // pred_region
          _
        $region52: #{text_classification_forward.1} parent=11 // pred_fallthru
          _
        // Predicated region
        $region53: #{text_classification_forward.1} parent=11 // pred_check
          %p505 = pneg %p269
        $region54: #{text_classification_forward.1} parent=11 // pred_check_branch
          %507 = sbr.rel (%p505) target = $region56
        $region55: #{text_classification_forward.1} parent=11 // pred_region
          %s509 = ssub.s32 4096, 4096
          %510 = vsyncadd [#allocation10], %s509
          %s511 = sshll.u32 [#allocation11], 4
          %s512 = int_to_ptr.vmem [resolvable:$true] %s511
          %517 = dma.hbm_to_vmem [thread:$0]  %s12, 4096, %s512, [#allocation10], 128, 128, 8
        $region56: #{text_classification_forward.1} parent=11 // pred_fallthru
          _
        // Predicated region
        $region57: #{text_classification_forward.1} parent=11 // pred_check
          %p518 = pneg %p290
        $region58: #{text_classification_forward.1} parent=11 // pred_check_branch
          %520 = sbr.rel (%p518) target = $region60
        $region59: #{text_classification_forward.1} parent=11 // pred_region
          _
        $region60: #{text_classification_forward.1} parent=11 // pred_fallthru
          _
        // Predicated region
        $region61: #{text_classification_forward.1} parent=11 // pred_check
          %p521 = pneg %p311
        $region62: #{text_classification_forward.1} parent=11 // pred_check_branch
          %523 = sbr.rel (%p521) target = $region64
        $region63: #{text_classification_forward.1} parent=11 // pred_region
          %s525 = ssub.s32 4096, 4096
          %526 = vsyncadd [#allocation13], %s525
          %s527 = sshll.u32 [#allocation12], 4
          %s528 = int_to_ptr.vmem [resolvable:$true] %s527
          %533 = dma.hbm_to_vmem [thread:$0]  %s14, 4096, %s528, [#allocation13], 64, 64, 4
        $region64: #{text_classification_forward.1} parent=11 // pred_fallthru
          _
        // Predicated region
        $region65: #{text_classification_forward.1} parent=11 // pred_check
          %p534 = pneg %p332
        $region66: #{text_classification_forward.1} parent=11 // pred_check_branch
          %536 = sbr.rel (%p534) target = $region68
        $region67: #{text_classification_forward.1} parent=11 // pred_region
          _
        $region68: #{text_classification_forward.1} parent=11 // pred_fallthru
          _
        // Predicated region
        $region69: #{text_classification_forward.1} parent=11 // pred_check
          %p537 = pneg %p353
        $region70: #{text_classification_forward.1} parent=11 // pred_check_branch
          %539 = sbr.rel (%p537) target = $region72
        $region71: #{text_classification_forward.1} parent=11 // pred_region
          %s541 = ssub.s32 32, 32
          %542 = vsyncadd [#allocation13], %s541
          %s543 = sshll.u32 [#allocation14], 4
          %s544 = int_to_ptr.vmem [resolvable:$true] %s543
          %549 = dma.hbm_to_vmem [thread:$0]  %s16, 32, %s544, [#allocation13], 16, 16, 1
        $region72: #{text_classification_forward.1} parent=11 // pred_fallthru
          _
        // Predicated region
        $region73: #{text_classification_forward.1} parent=11 // pred_check
          %p550 = pneg %p374
        $region74: #{text_classification_forward.1} parent=11 // pred_check_branch
          %552 = sbr.rel (%p550) target = $region76
        $region75: #{text_classification_forward.1} parent=11 // pred_region
          _
        $region76: #{text_classification_forward.1} parent=11 // pred_fallthru
          _
        // Predicated region
        $region77: #{text_classification_forward.1} parent=11 // pred_check
          %p553 = pneg %p395
        $region78: #{text_classification_forward.1} parent=11 // pred_check_branch
          %555 = sbr.rel (%p553) target = $region80
        $region79: #{text_classification_forward.1} parent=11 // pred_region
          _
        $region80: #{text_classification_forward.1} parent=11 // pred_fallthru
          _
        // Predicated region
        $region81: #{text_classification_forward.1} parent=11 // pred_check
          %p556 = pneg %p416
        $region82: #{text_classification_forward.1} parent=11 // pred_check_branch
          %558 = sbr.rel (%p556) target = $region84
        $region83: #{text_classification_forward.1} parent=11 // pred_region
          _
        $region84: #{text_classification_forward.1} parent=11 // pred_fallthru
          _
      $region12: #{text_classification_forward.1} parent=5 // pred_fallthru
        _
      %p559 = scmp.lt.s32.totalorder %s38, 2
      // Predicated region
      $region85: #{text_classification_forward.1} parent=5 // pred_check
        %p560 = pneg %p559
      $region86: #{text_classification_forward.1} parent=5 // pred_check_branch
        %562 = sbr.rel (%p560) target = $region88
      $region87: #{text_classification_forward.1} parent=5 // pred_region
        _
      $region88: #{text_classification_forward.1} parent=5 // pred_fallthru
        _
      %p563 = scmp.le.s32.totalorder 1, %s38
      %p564 = scmp.lt.s32.totalorder %s38, 3
      %p565 = pnand %p563, %p564
      %p566 = pneg %p565
      // Predicated region
      $region89: #{text_classification_forward.1} parent=5 // pred_check
        _
      $region90: #{text_classification_forward.1} parent=5 // pred_check_branch
        %568 = sbr.rel (%p565) target = $region92
      $region91: #{text_classification_forward.1} parent=5 // pred_region
        %s569 = ssub.s32 %s38, 1
        // Predicated region
        $region93: #{text_classification_forward.1} parent=91 // pred_check
          %p570 = pneg %p59
        $region94: #{text_classification_forward.1} parent=91 // pred_check_branch
          %572 = sbr.rel (%p570) target = $region96
        $region95: #{text_classification_forward.1} parent=91 // pred_region
          %573 = dma.done [#allocation7], 128
        $region96: #{text_classification_forward.1} parent=91 // pred_fallthru
          _
        // Predicated region
        $region97: #{text_classification_forward.1} parent=91 // pred_check
          %p574 = pneg %p185
        $region98: #{text_classification_forward.1} parent=91 // pred_check_branch
          %576 = sbr.rel (%p574) target = $region100
        $region99: #{text_classification_forward.1} parent=91 // pred_region
          %577 = dma.done [#allocation10], 2048
        $region100: #{text_classification_forward.1} parent=91 // pred_fallthru
          _
        // Predicated region
        $region101: #{text_classification_forward.1} parent=91 // pred_check
          %p578 = pneg %p269
        $region102: #{text_classification_forward.1} parent=91 // pred_check_branch
          %580 = sbr.rel (%p578) target = $region104
        $region103: #{text_classification_forward.1} parent=91 // pred_region
          %581 = dma.done [#allocation10], 4096
        $region104: #{text_classification_forward.1} parent=91 // pred_fallthru
          _
        // Predicated region
        $region105: #{text_classification_forward.1} parent=91 // pred_check
          %p582 = pneg %p311
        $region106: #{text_classification_forward.1} parent=91 // pred_check_branch
          %584 = sbr.rel (%p582) target = $region108
        $region107: #{text_classification_forward.1} parent=91 // pred_region
          %585 = dma.done [#allocation13], 4096
        $region108: #{text_classification_forward.1} parent=91 // pred_fallthru
          _
        // Predicated region
        $region109: #{text_classification_forward.1} parent=91 // pred_check
          %p586 = pneg %p353
        $region110: #{text_classification_forward.1} parent=91 // pred_check_branch
          %588 = sbr.rel (%p586) target = $region112
        $region111: #{text_classification_forward.1} parent=91 // pred_region
          %589 = dma.done [#allocation13], 32
        $region112: #{text_classification_forward.1} parent=91 // pred_fallthru
          _
        %p590 = pneg %p59
        %p591 = pneg %p56
        %p592 = pneg %p80
        %p593 = pneg %p77
        %p594 = pneg %p101
        %p595 = pneg %p98
        %p596 = pneg %p122
        %p597 = pneg %p119
        %p598 = pneg %p143
        %p599 = pneg %p140
        %p600 = pneg %p164
        %p601 = pneg %p161
        %p602 = pneg %p185
        %p603 = pneg %p182
        %p604 = pneg %p206
        %p605 = pneg %p203
        %p606 = pneg %p227
        %p607 = pneg %p224
        %p608 = pneg %p248
        %p609 = pneg %p245
        %p610 = pneg %p269
        %p611 = pneg %p266
        %p612 = pneg %p290
        %p613 = pneg %p287
        %p614 = pneg %p311
        %p615 = pneg %p308
        %p616 = pneg %p332
        %p617 = pneg %p329
        %p618 = pneg %p353
        %p619 = pneg %p350
        %p620 = pneg %p374
        %p621 = pneg %p371
        %p622 = pneg %p395
        %p623 = pneg %p392
        %p624 = pneg %p416
        %p625 = pneg %p413
        %p626 = pneg %p442
        %p627 = pneg %p439
        %s628 = sand.u32 %s429, 1
        %s629 = scalar_lea.sflag [#allocation8], %s628
        %s630 = sand.u32 %s429, 1
        %s631 = scalar_lea.vmem [#allocation15], %s630
        %s633 = smul.u32 %s43, 8
        %s634 = sld [smem:[#allocation5 + %s633]]
        %s635 = smul.addr %s634, 16
        %s636 = scalar_lea.hbm %s3, %s635
        // Predicated region
        $region113: #{text_classification_forward.1} parent=91 // pred_check
          _
        $region114: #{text_classification_forward.1} parent=91 // pred_check_branch
          %638 = sbr.rel target = $region116
        $region115: #{text_classification_forward.1} parent=91 // pred_region
          %639 = sst [smem:[#allocation18]] [#allocation17]
          %640 = sst [smem:[#allocation19]] [#allocation16]
        $region116: #{text_classification_forward.1} parent=91 // pred_fallthru
          _
        %642 = shalt.err (0)
        %s644 = sshll.u32 [#allocation2], 4
        %s645 = int_to_ptr.vmem [resolvable:$true] %s644
        %647 = dma.hbm_to_vmem [thread:$0]  %s636, 16, %s645, [#allocation3]
        %s648 = sadd.s32 %s633, 1
        %s649 = sld [smem:[#allocation5 + %s648]]
        %s650 = smul.addr %s649, 16
        %s651 = scalar_lea.hbm %s3, %s650
        %s652 = scalar_lea.vmem [#allocation2], 1
        %s653 = scalar_lea.sflag [#allocation3], 1
        // Predicated region
        $region117: #{text_classification_forward.1} parent=91 // pred_check
          _
        $region118: #{text_classification_forward.1} parent=91 // pred_check_branch
          %655 = sbr.rel target = $region120
        $region119: #{text_classification_forward.1} parent=91 // pred_region
          %656 = sst [smem:[#allocation18]] [#allocation21]
          %657 = sst [smem:[#allocation19]] [#allocation20]
        $region120: #{text_classification_forward.1} parent=91 // pred_fallthru
          _
        %659 = shalt.err (0)
        %s661 = sshll.u32 %s652, 4
        %s662 = int_to_ptr.vmem [resolvable:$true] %s661
        %664 = dma.hbm_to_vmem [thread:$0]  %s651, 16, %s662, %s653
        %s665 = sadd.s32 %s633, 2
        %s666 = sld [smem:[#allocation5 + %s665]]
        %s667 = smul.addr %s666, 16
        %s668 = scalar_lea.hbm %s3, %s667
        %s669 = scalar_lea.vmem [#allocation2], 2
        %s670 = scalar_lea.sflag [#allocation3], 2
        // Predicated region
        $region121: #{text_classification_forward.1} parent=91 // pred_check
          _
        $region122: #{text_classification_forward.1} parent=91 // pred_check_branch
          %672 = sbr.rel target = $region124
        $region123: #{text_classification_forward.1} parent=91 // pred_region
          %673 = sst [smem:[#allocation18]] [#allocation23]
          %674 = sst [smem:[#allocation19]] [#allocation22]
        $region124: #{text_classification_forward.1} parent=91 // pred_fallthru
          _
        %676 = shalt.err (0)
        %s678 = sshll.u32 %s669, 4
        %s679 = int_to_ptr.vmem [resolvable:$true] %s678
        %681 = dma.hbm_to_vmem [thread:$0]  %s668, 16, %s679, %s670
        %s682 = sadd.s32 %s633, 3
        %s683 = sld [smem:[#allocation5 + %s682]]
        %s684 = smul.addr %s683, 16
        %s685 = scalar_lea.hbm %s3, %s684
        %s686 = scalar_lea.vmem [#allocation2], 3
        %s687 = scalar_lea.sflag [#allocation3], 3
        // Predicated region
        $region125: #{text_classification_forward.1} parent=91 // pred_check
          _
        $region126: #{text_classification_forward.1} parent=91 // pred_check_branch
          %689 = sbr.rel target = $region128
        $region127: #{text_classification_forward.1} parent=91 // pred_region
          %690 = sst [smem:[#allocation18]] [#allocation25]
          %691 = sst [smem:[#allocation19]] [#allocation24]
        $region128: #{text_classification_forward.1} parent=91 // pred_fallthru
          _
        %693 = shalt.err (0)
        %s695 = sshll.u32 %s686, 4
        %s696 = int_to_ptr.vmem [resolvable:$true] %s695
        %698 = dma.hbm_to_vmem [thread:$0]  %s685, 16, %s696, %s687
        %s699 = sadd.s32 %s633, 4
        %s700 = sld [smem:[#allocation5 + %s699]]
        %s701 = smul.addr %s700, 16
        %s702 = scalar_lea.hbm %s3, %s701
        %s703 = scalar_lea.vmem [#allocation2], 4
        %s704 = scalar_lea.sflag [#allocation3], 4
        // Predicated region
        $region129: #{text_classification_forward.1} parent=91 // pred_check
          _
        $region130: #{text_classification_forward.1} parent=91 // pred_check_branch
          %706 = sbr.rel target = $region132
        $region131: #{text_classification_forward.1} parent=91 // pred_region
          %707 = sst [smem:[#allocation18]] [#allocation27]
          %708 = sst [smem:[#allocation19]] [#allocation26]
        $region132: #{text_classification_forward.1} parent=91 // pred_fallthru
          _
        %710 = shalt.err (0)
        %s712 = sshll.u32 %s703, 4
        %s713 = int_to_ptr.vmem [resolvable:$true] %s712
        %715 = dma.hbm_to_vmem [thread:$0]  %s702, 16, %s713, %s704
        %s716 = sadd.s32 %s633, 5
        %s717 = sld [smem:[#allocation5 + %s716]]
        %s718 = smul.addr %s717, 16
        %s719 = scalar_lea.hbm %s3, %s718
        %s720 = scalar_lea.vmem [#allocation2], 5
        %s721 = scalar_lea.sflag [#allocation3], 5
        // Predicated region
        $region133: #{text_classification_forward.1} parent=91 // pred_check
          _
        $region134: #{text_classification_forward.1} parent=91 // pred_check_branch
          %723 = sbr.rel target = $region136
        $region135: #{text_classification_forward.1} parent=91 // pred_region
          %724 = sst [smem:[#allocation18]] [#allocation29]
          %725 = sst [smem:[#allocation19]] [#allocation28]
        $region136: #{text_classification_forward.1} parent=91 // pred_fallthru
          _
        %727 = shalt.err (0)
        %s729 = sshll.u32 %s720, 4
        %s730 = int_to_ptr.vmem [resolvable:$true] %s729
        %732 = dma.hbm_to_vmem [thread:$0]  %s719, 16, %s730, %s721
        %s733 = sadd.s32 %s633, 6
        %s734 = sld [smem:[#allocation5 + %s733]]
        %s735 = smul.addr %s734, 16
        %s736 = scalar_lea.hbm %s3, %s735
        %s737 = scalar_lea.vmem [#allocation2], 6
        %s738 = scalar_lea.sflag [#allocation3], 6
        // Predicated region
        $region137: #{text_classification_forward.1} parent=91 // pred_check
          _
        $region138: #{text_classification_forward.1} parent=91 // pred_check_branch
          %740 = sbr.rel target = $region140
        $region139: #{text_classification_forward.1} parent=91 // pred_region
          %741 = sst [smem:[#allocation18]] [#allocation31]
          %742 = sst [smem:[#allocation19]] [#allocation30]
        $region140: #{text_classification_forward.1} parent=91 // pred_fallthru
          _
        %744 = shalt.err (0)
        %s746 = sshll.u32 %s737, 4
        %s747 = int_to_ptr.vmem [resolvable:$true] %s746
        %749 = dma.hbm_to_vmem [thread:$0]  %s736, 16, %s747, %s738
        %s750 = sadd.s32 %s633, 7
        %s751 = sld [smem:[#allocation5 + %s750]]
        %s752 = smul.addr %s751, 16
        %s753 = scalar_lea.hbm %s3, %s752
        %s754 = scalar_lea.vmem [#allocation2], 7
        %s755 = scalar_lea.sflag [#allocation3], 7
        // Predicated region
        $region141: #{text_classification_forward.1} parent=91 // pred_check
          _
        $region142: #{text_classification_forward.1} parent=91 // pred_check_branch
          %757 = sbr.rel target = $region144
        $region143: #{text_classification_forward.1} parent=91 // pred_region
          %758 = sst [smem:[#allocation18]] [#allocation33]
          %759 = sst [smem:[#allocation19]] [#allocation32]
        $region144: #{text_classification_forward.1} parent=91 // pred_fallthru
          _
        %761 = shalt.err (0)
        %s763 = sshll.u32 %s754, 4
        %s764 = int_to_ptr.vmem [resolvable:$true] %s763
        %766 = dma.hbm_to_vmem [thread:$0]  %s753, 16, %s764, %s755
        %s767 = smul.u32 1, 1
        %s768 = sshll.u32 %s767, 4
        %769 = dma.done [#allocation3], %s768
        %s770 = sshll.u32 %s767, 4
        %771 = dma.done %s653, %s770
        %s772 = sshll.u32 %s767, 4
        %773 = dma.done %s670, %s772
        %s774 = sshll.u32 %s767, 4
        %775 = dma.done %s687, %s774
        %s776 = sshll.u32 %s767, 4
        %777 = dma.done %s704, %s776
        %s778 = sshll.u32 %s767, 4
        %779 = dma.done %s721, %s778
        %s780 = sshll.u32 %s767, 4
        %781 = dma.done %s738, %s780
        %s782 = sshll.u32 %s767, 4
        %783 = dma.done %s755, %s782
        %v784 = vld [vmem:[#allocation2] sm:$0xff]
        %v785 = vld [vmem:[#allocation6] sm:$0xff]
        %v786 = vadd.f32 %v784, %v785
        %v787 = vld [vmem:[%s4] sm:$0x1]
        %v788 = vld [vmem:[%s5] sm:$0x1]
        %789 = vadd.xlane.f32.xlu0 %v786
        %v790 = vpop.xlane.xlu0 %789
        %v791 = vrcp.pop 128.0
        %v792 = vmul.f32 %v790, %v791
        %v793 = vsub.f32 %v786, %v792
        %v794 = vmul.f32 %v793, %v793
        %795 = vadd.xlane.f32.xlu0 %v794
        %v796 = vpop.xlane.xlu0 %795
        %v797 = vmul.f32 %v796, %v791
        %v798 = vadd.f32 %v797, 1e-12
        %v799 = vrsqrt.pop %v798
        %v800 = vmul.f32 %v793, %v799
        %v802 = vlaneseq
        %v803 = vshrl.u32 %v802, 7
        %v804 = vsub.s32 0, %v803
        %v805 = vrot.slane %v787, %v804
        %v807 = vmul.f32 %v800, %v805
        %v809 = vlaneseq
        %v810 = vshrl.u32 %v809, 7
        %v811 = vsub.s32 0, %v810
        %v812 = vrot.slane %v788, %v811
        %v814 = vadd.f32 %v807, %v812
        %s815 = scalar_lea.vmem %s2, %s43
        %v816 = vld [vmem:[%s815] sm:$0x1]
        %v817 = vpack.c.bf16 %v814, %v814
        %v818 = vld [vmem:[%s6] sm:$0xff]
        %v819 = vld [vmem:[%s6 + $0x8] sm:$0xf]
        %v820 = vld [vmem:[%s6 + $0xc] sm:$0xff]
        %v821 = vld [vmem:[%s6 + $0x14] sm:$0xf]
        %v822 = vld [vmem:[%s6 + $0x18] sm:$0xff]
        %v823 = vld [vmem:[%s6 + $0x20] sm:$0xf]
        %v824 = vld [vmem:[%s6 + $0x24] sm:$0xff]
        %v825 = vld [vmem:[%s6 + $0x2c] sm:$0xf]
        %v826 = vld [vmem:[%s6 + $0x30] sm:$0xff]
        %v827 = vld [vmem:[%s6 + $0x38] sm:$0xf]
        %v828 = vld [vmem:[%s6 + $0x3c] sm:$0xff]
        %v829 = vld [vmem:[%s6 + $0x44] sm:$0xf]
        %v830 = vld [vmem:[%s6 + $0x48] sm:$0xff]
        %v831 = vld [vmem:[%s6 + $0x50] sm:$0xf]
        %v832 = vld [vmem:[%s6 + $0x54] sm:$0xff]
        %v833 = vld [vmem:[%s6 + $0x5c] sm:$0xf]
        %v834 = vld [vmem:[%s6 + $0x60] sm:$0xff]
        %v835 = vld [vmem:[%s6 + $0x68] sm:$0xf]
        %v836 = vld [vmem:[%s6 + $0x6c] sm:$0xff]
        %v837 = vld [vmem:[%s6 + $0x74] sm:$0xf]
        %v838 = vld [vmem:[%s6 + $0x78] sm:$0xff]
        %v839 = vld [vmem:[%s6 + $0x80] sm:$0xf]
        %v840 = vld [vmem:[%s6 + $0x84] sm:$0xff]
        %v841 = vld [vmem:[%s6 + $0x8c] sm:$0xf]
        %v842 = vld [vmem:[%s6 + $0x90] sm:$0xff]
        %v843 = vld [vmem:[%s6 + $0x98] sm:$0xf]
        %v844 = vld [vmem:[%s6 + $0x9c] sm:$0xff]
        %v845 = vld [vmem:[%s6 + $0xa4] sm:$0xf]
        %v846 = vld [vmem:[%s6 + $0xa8] sm:$0xff]
        %v847 = vld [vmem:[%s6 + $0xb0] sm:$0xf]
        %v848 = vld [vmem:[%s6 + $0xb4] sm:$0xff]
        %v849 = vld [vmem:[%s6 + $0xbc] sm:$0xf]
        %v850 = vld [vmem:[%s7] sm:$0x7]
        %v852 = vlaneseq
        %v853 = vshrl.u32 %v852, 7
        %v854 = vsub.s32 0, %v853
        %v855 = vrot.slane %v850, %v854
        %v856 = vlaneseq
        %v857 = vshrl.u32 %v856, 7
        %v858 = vsub.s32 1, %v857
        %v859 = vrot.slane %v850, %v858
        %v860 = vlaneseq
        %v861 = vshrl.u32 %v860, 7
        %v862 = vsub.s32 2, %v861
        %v863 = vrot.slane %v850, %v862
        %v899 = vunpack.c.l.b16 %v818
        %v900 = vunpack.c.h.b16 %v818
        %v901 = vunpack.c.l.b16 %v819
        %v902 = vunpack.c.l.b16 %v820
        %v903 = vunpack.c.h.b16 %v820
        %v904 = vunpack.c.l.b16 %v821
        %v905 = vunpack.c.l.b16 %v822
        %v906 = vunpack.c.h.b16 %v822
        %v907 = vunpack.c.l.b16 %v823
        %v908 = vunpack.c.l.b16 %v824
        %v909 = vunpack.c.h.b16 %v824
        %v910 = vunpack.c.l.b16 %v825
        %v911 = vunpack.c.l.b16 %v826
        %v912 = vunpack.c.h.b16 %v826
        %v913 = vunpack.c.l.b16 %v827
        %v914 = vunpack.c.l.b16 %v828
        %v915 = vunpack.c.h.b16 %v828
        %v916 = vunpack.c.l.b16 %v829
        %v917 = vunpack.c.l.b16 %v830
        %v918 = vunpack.c.h.b16 %v830
        %v919 = vunpack.c.l.b16 %v831
        %v920 = vunpack.c.l.b16 %v832
        %v921 = vunpack.c.h.b16 %v832
        %v922 = vunpack.c.l.b16 %v833
        %v923 = vunpack.c.l.b16 %v834
        %v924 = vunpack.c.h.b16 %v834
        %v925 = vunpack.c.l.b16 %v835
        %v926 = vunpack.c.l.b16 %v836
        %v927 = vunpack.c.h.b16 %v836
        %v928 = vunpack.c.l.b16 %v837
        %v929 = vunpack.c.l.b16 %v838
        %v930 = vunpack.c.h.b16 %v838
        %v931 = vunpack.c.l.b16 %v839
        %v932 = vunpack.c.l.b16 %v840
        %v933 = vunpack.c.h.b16 %v840
        %v934 = vunpack.c.l.b16 %v841
        %v935 = vunpack.c.l.b16 %v842
        %v936 = vunpack.c.h.b16 %v842
        %v937 = vunpack.c.l.b16 %v843
        %v938 = vunpack.c.l.b16 %v844
        %v939 = vunpack.c.h.b16 %v844
        %v940 = vunpack.c.l.b16 %v845
        %v941 = vunpack.c.l.b16 %v846
        %v942 = vunpack.c.h.b16 %v846
        %v943 = vunpack.c.l.b16 %v847
        %v944 = vunpack.c.l.b16 %v848
        %v945 = vunpack.c.h.b16 %v848
        %v946 = vunpack.c.l.b16 %v849
        %v947 = vpack.c.b16 %v902, %v899
        %v948 = vpack.c.b16 %v903, %v900
        %v949 = vpack.c.b16 %v904, %v901
        %v950 = vpack.c.b16 %v908, %v905
        %v951 = vpack.c.b16 %v909, %v906
        %v952 = vpack.c.b16 %v910, %v907
        %v953 = vpack.c.b16 %v914, %v911
        %v954 = vpack.c.b16 %v915, %v912
        %v955 = vpack.c.b16 %v916, %v913
        %v956 = vpack.c.b16 %v920, %v917
        %v957 = vpack.c.b16 %v921, %v918
        %v958 = vpack.c.b16 %v922, %v919
        %v959 = vpack.c.b16 %v926, %v923
        %v960 = vpack.c.b16 %v927, %v924
        %v961 = vpack.c.b16 %v928, %v925
        %v962 = vpack.c.b16 %v932, %v929
        %v963 = vpack.c.b16 %v933, %v930
        %v964 = vpack.c.b16 %v934, %v931
        %v965 = vpack.c.b16 %v938, %v935
        %v966 = vpack.c.b16 %v939, %v936
        %v967 = vpack.c.b16 %v940, %v937
        %v968 = vpack.c.b16 %v944, %v941
        %v969 = vpack.c.b16 %v945, %v942
        %v970 = vpack.c.b16 %v946, %v943
        %995 = vmatprep.subr.bf16.mxu0 %v969
        %996 = vmatpush1.bf16.msra.mxu0 %v968
        %997 = vmatprep.subr.bf16.mxu0 %v966
        %998 = vmatpush1.bf16.msra.mxu0 %v965
        %999 = vmatprep.subr.bf16.mxu0 %v963
        %1000 = vmatpush1.bf16.msra.mxu0 %v962
        %1001 = vmatprep.subr.bf16.mxu0 %v960
        %1002 = vmatpush1.bf16.msra.mxu0 %v959
        %1003 = vmatprep.subr.bf16.mxu0 %v957
        %1004 = vmatpush1.bf16.msra.mxu0 %v956
        %1005 = vmatprep.subr.bf16.mxu0 %v954
        %1006 = vmatpush1.bf16.msra.mxu0 %v953
        %1007 = vmatprep.subr.bf16.mxu0 %v951
        %1008 = vmatpush1.bf16.msra.mxu0 %v950
        %1009 = vmatprep.subr.bf16.mxu0 %v948
        %1010 = vmatpush1.bf16.msra.mxu0 %v947
        %1011 = vmatprep.subr.bf16.mxu0 0
        %1012 = vmatpush2.bf16.msra.mxu0 0
        %1013 = vmatprep.subr.bf16.mxu0 0
        %1014 = vmatpush2.bf16.msra.mxu0 0
        %1015 = vmatprep.subr.bf16.mxu0 0
        %1016 = vmatpush2.bf16.msra.mxu0 0
        %1017 = vmatprep.subr.bf16.mxu0 0
        %1018 = vmatpush2.bf16.msra.mxu0 0
        %1019 = vmatprep.subr.bf16.mxu0 0
        %1020 = vmatpush2.bf16.msra.mxu0 0
        %1021 = vmatprep.subr.bf16.mxu0 0
        %1022 = vmatpush2.bf16.msra.mxu0 0
        %1023 = vmatprep.subr.bf16.mxu0 0
        %1024 = vmatpush2.bf16.msra.mxu0 0
        %1025 = vmatprep.subr.bf16.mxu0 0
        %1026 = vmatpush2.bf16.msra.mxu0 0
        %1027 = vmatprep.mubr.bf16.mxu0 0
        %1028 = vmatmul.mubr.bf16.gmra.mxu0 %v817
        %v1029 = vpop.f32.mrf.mxu0
        %v1030 = vadd.f32 %v855, %v1029
        %v1031 = vpop.f32.mrf.mxu0
        %v1032 = vadd.f32 %v859, %v1031
        %v1033 = vpop.f32.mrf.mxu0
        %v1034 = vpop.f32.mrf.mxu0
        %1035 = vdwg.mxu0
        %1036 = vmatprep.subr.bf16.mxu0 0
        %1037 = vmatpush1.bf16.msra.mxu0 %v970
        %1038 = vmatprep.subr.bf16.mxu0 0
        %1039 = vmatpush1.bf16.msra.mxu0 %v967
        %1040 = vmatprep.subr.bf16.mxu0 0
        %1041 = vmatpush1.bf16.msra.mxu0 %v964
        %1042 = vmatprep.subr.bf16.mxu0 0
        %1043 = vmatpush1.bf16.msra.mxu0 %v961
        %1044 = vmatprep.subr.bf16.mxu0 0
        %1045 = vmatpush1.bf16.msra.mxu0 %v958
        %1046 = vmatprep.subr.bf16.mxu0 0
        %1047 = vmatpush1.bf16.msra.mxu0 %v955
        %1048 = vmatprep.subr.bf16.mxu0 0
        %1049 = vmatpush1.bf16.msra.mxu0 %v952
        %1050 = vmatprep.subr.bf16.mxu0 0
        %1051 = vmatpush1.bf16.msra.mxu0 %v949
        %1052 = vmatprep.subr.bf16.mxu0 0
        %1053 = vmatpush2.bf16.msra.mxu0 0
        %1054 = vmatprep.subr.bf16.mxu0 0
        %1055 = vmatpush2.bf16.msra.mxu0 0
        %1056 = vmatprep.subr.bf16.mxu0 0
        %1057 = vmatpush2.bf16.msra.mxu0 0
        %1058 = vmatprep.subr.bf16.mxu0 0
        %1059 = vmatpush2.bf16.msra.mxu0 0
        %1060 = vmatprep.subr.bf16.mxu0 0
        %1061 = vmatpush2.bf16.msra.mxu0 0
        %1062 = vmatprep.subr.bf16.mxu0 0
        %1063 = vmatpush2.bf16.msra.mxu0 0
        %1064 = vmatprep.subr.bf16.mxu0 0
        %1065 = vmatpush2.bf16.msra.mxu0 0
        %1066 = vmatprep.subr.bf16.mxu0 0
        %1067 = vmatpush2.bf16.msra.mxu0 0
        %1068 = vmatprep.mubr.bf16.mxu0 0
        %1069 = vmatmul.mubr.bf16.gmra.mxu0 %v817
        %v1070 = vpop.f32.mrf.mxu0
        %v1071 = vadd.f32 %v863, %v1070
        %v1072 = vpop.f32.mrf.mxu0
        %v1073 = vpop.f32.mrf.mxu0
        %v1074 = vpop.f32.mrf.mxu0
        %1075 = vdwg.mxu0
        %v1076 = vpack.c.bf16 %v1030, %v1030
        %v1077 = vpack.c.bf16 %v1032, %v1032
        %v1078 = vpack.c.bf16 %v1071, %v1071
        %vm1079 = vcmask 523264
        %v1081 = vsel %vm1079, %v1076, 0
        %v1084 = vsel %vm1079, %v1077, 0
        %1086 = vmatprep.subr.bf16.mxu0 0
        %1087 = vmatpush1.bf16.xpose.msra.mxu0 0
        %1088 = vmatprep.subr.bf16.mxu0 0
        %1089 = vmatpush1.bf16.xpose.msra.mxu0 0
        %1090 = vmatprep.subr.bf16.mxu0 0
        %1091 = vmatpush1.bf16.xpose.msra.mxu0 0
        %1092 = vmatprep.subr.bf16.mxu0 0
        %1093 = vmatpush1.bf16.xpose.msra.mxu0 0
        %1094 = vmatprep.subr.bf16.mxu0 0
        %1095 = vmatpush1.bf16.xpose.msra.mxu0 0
        %1096 = vmatprep.subr.bf16.mxu0 0
        %1097 = vmatpush1.bf16.xpose.msra.mxu0 0
        %1098 = vmatprep.subr.bf16.mxu0 0
        %1099 = vmatpush1.bf16.xpose.msra.mxu0 0
        %1100 = vmatprep.subr.bf16.mxu0 0
        %1101 = vmatpush1.bf16.xpose.msra.mxu0 %v1084
        %1102 = vmatprep.subr.bf16.mxu0 0
        %1103 = vmatpush2.bf16.xpose.msra.mxu0 0
        %1104 = vmatprep.subr.bf16.mxu0 0
        %1105 = vmatpush2.bf16.xpose.msra.mxu0 0
        %1106 = vmatprep.subr.bf16.mxu0 0
        %1107 = vmatpush2.bf16.xpose.msra.mxu0 0
        %1108 = vmatprep.subr.bf16.mxu0 0
        %1109 = vmatpush2.bf16.xpose.msra.mxu0 0
        %1110 = vmatprep.subr.bf16.mxu0 0
        %1111 = vmatpush2.bf16.xpose.msra.mxu0 0
        %1112 = vmatprep.subr.bf16.mxu0 0
        %1113 = vmatpush2.bf16.xpose.msra.mxu0 0
        %1114 = vmatprep.subr.bf16.mxu0 0
        %1115 = vmatpush2.bf16.xpose.msra.mxu0 0
        %1116 = vmatprep.subr.bf16.mxu0 0
        %1117 = vmatpush2.bf16.xpose.msra.mxu0 0
        %1118 = vmatprep.mubr.bf16.mxu0 0
        %1119 = vmatmul.mubr.bf16.gmra.mxu0 %v1081
        %v1120 = vpop.f32.mrf.mxu0
        %v1121 = vadd.f32 0.0, %v1120
        %v1122 = vpop.f32.mrf.mxu0
        %v1123 = vpop.f32.mrf.mxu0
        %v1124 = vpop.f32.mrf.mxu0
        %1125 = vdwg.mxu0
        %v1126 = vmul.f32 %v1121, 0.125
        %v1127 = vlaneseq
        %v1128 = vshrl.u32 %v1127, 7
        %v1129 = vsub.s32 0, %v1128
        %v1130 = vrot.slane %v816, %v1129
        %v1131 = vadd.f32 %v1126, %v1130
        %vm1132 = vcmask 64512
        %v1133 = vsel %vm1132, %v1131, -inf
        %1134 = vmax.xlane.f32.xlu0 %v1133
        %v1135 = vpop.xlane.xlu0 %1134
        %v1136 = vsub.f32 %v1131, %v1135
        %v1137 = vmul.f32 %v1136, 1.442695
        %v1138 = vpow.pop %v1137
        %v1139 = vsel %vm1132, %v1138, 0.0
        %1140 = vadd.xlane.f32.xlu0 %v1139
        %v1141 = vpop.xlane.xlu0 %1140
        %v1142 = vrcp.pop %v1141
        %v1143 = vmul.f32 %v1138, %v1142
        %v1144 = vpack.c.bf16 %v1143, %v1143
        %v1146 = vsel %vm1132, %v1144, 0
        %vm1148 = vcmask 1043456
        %v1150 = vsel %vm1148, %v1078, 0
        %1152 = vmatprep.subr.bf16.mxu0 0
        %1153 = vmatpush1.bf16.msra.mxu0 0
        %1154 = vmatprep.subr.bf16.mxu0 0
        %1155 = vmatpush1.bf16.msra.mxu0 0
        %1156 = vmatprep.subr.bf16.mxu0 0
        %1157 = vmatpush1.bf16.msra.mxu0 0
        %1158 = vmatprep.subr.bf16.mxu0 0
        %1159 = vmatpush1.bf16.msra.mxu0 0
        %1160 = vmatprep.subr.bf16.mxu0 0
        %1161 = vmatpush1.bf16.msra.mxu0 0
        %1162 = vmatprep.subr.bf16.mxu0 0
        %1163 = vmatpush1.bf16.msra.mxu0 0
        %1164 = vmatprep.subr.bf16.mxu0 0
        %1165 = vmatpush1.bf16.msra.mxu0 0
        %1166 = vmatprep.subr.bf16.mxu0 0
        %1167 = vmatpush1.bf16.msra.mxu0 %v1150
        %1168 = vmatprep.subr.bf16.mxu0 0
        %1169 = vmatpush2.bf16.msra.mxu0 0
        %1170 = vmatprep.subr.bf16.mxu0 0
        %1171 = vmatpush2.bf16.msra.mxu0 0
        %1172 = vmatprep.subr.bf16.mxu0 0
        %1173 = vmatpush2.bf16.msra.mxu0 0
        %1174 = vmatprep.subr.bf16.mxu0 0
        %1175 = vmatpush2.bf16.msra.mxu0 0
        %1176 = vmatprep.subr.bf16.mxu0 0
        %1177 = vmatpush2.bf16.msra.mxu0 0
        %1178 = vmatprep.subr.bf16.mxu0 0
        %1179 = vmatpush2.bf16.msra.mxu0 0
        %1180 = vmatprep.subr.bf16.mxu0 0
        %1181 = vmatpush2.bf16.msra.mxu0 0
        %1182 = vmatprep.subr.bf16.mxu0 0
        %1183 = vmatpush2.bf16.msra.mxu0 0
        %1184 = vmatprep.mubr.bf16.mxu0 0
        %1185 = vmatmul.mubr.bf16.gmra.mxu0 %v1146
        %v1186 = vpop.f32.mrf.mxu0
        %v1187 = vadd.f32 0.0, %v1186
        %v1188 = vpop.f32.mrf.mxu0
        %v1189 = vpop.f32.mrf.mxu0
        %v1190 = vpop.f32.mrf.mxu0
        %1191 = vdwg.mxu0
        %1193 = vrot.lane.b32.xlu0 %v1076, 64
        %v1194 = vpop.permute.xlu0 %1193
        %1196 = vrot.lane.b32.xlu0 %v1077, 64
        %v1197 = vpop.permute.xlu0 %1196
        %v1199 = vsel %vm1079, %v1194, 0
        %v1202 = vsel %vm1079, %v1197, 0
        %1204 = vmatprep.subr.bf16.mxu0 0
        %1205 = vmatpush1.bf16.xpose.msra.mxu0 0
        %1206 = vmatprep.subr.bf16.mxu0 0
        %1207 = vmatpush1.bf16.xpose.msra.mxu0 0
        %1208 = vmatprep.subr.bf16.mxu0 0
        %1209 = vmatpush1.bf16.xpose.msra.mxu0 0
        %1210 = vmatprep.subr.bf16.mxu0 0
        %1211 = vmatpush1.bf16.xpose.msra.mxu0 0
        %1212 = vmatprep.subr.bf16.mxu0 0
        %1213 = vmatpush1.bf16.xpose.msra.mxu0 0
        %1214 = vmatprep.subr.bf16.mxu0 0
        %1215 = vmatpush1.bf16.xpose.msra.mxu0 0
        %1216 = vmatprep.subr.bf16.mxu0 0
        %1217 = vmatpush1.bf16.xpose.msra.mxu0 0
        %1218 = vmatprep.subr.bf16.mxu0 0
        %1219 = vmatpush1.bf16.xpose.msra.mxu0 %v1202
        %1220 = vmatprep.subr.bf16.mxu0 0
        %1221 = vmatpush2.bf16.xpose.msra.mxu0 0
        %1222 = vmatprep.subr.bf16.mxu0 0
        %1223 = vmatpush2.bf16.xpose.msra.mxu0 0
        %1224 = vmatprep.subr.bf16.mxu0 0
        %1225 = vmatpush2.bf16.xpose.msra.mxu0 0
        %1226 = vmatprep.subr.bf16.mxu0 0
        %1227 = vmatpush2.bf16.xpose.msra.mxu0 0
        %1228 = vmatprep.subr.bf16.mxu0 0
        %1229 = vmatpush2.bf16.xpose.msra.mxu0 0
        %1230 = vmatprep.subr.bf16.mxu0 0
        %1231 = vmatpush2.bf16.xpose.msra.mxu0 0
        %1232 = vmatprep.subr.bf16.mxu0 0
        %1233 = vmatpush2.bf16.xpose.msra.mxu0 0
        %1234 = vmatprep.subr.bf16.mxu0 0
        %1235 = vmatpush2.bf16.xpose.msra.mxu0 0
        %1236 = vmatprep.mubr.bf16.mxu0 0
        %1237 = vmatmul.mubr.bf16.gmra.mxu0 %v1199
        %v1238 = vpop.f32.mrf.mxu0
        %v1239 = vadd.f32 0.0, %v1238
        %v1240 = vpop.f32.mrf.mxu0
        %v1241 = vpop.f32.mrf.mxu0
        %v1242 = vpop.f32.mrf.mxu0
        %1243 = vdwg.mxu0
        %v1244 = vmul.f32 %v1239, 0.125
        %v1245 = vadd.f32 %v1244, %v1130
        %v1246 = vsel %vm1132, %v1245, -inf
        %1247 = vmax.xlane.f32.xlu0 %v1246
        %v1248 = vpop.xlane.xlu0 %1247
        %v1249 = vsub.f32 %v1245, %v1248
        %v1250 = vmul.f32 %v1249, 1.442695
        %v1251 = vpow.pop %v1250
        %v1252 = vsel %vm1132, %v1251, 0.0
        %1253 = vadd.xlane.f32.xlu0 %v1252
        %v1254 = vpop.xlane.xlu0 %1253
        %v1255 = vrcp.pop %v1254
        %v1256 = vmul.f32 %v1251, %v1255
        %v1257 = vpack.c.bf16 %v1256, %v1256
        %1259 = vrot.lane.b32.xlu0 %v1078, 64
        %v1260 = vpop.permute.xlu0 %1259
        %v1262 = vsel %vm1132, %v1257, 0
        %v1265 = vsel %vm1148, %v1260, 0
        %1267 = vmatprep.subr.bf16.mxu0 0
        %1268 = vmatpush1.bf16.msra.mxu0 0
        %1269 = vmatprep.subr.bf16.mxu0 0
        %1270 = vmatpush1.bf16.msra.mxu0 0
        %1271 = vmatprep.subr.bf16.mxu0 0
        %1272 = vmatpush1.bf16.msra.mxu0 0
        %1273 = vmatprep.subr.bf16.mxu0 0
        %1274 = vmatpush1.bf16.msra.mxu0 0
        %1275 = vmatprep.subr.bf16.mxu0 0
        %1276 = vmatpush1.bf16.msra.mxu0 0
        %1277 = vmatprep.subr.bf16.mxu0 0
        %1278 = vmatpush1.bf16.msra.mxu0 0
        %1279 = vmatprep.subr.bf16.mxu0 0
        %1280 = vmatpush1.bf16.msra.mxu0 0
        %1281 = vmatprep.subr.bf16.mxu0 0
        %1282 = vmatpush1.bf16.msra.mxu0 %v1265
        %1283 = vmatprep.subr.bf16.mxu0 0
        %1284 = vmatpush2.bf16.msra.mxu0 0
        %1285 = vmatprep.subr.bf16.mxu0 0
        %1286 = vmatpush2.bf16.msra.mxu0 0
        %1287 = vmatprep.subr.bf16.mxu0 0
        %1288 = vmatpush2.bf16.msra.mxu0 0
        %1289 = vmatprep.subr.bf16.mxu0 0
        %1290 = vmatpush2.bf16.msra.mxu0 0
        %1291 = vmatprep.subr.bf16.mxu0 0
        %1292 = vmatpush2.bf16.msra.mxu0 0
        %1293 = vmatprep.subr.bf16.mxu0 0
        %1294 = vmatpush2.bf16.msra.mxu0 0
        %1295 = vmatprep.subr.bf16.mxu0 0
        %1296 = vmatpush2.bf16.msra.mxu0 0
        %1297 = vmatprep.subr.bf16.mxu0 0
        %1298 = vmatpush2.bf16.msra.mxu0 0
        %1299 = vmatprep.mubr.bf16.mxu0 0
        %1300 = vmatmul.mubr.bf16.gmra.mxu0 %v1262
        %v1301 = vpop.f32.mrf.mxu0
        %v1302 = vadd.f32 0.0, %v1301
        %v1303 = vpop.f32.mrf.mxu0
        %v1304 = vpop.f32.mrf.mxu0
        %v1305 = vpop.f32.mrf.mxu0
        %1306 = vdwg.mxu0
        %1308 = vrot.lane.b32.xlu0 %v1302, 64
        %v1309 = vpop.permute.xlu0 %1308
        %v1311 = vsel %vm1079, %v1187, %v1309
        %v1312 = vpack.c.bf16 %v1311, %v1311
        %v1313 = vld [vmem:[#allocation9] sm:$0xf]
        %v1314 = vld [vmem:[#allocation9 + $0x4] sm:$0xf]
        %v1315 = vld [vmem:[#allocation9 + $0x8] sm:$0xf]
        %v1316 = vld [vmem:[#allocation9 + $0xc] sm:$0xf]
        %v1317 = vld [vmem:[#allocation9 + $0x10] sm:$0xf]
        %v1318 = vld [vmem:[#allocation9 + $0x14] sm:$0xf]
        %v1319 = vld [vmem:[#allocation9 + $0x18] sm:$0xf]
        %v1320 = vld [vmem:[#allocation9 + $0x1c] sm:$0xf]
        %v1321 = vld [vmem:[#allocation9 + $0x20] sm:$0xf]
        %v1322 = vld [vmem:[#allocation9 + $0x24] sm:$0xf]
        %v1323 = vld [vmem:[#allocation9 + $0x28] sm:$0xf]
        %v1324 = vld [vmem:[#allocation9 + $0x2c] sm:$0xf]
        %v1325 = vld [vmem:[#allocation9 + $0x30] sm:$0xf]
        %v1326 = vld [vmem:[#allocation9 + $0x34] sm:$0xf]
        %v1327 = vld [vmem:[#allocation9 + $0x38] sm:$0xf]
        %v1328 = vld [vmem:[#allocation9 + $0x3c] sm:$0xf]
        %v1329 = vld [vmem:[%s9] sm:$0x1]
        %v1331 = vlaneseq
        %v1332 = vshrl.u32 %v1331, 7
        %v1333 = vsub.s32 0, %v1332
        %v1334 = vrot.slane %v1329, %v1333
        %v1352 = vunpack.c.l.b16 %v1313
        %v1353 = vunpack.c.l.b16 %v1314
        %v1354 = vunpack.c.l.b16 %v1315
        %v1355 = vunpack.c.l.b16 %v1316
        %v1356 = vunpack.c.l.b16 %v1317
        %v1357 = vunpack.c.l.b16 %v1318
        %v1358 = vunpack.c.l.b16 %v1319
        %v1359 = vunpack.c.l.b16 %v1320
        %v1360 = vunpack.c.l.b16 %v1321
        %v1361 = vunpack.c.l.b16 %v1322
        %v1362 = vunpack.c.l.b16 %v1323
        %v1363 = vunpack.c.l.b16 %v1324
        %v1364 = vunpack.c.l.b16 %v1325
        %v1365 = vunpack.c.l.b16 %v1326
        %v1366 = vunpack.c.l.b16 %v1327
        %v1367 = vunpack.c.l.b16 %v1328
        %v1368 = vpack.c.b16 %v1353, %v1352
        %v1369 = vpack.c.b16 %v1355, %v1354
        %v1370 = vpack.c.b16 %v1357, %v1356
        %v1371 = vpack.c.b16 %v1359, %v1358
        %v1372 = vpack.c.b16 %v1361, %v1360
        %v1373 = vpack.c.b16 %v1363, %v1362
        %v1374 = vpack.c.b16 %v1365, %v1364
        %v1375 = vpack.c.b16 %v1367, %v1366
        %1384 = vmatprep.subr.bf16.mxu0 0
        %1385 = vmatpush1.bf16.msra.mxu0 %v1375
        %1386 = vmatprep.subr.bf16.mxu0 0
        %1387 = vmatpush1.bf16.msra.mxu0 %v1374
        %1388 = vmatprep.subr.bf16.mxu0 0
        %1389 = vmatpush1.bf16.msra.mxu0 %v1373
        %1390 = vmatprep.subr.bf16.mxu0 0
        %1391 = vmatpush1.bf16.msra.mxu0 %v1372
        %1392 = vmatprep.subr.bf16.mxu0 0
        %1393 = vmatpush1.bf16.msra.mxu0 %v1371
        %1394 = vmatprep.subr.bf16.mxu0 0
        %1395 = vmatpush1.bf16.msra.mxu0 %v1370
        %1396 = vmatprep.subr.bf16.mxu0 0
        %1397 = vmatpush1.bf16.msra.mxu0 %v1369
        %1398 = vmatprep.subr.bf16.mxu0 0
        %1399 = vmatpush1.bf16.msra.mxu0 %v1368
        %1400 = vmatprep.subr.bf16.mxu0 0
        %1401 = vmatpush2.bf16.msra.mxu0 0
        %1402 = vmatprep.subr.bf16.mxu0 0
        %1403 = vmatpush2.bf16.msra.mxu0 0
        %1404 = vmatprep.subr.bf16.mxu0 0
        %1405 = vmatpush2.bf16.msra.mxu0 0
        %1406 = vmatprep.subr.bf16.mxu0 0
        %1407 = vmatpush2.bf16.msra.mxu0 0
        %1408 = vmatprep.subr.bf16.mxu0 0
        %1409 = vmatpush2.bf16.msra.mxu0 0
        %1410 = vmatprep.subr.bf16.mxu0 0
        %1411 = vmatpush2.bf16.msra.mxu0 0
        %1412 = vmatprep.subr.bf16.mxu0 0
        %1413 = vmatpush2.bf16.msra.mxu0 0
        %1414 = vmatprep.subr.bf16.mxu0 0
        %1415 = vmatpush2.bf16.msra.mxu0 0
        %1416 = vmatprep.mubr.bf16.mxu0 0
        %1417 = vmatmul.mubr.bf16.gmra.mxu0 %v1312
        %v1418 = vpop.f32.mrf.mxu0
        %v1419 = vadd.f32 %v1334, %v1418
        %v1420 = vpop.f32.mrf.mxu0
        %v1421 = vpop.f32.mrf.mxu0
        %v1422 = vpop.f32.mrf.mxu0
        %1423 = vdwg.mxu0
        %v1424 = vadd.f32 %v1419, %v814
        %v1425 = vld [vmem:[%s10] sm:$0x1]
        %v1426 = vld [vmem:[%s11] sm:$0x1]
        %1427 = vadd.xlane.f32.xlu0 %v1424
        %v1428 = vpop.xlane.xlu0 %1427
        %v1429 = vmul.f32 %v1428, %v791
        %v1430 = vsub.f32 %v1424, %v1429
        %v1431 = vmul.f32 %v1430, %v1430
        %1432 = vadd.xlane.f32.xlu0 %v1431
        %v1433 = vpop.xlane.xlu0 %1432
        %v1434 = vmul.f32 %v1433, %v791
        %v1435 = vadd.f32 %v1434, 1e-12
        %v1436 = vrsqrt.pop %v1435
        %v1437 = vmul.f32 %v1430, %v1436
        %v1439 = vlaneseq
        %v1440 = vshrl.u32 %v1439, 7
        %v1441 = vsub.s32 0, %v1440
        %v1442 = vrot.slane %v1425, %v1441
        %v1444 = vmul.f32 %v1437, %v1442
        %v1446 = vlaneseq
        %v1447 = vshrl.u32 %v1446, 7
        %v1448 = vsub.s32 0, %v1447
        %v1449 = vrot.slane %v1426, %v1448
        %v1451 = vadd.f32 %v1444, %v1449
        %v1452 = vpack.c.bf16 %v1451, %v1451
        %v1453 = vld [vmem:[#allocation11] sm:$0xff]
        %v1454 = vld [vmem:[#allocation11 + $0x8] sm:$0xff]
        %v1455 = vld [vmem:[#allocation11 + $0x10] sm:$0xff]
        %v1456 = vld [vmem:[#allocation11 + $0x18] sm:$0xff]
        %v1457 = vld [vmem:[#allocation11 + $0x20] sm:$0xff]
        %v1458 = vld [vmem:[#allocation11 + $0x28] sm:$0xff]
        %v1459 = vld [vmem:[#allocation11 + $0x30] sm:$0xff]
        %v1460 = vld [vmem:[#allocation11 + $0x38] sm:$0xff]
        %v1461 = vld [vmem:[#allocation11 + $0x40] sm:$0xff]
        %v1462 = vld [vmem:[#allocation11 + $0x48] sm:$0xff]
        %v1463 = vld [vmem:[#allocation11 + $0x50] sm:$0xff]
        %v1464 = vld [vmem:[#allocation11 + $0x58] sm:$0xff]
        %v1465 = vld [vmem:[#allocation11 + $0x60] sm:$0xff]
        %v1466 = vld [vmem:[#allocation11 + $0x68] sm:$0xff]
        %v1467 = vld [vmem:[#allocation11 + $0x70] sm:$0xff]
        %v1468 = vld [vmem:[#allocation11 + $0x78] sm:$0xff]
        %v1469 = vld [vmem:[%s13] sm:$0x3]
        %v1471 = vlaneseq
        %v1472 = vshrl.u32 %v1471, 7
        %v1473 = vsub.s32 0, %v1472
        %v1474 = vrot.slane %v1469, %v1473
        %v1475 = vlaneseq
        %v1476 = vshrl.u32 %v1475, 7
        %v1477 = vsub.s32 1, %v1476
        %v1478 = vrot.slane %v1469, %v1477
        %v1497 = vunpack.c.l.b16 %v1453
        %v1498 = vunpack.c.h.b16 %v1453
        %v1499 = vunpack.c.l.b16 %v1454
        %v1500 = vunpack.c.h.b16 %v1454
        %v1501 = vunpack.c.l.b16 %v1455
        %v1502 = vunpack.c.h.b16 %v1455
        %v1503 = vunpack.c.l.b16 %v1456
        %v1504 = vunpack.c.h.b16 %v1456
        %v1505 = vunpack.c.l.b16 %v1457
        %v1506 = vunpack.c.h.b16 %v1457
        %v1507 = vunpack.c.l.b16 %v1458
        %v1508 = vunpack.c.h.b16 %v1458
        %v1509 = vunpack.c.l.b16 %v1459
        %v1510 = vunpack.c.h.b16 %v1459
        %v1511 = vunpack.c.l.b16 %v1460
        %v1512 = vunpack.c.h.b16 %v1460
        %v1513 = vunpack.c.l.b16 %v1461
        %v1514 = vunpack.c.h.b16 %v1461
        %v1515 = vunpack.c.l.b16 %v1462
        %v1516 = vunpack.c.h.b16 %v1462
        %v1517 = vunpack.c.l.b16 %v1463
        %v1518 = vunpack.c.h.b16 %v1463
        %v1519 = vunpack.c.l.b16 %v1464
        %v1520 = vunpack.c.h.b16 %v1464
        %v1521 = vunpack.c.l.b16 %v1465
        %v1522 = vunpack.c.h.b16 %v1465
        %v1523 = vunpack.c.l.b16 %v1466
        %v1524 = vunpack.c.h.b16 %v1466
        %v1525 = vunpack.c.l.b16 %v1467
        %v1526 = vunpack.c.h.b16 %v1467
        %v1527 = vunpack.c.l.b16 %v1468
        %v1528 = vunpack.c.h.b16 %v1468
        %v1529 = vpack.c.b16 %v1499, %v1497
        %v1530 = vpack.c.b16 %v1500, %v1498
        %v1531 = vpack.c.b16 %v1503, %v1501
        %v1532 = vpack.c.b16 %v1504, %v1502
        %v1533 = vpack.c.b16 %v1507, %v1505
        %v1534 = vpack.c.b16 %v1508, %v1506
        %v1535 = vpack.c.b16 %v1511, %v1509
        %v1536 = vpack.c.b16 %v1512, %v1510
        %v1537 = vpack.c.b16 %v1515, %v1513
        %v1538 = vpack.c.b16 %v1516, %v1514
        %v1539 = vpack.c.b16 %v1519, %v1517
        %v1540 = vpack.c.b16 %v1520, %v1518
        %v1541 = vpack.c.b16 %v1523, %v1521
        %v1542 = vpack.c.b16 %v1524, %v1522
        %v1543 = vpack.c.b16 %v1527, %v1525
        %v1544 = vpack.c.b16 %v1528, %v1526
        %1561 = vmatprep.subr.bf16.mxu0 %v1544
        %1562 = vmatpush1.bf16.msra.mxu0 %v1543
        %1563 = vmatprep.subr.bf16.mxu0 %v1542
        %1564 = vmatpush1.bf16.msra.mxu0 %v1541
        %1565 = vmatprep.subr.bf16.mxu0 %v1540
        %1566 = vmatpush1.bf16.msra.mxu0 %v1539
        %1567 = vmatprep.subr.bf16.mxu0 %v1538
        %1568 = vmatpush1.bf16.msra.mxu0 %v1537
        %1569 = vmatprep.subr.bf16.mxu0 %v1536
        %1570 = vmatpush1.bf16.msra.mxu0 %v1535
        %1571 = vmatprep.subr.bf16.mxu0 %v1534
        %1572 = vmatpush1.bf16.msra.mxu0 %v1533
        %1573 = vmatprep.subr.bf16.mxu0 %v1532
        %1574 = vmatpush1.bf16.msra.mxu0 %v1531
        %1575 = vmatprep.subr.bf16.mxu0 %v1530
        %1576 = vmatpush1.bf16.msra.mxu0 %v1529
        %1577 = vmatprep.subr.bf16.mxu0 0
        %1578 = vmatpush2.bf16.msra.mxu0 0
        %1579 = vmatprep.subr.bf16.mxu0 0
        %1580 = vmatpush2.bf16.msra.mxu0 0
        %1581 = vmatprep.subr.bf16.mxu0 0
        %1582 = vmatpush2.bf16.msra.mxu0 0
        %1583 = vmatprep.subr.bf16.mxu0 0
        %1584 = vmatpush2.bf16.msra.mxu0 0
        %1585 = vmatprep.subr.bf16.mxu0 0
        %1586 = vmatpush2.bf16.msra.mxu0 0
        %1587 = vmatprep.subr.bf16.mxu0 0
        %1588 = vmatpush2.bf16.msra.mxu0 0
        %1589 = vmatprep.subr.bf16.mxu0 0
        %1590 = vmatpush2.bf16.msra.mxu0 0
        %1591 = vmatprep.subr.bf16.mxu0 0
        %1592 = vmatpush2.bf16.msra.mxu0 0
        %1593 = vmatprep.mubr.bf16.mxu0 0
        %1594 = vmatmul.mubr.bf16.gmra.mxu0 %v1452
        %v1595 = vpop.f32.mrf.mxu0
        %v1596 = vadd.f32 %v1474, %v1595
        %v1597 = vpop.f32.mrf.mxu0
        %v1598 = vadd.f32 %v1478, %v1597
        %v1599 = vpop.f32.mrf.mxu0
        %v1600 = vpop.f32.mrf.mxu0
        %1601 = vdwg.mxu0
        %v1602 = vmul.f32 %v1596, 0.5
        %v1603 = vmul.f32 %v1598, 0.5
        %v1604 = vmul.f32 %v1596, 0.044715
        %v1605 = vmul.f32 %v1598, 0.044715
        %v1606 = vmul.f32 %v1604, %v1596
        %v1607 = vmul.f32 %v1605, %v1598
        %v1608 = vmul.f32 %v1606, %v1596
        %v1609 = vmul.f32 %v1607, %v1598
        %v1610 = vadd.f32 %v1596, %v1608
        %v1611 = vadd.f32 %v1598, %v1609
        %v1612 = vmul.f32 %v1610, 0.7978846
        %v1613 = vmul.f32 %v1611, 0.7978846
        %v1614 = vtanh.pop %v1612
        %v1615 = vtanh.pop %v1613
        %v1616 = vadd.f32 %v1614, 1.0
        %v1617 = vadd.f32 %v1615, 1.0
        %v1618 = vmul.f32 %v1602, %v1616
        %v1619 = vmul.f32 %v1603, %v1617
        %v1620 = vpack.c.bf16 %v1618, %v1618
        %v1621 = vpack.c.bf16 %v1619, %v1619
        %v1622 = vld [vmem:[#allocation12] sm:$0xf]
        %v1623 = vld [vmem:[#allocation12 + $0x4] sm:$0xf]
        %v1624 = vld [vmem:[#allocation12 + $0x8] sm:$0xf]
        %v1625 = vld [vmem:[#allocation12 + $0xc] sm:$0xf]
        %v1626 = vld [vmem:[#allocation12 + $0x10] sm:$0xf]
        %v1627 = vld [vmem:[#allocation12 + $0x14] sm:$0xf]
        %v1628 = vld [vmem:[#allocation12 + $0x18] sm:$0xf]
        %v1629 = vld [vmem:[#allocation12 + $0x1c] sm:$0xf]
        %v1630 = vld [vmem:[#allocation12 + $0x20] sm:$0xf]
        %v1631 = vld [vmem:[#allocation12 + $0x24] sm:$0xf]
        %v1632 = vld [vmem:[#allocation12 + $0x28] sm:$0xf]
        %v1633 = vld [vmem:[#allocation12 + $0x2c] sm:$0xf]
        %v1634 = vld [vmem:[#allocation12 + $0x30] sm:$0xf]
        %v1635 = vld [vmem:[#allocation12 + $0x34] sm:$0xf]
        %v1636 = vld [vmem:[#allocation12 + $0x38] sm:$0xf]
        %v1637 = vld [vmem:[#allocation12 + $0x3c] sm:$0xf]
        %v1638 = vld [vmem:[#allocation12 + $0x40] sm:$0xf]
        %v1639 = vld [vmem:[#allocation12 + $0x44] sm:$0xf]
        %v1640 = vld [vmem:[#allocation12 + $0x48] sm:$0xf]
        %v1641 = vld [vmem:[#allocation12 + $0x4c] sm:$0xf]
        %v1642 = vld [vmem:[#allocation12 + $0x50] sm:$0xf]
        %v1643 = vld [vmem:[#allocation12 + $0x54] sm:$0xf]
        %v1644 = vld [vmem:[#allocation12 + $0x58] sm:$0xf]
        %v1645 = vld [vmem:[#allocation12 + $0x5c] sm:$0xf]
        %v1646 = vld [vmem:[#allocation12 + $0x60] sm:$0xf]
        %v1647 = vld [vmem:[#allocation12 + $0x64] sm:$0xf]
        %v1648 = vld [vmem:[#allocation12 + $0x68] sm:$0xf]
        %v1649 = vld [vmem:[#allocation12 + $0x6c] sm:$0xf]
        %v1650 = vld [vmem:[#allocation12 + $0x70] sm:$0xf]
        %v1651 = vld [vmem:[#allocation12 + $0x74] sm:$0xf]
        %v1652 = vld [vmem:[#allocation12 + $0x78] sm:$0xf]
        %v1653 = vld [vmem:[#allocation12 + $0x7c] sm:$0xf]
        %v1654 = vld [vmem:[%s15] sm:$0x1]
        %v1656 = vlaneseq
        %v1657 = vshrl.u32 %v1656, 7
        %v1658 = vsub.s32 0, %v1657
        %v1659 = vrot.slane %v1654, %v1658
        %v1693 = vunpack.c.l.b16 %v1622
        %v1694 = vunpack.c.l.b16 %v1623
        %v1695 = vunpack.c.l.b16 %v1624
        %v1696 = vunpack.c.l.b16 %v1625
        %v1697 = vunpack.c.l.b16 %v1626
        %v1698 = vunpack.c.l.b16 %v1627
        %v1699 = vunpack.c.l.b16 %v1628
        %v1700 = vunpack.c.l.b16 %v1629
        %v1701 = vunpack.c.l.b16 %v1630
        %v1702 = vunpack.c.l.b16 %v1631
        %v1703 = vunpack.c.l.b16 %v1632
        %v1704 = vunpack.c.l.b16 %v1633
        %v1705 = vunpack.c.l.b16 %v1634
        %v1706 = vunpack.c.l.b16 %v1635
        %v1707 = vunpack.c.l.b16 %v1636
        %v1708 = vunpack.c.l.b16 %v1637
        %v1709 = vunpack.c.l.b16 %v1638
        %v1710 = vunpack.c.l.b16 %v1639
        %v1711 = vunpack.c.l.b16 %v1640
        %v1712 = vunpack.c.l.b16 %v1641
        %v1713 = vunpack.c.l.b16 %v1642
        %v1714 = vunpack.c.l.b16 %v1643
        %v1715 = vunpack.c.l.b16 %v1644
        %v1716 = vunpack.c.l.b16 %v1645
        %v1717 = vunpack.c.l.b16 %v1646
        %v1718 = vunpack.c.l.b16 %v1647
        %v1719 = vunpack.c.l.b16 %v1648
        %v1720 = vunpack.c.l.b16 %v1649
        %v1721 = vunpack.c.l.b16 %v1650
        %v1722 = vunpack.c.l.b16 %v1651
        %v1723 = vunpack.c.l.b16 %v1652
        %v1724 = vunpack.c.l.b16 %v1653
        %v1725 = vpack.c.b16 %v1694, %v1693
        %v1726 = vpack.c.b16 %v1696, %v1695
        %v1727 = vpack.c.b16 %v1698, %v1697
        %v1728 = vpack.c.b16 %v1700, %v1699
        %v1729 = vpack.c.b16 %v1702, %v1701
        %v1730 = vpack.c.b16 %v1704, %v1703
        %v1731 = vpack.c.b16 %v1706, %v1705
        %v1732 = vpack.c.b16 %v1708, %v1707
        %v1733 = vpack.c.b16 %v1710, %v1709
        %v1734 = vpack.c.b16 %v1712, %v1711
        %v1735 = vpack.c.b16 %v1714, %v1713
        %v1736 = vpack.c.b16 %v1716, %v1715
        %v1737 = vpack.c.b16 %v1718, %v1717
        %v1738 = vpack.c.b16 %v1720, %v1719
        %v1739 = vpack.c.b16 %v1722, %v1721
        %v1740 = vpack.c.b16 %v1724, %v1723
        %1757 = vmatprep.subr.bf16.mxu0 0
        %1758 = vmatpush1.bf16.msra.mxu0 %v1732
        %1759 = vmatprep.subr.bf16.mxu0 0
        %1760 = vmatpush1.bf16.msra.mxu0 %v1731
        %1761 = vmatprep.subr.bf16.mxu0 0
        %1762 = vmatpush1.bf16.msra.mxu0 %v1730
        %1763 = vmatprep.subr.bf16.mxu0 0
        %1764 = vmatpush1.bf16.msra.mxu0 %v1729
        %1765 = vmatprep.subr.bf16.mxu0 0
        %1766 = vmatpush1.bf16.msra.mxu0 %v1728
        %1767 = vmatprep.subr.bf16.mxu0 0
        %1768 = vmatpush1.bf16.msra.mxu0 %v1727
        %1769 = vmatprep.subr.bf16.mxu0 0
        %1770 = vmatpush1.bf16.msra.mxu0 %v1726
        %1771 = vmatprep.subr.bf16.mxu0 0
        %1772 = vmatpush1.bf16.msra.mxu0 %v1725
        %1773 = vmatprep.subr.bf16.mxu0 0
        %1774 = vmatpush2.bf16.msra.mxu0 %v1740
        %1775 = vmatprep.subr.bf16.mxu0 0
        %1776 = vmatpush2.bf16.msra.mxu0 %v1739
        %1777 = vmatprep.subr.bf16.mxu0 0
        %1778 = vmatpush2.bf16.msra.mxu0 %v1738
        %1779 = vmatprep.subr.bf16.mxu0 0
        %1780 = vmatpush2.bf16.msra.mxu0 %v1737
        %1781 = vmatprep.subr.bf16.mxu0 0
        %1782 = vmatpush2.bf16.msra.mxu0 %v1736
        %1783 = vmatprep.subr.bf16.mxu0 0
        %1784 = vmatpush2.bf16.msra.mxu0 %v1735
        %1785 = vmatprep.subr.bf16.mxu0 0
        %1786 = vmatpush2.bf16.msra.mxu0 %v1734
        %1787 = vmatprep.subr.bf16.mxu0 0
        %1788 = vmatpush2.bf16.msra.mxu0 %v1733
        %1789 = vmatprep.mubr.bf16.mxu0 %v1621
        %1790 = vmatmul.mubr.bf16.gmra.mxu0 %v1620
        %v1791 = vpop.f32.mrf.mxu0
        %v1792 = vadd.f32 %v1659, %v1791
        %v1793 = vpop.f32.mrf.mxu0
        %v1794 = vpop.f32.mrf.mxu0
        %v1795 = vpop.f32.mrf.mxu0
        %1796 = vdwg.mxu0
        %v1797 = vadd.f32 %v1792, %v1451
        %v1798 = vld [vmem:[#allocation14] sm:$0x1]
        %v1799 = vld [vmem:[%s17] sm:$0x1]
        %1800 = vadd.xlane.f32.xlu0 %v1797
        %v1801 = vpop.xlane.xlu0 %1800
        %v1802 = vmul.f32 %v1801, %v791
        %v1803 = vsub.f32 %v1797, %v1802
        %v1804 = vmul.f32 %v1803, %v1803
        %1805 = vadd.xlane.f32.xlu0 %v1804
        %v1806 = vpop.xlane.xlu0 %1805
        %v1807 = vmul.f32 %v1806, %v791
        %v1808 = vadd.f32 %v1807, 1e-12
        %v1809 = vrsqrt.pop %v1808
        %v1810 = vmul.f32 %v1803, %v1809
        %v1812 = vlaneseq
        %v1813 = vshrl.u32 %v1812, 7
        %v1814 = vsub.s32 0, %v1813
        %v1815 = vrot.slane %v1798, %v1814
        %v1817 = vmul.f32 %v1810, %v1815
        %v1819 = vlaneseq
        %v1820 = vshrl.u32 %v1819, 7
        %v1821 = vsub.s32 0, %v1820
        %v1822 = vrot.slane %v1799, %v1821
        %v1824 = vadd.f32 %v1817, %v1822
        %v1825 = vpack.c.bf16 %v1824, %v1824
        %s1826 = scalar_lea.vmem %s6, 192
        %v1827 = vld [vmem:[%s1826] sm:$0xff]
        %v1828 = vld [vmem:[%s1826 + $0x8] sm:$0xf]
        %v1829 = vld [vmem:[%s1826 + $0xc] sm:$0xff]
        %v1830 = vld [vmem:[%s1826 + $0x14] sm:$0xf]
        %v1831 = vld [vmem:[%s1826 + $0x18] sm:$0xff]
        %v1832 = vld [vmem:[%s1826 + $0x20] sm:$0xf]
        %v1833 = vld [vmem:[%s1826 + $0x24] sm:$0xff]
        %v1834 = vld [vmem:[%s1826 + $0x2c] sm:$0xf]
        %v1835 = vld [vmem:[%s1826 + $0x30] sm:$0xff]
        %v1836 = vld [vmem:[%s1826 + $0x38] sm:$0xf]
        %v1837 = vld [vmem:[%s1826 + $0x3c] sm:$0xff]
        %v1838 = vld [vmem:[%s1826 + $0x44] sm:$0xf]
        %v1839 = vld [vmem:[%s1826 + $0x48] sm:$0xff]
        %v1840 = vld [vmem:[%s1826 + $0x50] sm:$0xf]
        %v1841 = vld [vmem:[%s1826 + $0x54] sm:$0xff]
        %v1842 = vld [vmem:[%s1826 + $0x5c] sm:$0xf]
        %v1843 = vld [vmem:[%s1826 + $0x60] sm:$0xff]
        %v1844 = vld [vmem:[%s1826 + $0x68] sm:$0xf]
        %v1845 = vld [vmem:[%s1826 + $0x6c] sm:$0xff]
        %v1846 = vld [vmem:[%s1826 + $0x74] sm:$0xf]
        %v1847 = vld [vmem:[%s1826 + $0x78] sm:$0xff]
        %v1848 = vld [vmem:[%s1826 + $0x80] sm:$0xf]
        %v1849 = vld [vmem:[%s1826 + $0x84] sm:$0xff]
        %v1850 = vld [vmem:[%s1826 + $0x8c] sm:$0xf]
        %v1851 = vld [vmem:[%s1826 + $0x90] sm:$0xff]
        %v1852 = vld [vmem:[%s1826 + $0x98] sm:$0xf]
        %v1853 = vld [vmem:[%s1826 + $0x9c] sm:$0xff]
        %v1854 = vld [vmem:[%s1826 + $0xa4] sm:$0xf]
        %v1855 = vld [vmem:[%s1826 + $0xa8] sm:$0xff]
        %v1856 = vld [vmem:[%s1826 + $0xb0] sm:$0xf]
        %v1857 = vld [vmem:[%s1826 + $0xb4] sm:$0xff]
        %v1858 = vld [vmem:[%s1826 + $0xbc] sm:$0xf]
        %s1859 = scalar_lea.vmem %s7, 3
        %v1860 = vld [vmem:[%s1859] sm:$0x7]
        %v1862 = vlaneseq
        %v1863 = vshrl.u32 %v1862, 7
        %v1864 = vsub.s32 0, %v1863
        %v1865 = vrot.slane %v1860, %v1864
        %v1866 = vlaneseq
        %v1867 = vshrl.u32 %v1866, 7
        %v1868 = vsub.s32 1, %v1867
        %v1869 = vrot.slane %v1860, %v1868
        %v1870 = vlaneseq
        %v1871 = vshrl.u32 %v1870, 7
        %v1872 = vsub.s32 2, %v1871
        %v1873 = vrot.slane %v1860, %v1872
        %v1909 = vunpack.c.l.b16 %v1827
        %v1910 = vunpack.c.h.b16 %v1827
        %v1911 = vunpack.c.l.b16 %v1828
        %v1912 = vunpack.c.l.b16 %v1829
        %v1913 = vunpack.c.h.b16 %v1829
        %v1914 = vunpack.c.l.b16 %v1830
        %v1915 = vunpack.c.l.b16 %v1831
        %v1916 = vunpack.c.h.b16 %v1831
        %v1917 = vunpack.c.l.b16 %v1832
        %v1918 = vunpack.c.l.b16 %v1833
        %v1919 = vunpack.c.h.b16 %v1833
        %v1920 = vunpack.c.l.b16 %v1834
        %v1921 = vunpack.c.l.b16 %v1835
        %v1922 = vunpack.c.h.b16 %v1835
        %v1923 = vunpack.c.l.b16 %v1836
        %v1924 = vunpack.c.l.b16 %v1837
        %v1925 = vunpack.c.h.b16 %v1837
        %v1926 = vunpack.c.l.b16 %v1838
        %v1927 = vunpack.c.l.b16 %v1839
        %v1928 = vunpack.c.h.b16 %v1839
        %v1929 = vunpack.c.l.b16 %v1840
        %v1930 = vunpack.c.l.b16 %v1841
        %v1931 = vunpack.c.h.b16 %v1841
        %v1932 = vunpack.c.l.b16 %v1842
        %v1933 = vunpack.c.l.b16 %v1843
        %v1934 = vunpack.c.h.b16 %v1843
        %v1935 = vunpack.c.l.b16 %v1844
        %v1936 = vunpack.c.l.b16 %v1845
        %v1937 = vunpack.c.h.b16 %v1845
        %v1938 = vunpack.c.l.b16 %v1846
        %v1939 = vunpack.c.l.b16 %v1847
        %v1940 = vunpack.c.h.b16 %v1847
        %v1941 = vunpack.c.l.b16 %v1848
        %v1942 = vunpack.c.l.b16 %v1849
        %v1943 = vunpack.c.h.b16 %v1849
        %v1944 = vunpack.c.l.b16 %v1850
        %v1945 = vunpack.c.l.b16 %v1851
        %v1946 = vunpack.c.h.b16 %v1851
        %v1947 = vunpack.c.l.b16 %v1852
        %v1948 = vunpack.c.l.b16 %v1853
        %v1949 = vunpack.c.h.b16 %v1853
        %v1950 = vunpack.c.l.b16 %v1854
        %v1951 = vunpack.c.l.b16 %v1855
        %v1952 = vunpack.c.h.b16 %v1855
        %v1953 = vunpack.c.l.b16 %v1856
        %v1954 = vunpack.c.l.b16 %v1857
        %v1955 = vunpack.c.h.b16 %v1857
        %v1956 = vunpack.c.l.b16 %v1858
        %v1957 = vpack.c.b16 %v1912, %v1909
        %v1958 = vpack.c.b16 %v1913, %v1910
        %v1959 = vpack.c.b16 %v1914, %v1911
        %v1960 = vpack.c.b16 %v1918, %v1915
        %v1961 = vpack.c.b16 %v1919, %v1916
        %v1962 = vpack.c.b16 %v1920, %v1917
        %v1963 = vpack.c.b16 %v1924, %v1921
        %v1964 = vpack.c.b16 %v1925, %v1922
        %v1965 = vpack.c.b16 %v1926, %v1923
        %v1966 = vpack.c.b16 %v1930, %v1927
        %v1967 = vpack.c.b16 %v1931, %v1928
        %v1968 = vpack.c.b16 %v1932, %v1929
        %v1969 = vpack.c.b16 %v1936, %v1933
        %v1970 = vpack.c.b16 %v1937, %v1934
        %v1971 = vpack.c.b16 %v1938, %v1935
        %v1972 = vpack.c.b16 %v1942, %v1939
        %v1973 = vpack.c.b16 %v1943, %v1940
        %v1974 = vpack.c.b16 %v1944, %v1941
        %v1975 = vpack.c.b16 %v1948, %v1945
        %v1976 = vpack.c.b16 %v1949, %v1946
        %v1977 = vpack.c.b16 %v1950, %v1947
        %v1978 = vpack.c.b16 %v1954, %v1951
        %v1979 = vpack.c.b16 %v1955, %v1952
        %v1980 = vpack.c.b16 %v1956, %v1953
        %2005 = vmatprep.subr.bf16.mxu0 %v1979
        %2006 = vmatpush1.bf16.msra.mxu0 %v1978
        %2007 = vmatprep.subr.bf16.mxu0 %v1976
        %2008 = vmatpush1.bf16.msra.mxu0 %v1975
        %2009 = vmatprep.subr.bf16.mxu0 %v1973
        %2010 = vmatpush1.bf16.msra.mxu0 %v1972
        %2011 = vmatprep.subr.bf16.mxu0 %v1970
        %2012 = vmatpush1.bf16.msra.mxu0 %v1969
        %2013 = vmatprep.subr.bf16.mxu0 %v1967
        %2014 = vmatpush1.bf16.msra.mxu0 %v1966
        %2015 = vmatprep.subr.bf16.mxu0 %v1964
        %2016 = vmatpush1.bf16.msra.mxu0 %v1963
        %2017 = vmatprep.subr.bf16.mxu0 %v1961
        %2018 = vmatpush1.bf16.msra.mxu0 %v1960
        %2019 = vmatprep.subr.bf16.mxu0 %v1958
        %2020 = vmatpush1.bf16.msra.mxu0 %v1957
        %2021 = vmatprep.subr.bf16.mxu0 0
        %2022 = vmatpush2.bf16.msra.mxu0 0
        %2023 = vmatprep.subr.bf16.mxu0 0
        %2024 = vmatpush2.bf16.msra.mxu0 0
        %2025 = vmatprep.subr.bf16.mxu0 0
        %2026 = vmatpush2.bf16.msra.mxu0 0
        %2027 = vmatprep.subr.bf16.mxu0 0
        %2028 = vmatpush2.bf16.msra.mxu0 0
        %2029 = vmatprep.subr.bf16.mxu0 0
        %2030 = vmatpush2.bf16.msra.mxu0 0
        %2031 = vmatprep.subr.bf16.mxu0 0
        %2032 = vmatpush2.bf16.msra.mxu0 0
        %2033 = vmatprep.subr.bf16.mxu0 0
        %2034 = vmatpush2.bf16.msra.mxu0 0
        %2035 = vmatprep.subr.bf16.mxu0 0
        %2036 = vmatpush2.bf16.msra.mxu0 0
        %2037 = vmatprep.mubr.bf16.mxu0 0
        %2038 = vmatmul.mubr.bf16.gmra.mxu0 %v1825
        %v2039 = vpop.f32.mrf.mxu0
        %v2040 = vadd.f32 %v1865, %v2039
        %v2041 = vpop.f32.mrf.mxu0
        %v2042 = vadd.f32 %v1869, %v2041
        %v2043 = vpop.f32.mrf.mxu0
        %v2044 = vpop.f32.mrf.mxu0
        %2045 = vdwg.mxu0
        %2046 = vmatprep.subr.bf16.mxu0 0
        %2047 = vmatpush1.bf16.msra.mxu0 %v1980
        %2048 = vmatprep.subr.bf16.mxu0 0
        %2049 = vmatpush1.bf16.msra.mxu0 %v1977
        %2050 = vmatprep.subr.bf16.mxu0 0
        %2051 = vmatpush1.bf16.msra.mxu0 %v1974
        %2052 = vmatprep.subr.bf16.mxu0 0
        %2053 = vmatpush1.bf16.msra.mxu0 %v1971
        %2054 = vmatprep.subr.bf16.mxu0 0
        %2055 = vmatpush1.bf16.msra.mxu0 %v1968
        %2056 = vmatprep.subr.bf16.mxu0 0
        %2057 = vmatpush1.bf16.msra.mxu0 %v1965
        %2058 = vmatprep.subr.bf16.mxu0 0
        %2059 = vmatpush1.bf16.msra.mxu0 %v1962
        %2060 = vmatprep.subr.bf16.mxu0 0
        %2061 = vmatpush1.bf16.msra.mxu0 %v1959
        %2062 = vmatprep.subr.bf16.mxu0 0
        %2063 = vmatpush2.bf16.msra.mxu0 0
        %2064 = vmatprep.subr.bf16.mxu0 0
        %2065 = vmatpush2.bf16.msra.mxu0 0
        %2066 = vmatprep.subr.bf16.mxu0 0
        %2067 = vmatpush2.bf16.msra.mxu0 0
        %2068 = vmatprep.subr.bf16.mxu0 0
        %2069 = vmatpush2.bf16.msra.mxu0 0
        %2070 = vmatprep.subr.bf16.mxu0 0
        %2071 = vmatpush2.bf16.msra.mxu0 0
        %2072 = vmatprep.subr.bf16.mxu0 0
        %2073 = vmatpush2.bf16.msra.mxu0 0
        %2074 = vmatprep.subr.bf16.mxu0 0
        %2075 = vmatpush2.bf16.msra.mxu0 0
        %2076 = vmatprep.subr.bf16.mxu0 0
        %2077 = vmatpush2.bf16.msra.mxu0 0
        %2078 = vmatprep.mubr.bf16.mxu0 0
        %2079 = vmatmul.mubr.bf16.gmra.mxu0 %v1825
        %v2080 = vpop.f32.mrf.mxu0
        %v2081 = vadd.f32 %v1873, %v2080
        %v2082 = vpop.f32.mrf.mxu0
        %v2083 = vpop.f32.mrf.mxu0
        %v2084 = vpop.f32.mrf.mxu0
        %2085 = vdwg.mxu0
        %v2086 = vpack.c.bf16 %v2040, %v2040
        %v2087 = vpack.c.bf16 %v2042, %v2042
        %v2088 = vpack.c.bf16 %v2081, %v2081
        %v2090 = vsel %vm1079, %v2086, 0
        %v2093 = vsel %vm1079, %v2087, 0
        %2095 = vmatprep.subr.bf16.mxu0 0
        %2096 = vmatpush1.bf16.xpose.msra.mxu0 0
        %2097 = vmatprep.subr.bf16.mxu0 0
        %2098 = vmatpush1.bf16.xpose.msra.mxu0 0
        %2099 = vmatprep.subr.bf16.mxu0 0
        %2100 = vmatpush1.bf16.xpose.msra.mxu0 0
        %2101 = vmatprep.subr.bf16.mxu0 0
        %2102 = vmatpush1.bf16.xpose.msra.mxu0 0
        %2103 = vmatprep.subr.bf16.mxu0 0
        %2104 = vmatpush1.bf16.xpose.msra.mxu0 0
        %2105 = vmatprep.subr.bf16.mxu0 0
        %2106 = vmatpush1.bf16.xpose.msra.mxu0 0
        %2107 = vmatprep.subr.bf16.mxu0 0
        %2108 = vmatpush1.bf16.xpose.msra.mxu0 0
        %2109 = vmatprep.subr.bf16.mxu0 0
        %2110 = vmatpush1.bf16.xpose.msra.mxu0 %v2093
        %2111 = vmatprep.subr.bf16.mxu0 0
        %2112 = vmatpush2.bf16.xpose.msra.mxu0 0
        %2113 = vmatprep.subr.bf16.mxu0 0
        %2114 = vmatpush2.bf16.xpose.msra.mxu0 0
        %2115 = vmatprep.subr.bf16.mxu0 0
        %2116 = vmatpush2.bf16.xpose.msra.mxu0 0
        %2117 = vmatprep.subr.bf16.mxu0 0
        %2118 = vmatpush2.bf16.xpose.msra.mxu0 0
        %2119 = vmatprep.subr.bf16.mxu0 0
        %2120 = vmatpush2.bf16.xpose.msra.mxu0 0
        %2121 = vmatprep.subr.bf16.mxu0 0
        %2122 = vmatpush2.bf16.xpose.msra.mxu0 0
        %2123 = vmatprep.subr.bf16.mxu0 0
        %2124 = vmatpush2.bf16.xpose.msra.mxu0 0
        %2125 = vmatprep.subr.bf16.mxu0 0
        %2126 = vmatpush2.bf16.xpose.msra.mxu0 0
        %2127 = vmatprep.mubr.bf16.mxu0 0
        %2128 = vmatmul.mubr.bf16.gmra.mxu0 %v2090
        %v2129 = vpop.f32.mrf.mxu0
        %v2130 = vadd.f32 0.0, %v2129
        %v2131 = vpop.f32.mrf.mxu0
        %v2132 = vpop.f32.mrf.mxu0
        %v2133 = vpop.f32.mrf.mxu0
        %2134 = vdwg.mxu0
        %v2135 = vmul.f32 %v2130, 0.125
        %v2136 = vadd.f32 %v2135, %v1130
        %v2137 = vsel %vm1132, %v2136, -inf
        %2138 = vmax.xlane.f32.xlu0 %v2137
        %v2139 = vpop.xlane.xlu0 %2138
        %v2140 = vsub.f32 %v2136, %v2139
        %v2141 = vmul.f32 %v2140, 1.442695
        %v2142 = vpow.pop %v2141
        %v2143 = vsel %vm1132, %v2142, 0.0
        %2144 = vadd.xlane.f32.xlu0 %v2143
        %v2145 = vpop.xlane.xlu0 %2144
        %v2146 = vrcp.pop %v2145
        %v2147 = vmul.f32 %v2142, %v2146
        %v2148 = vpack.c.bf16 %v2147, %v2147
        %v2150 = vsel %vm1132, %v2148, 0
        %v2153 = vsel %vm1148, %v2088, 0
        %2155 = vmatprep.subr.bf16.mxu0 0
        %2156 = vmatpush1.bf16.msra.mxu0 0
        %2157 = vmatprep.subr.bf16.mxu0 0
        %2158 = vmatpush1.bf16.msra.mxu0 0
        %2159 = vmatprep.subr.bf16.mxu0 0
        %2160 = vmatpush1.bf16.msra.mxu0 0
        %2161 = vmatprep.subr.bf16.mxu0 0
        %2162 = vmatpush1.bf16.msra.mxu0 0
        %2163 = vmatprep.subr.bf16.mxu0 0
        %2164 = vmatpush1.bf16.msra.mxu0 0
        %2165 = vmatprep.subr.bf16.mxu0 0
        %2166 = vmatpush1.bf16.msra.mxu0 0
        %2167 = vmatprep.subr.bf16.mxu0 0
        %2168 = vmatpush1.bf16.msra.mxu0 0
        %2169 = vmatprep.subr.bf16.mxu0 0
        %2170 = vmatpush1.bf16.msra.mxu0 %v2153
        %2171 = vmatprep.subr.bf16.mxu0 0
        %2172 = vmatpush2.bf16.msra.mxu0 0
        %2173 = vmatprep.subr.bf16.mxu0 0
        %2174 = vmatpush2.bf16.msra.mxu0 0
        %2175 = vmatprep.subr.bf16.mxu0 0
        %2176 = vmatpush2.bf16.msra.mxu0 0
        %2177 = vmatprep.subr.bf16.mxu0 0
        %2178 = vmatpush2.bf16.msra.mxu0 0
        %2179 = vmatprep.subr.bf16.mxu0 0
        %2180 = vmatpush2.bf16.msra.mxu0 0
        %2181 = vmatprep.subr.bf16.mxu0 0
        %2182 = vmatpush2.bf16.msra.mxu0 0
        %2183 = vmatprep.subr.bf16.mxu0 0
        %2184 = vmatpush2.bf16.msra.mxu0 0
        %2185 = vmatprep.subr.bf16.mxu0 0
        %2186 = vmatpush2.bf16.msra.mxu0 0
        %2187 = vmatprep.mubr.bf16.mxu0 0
        %2188 = vmatmul.mubr.bf16.gmra.mxu0 %v2150
        %v2189 = vpop.f32.mrf.mxu0
        %v2190 = vadd.f32 0.0, %v2189
        %v2191 = vpop.f32.mrf.mxu0
        %v2192 = vpop.f32.mrf.mxu0
        %v2193 = vpop.f32.mrf.mxu0
        %2194 = vdwg.mxu0
        %2196 = vrot.lane.b32.xlu0 %v2086, 64
        %v2197 = vpop.permute.xlu0 %2196
        %2199 = vrot.lane.b32.xlu0 %v2087, 64
        %v2200 = vpop.permute.xlu0 %2199
        %v2202 = vsel %vm1079, %v2197, 0
        %v2205 = vsel %vm1079, %v2200, 0
        %2207 = vmatprep.subr.bf16.mxu0 0
        %2208 = vmatpush1.bf16.xpose.msra.mxu0 0
        %2209 = vmatprep.subr.bf16.mxu0 0
        %2210 = vmatpush1.bf16.xpose.msra.mxu0 0
        %2211 = vmatprep.subr.bf16.mxu0 0
        %2212 = vmatpush1.bf16.xpose.msra.mxu0 0
        %2213 = vmatprep.subr.bf16.mxu0 0
        %2214 = vmatpush1.bf16.xpose.msra.mxu0 0
        %2215 = vmatprep.subr.bf16.mxu0 0
        %2216 = vmatpush1.bf16.xpose.msra.mxu0 0
        %2217 = vmatprep.subr.bf16.mxu0 0
        %2218 = vmatpush1.bf16.xpose.msra.mxu0 0
        %2219 = vmatprep.subr.bf16.mxu0 0
        %2220 = vmatpush1.bf16.xpose.msra.mxu0 0
        %2221 = vmatprep.subr.bf16.mxu0 0
        %2222 = vmatpush1.bf16.xpose.msra.mxu0 %v2205
        %2223 = vmatprep.subr.bf16.mxu0 0
        %2224 = vmatpush2.bf16.xpose.msra.mxu0 0
        %2225 = vmatprep.subr.bf16.mxu0 0
        %2226 = vmatpush2.bf16.xpose.msra.mxu0 0
        %2227 = vmatprep.subr.bf16.mxu0 0
        %2228 = vmatpush2.bf16.xpose.msra.mxu0 0
        %2229 = vmatprep.subr.bf16.mxu0 0
        %2230 = vmatpush2.bf16.xpose.msra.mxu0 0
        %2231 = vmatprep.subr.bf16.mxu0 0
        %2232 = vmatpush2.bf16.xpose.msra.mxu0 0
        %2233 = vmatprep.subr.bf16.mxu0 0
        %2234 = vmatpush2.bf16.xpose.msra.mxu0 0
        %2235 = vmatprep.subr.bf16.mxu0 0
        %2236 = vmatpush2.bf16.xpose.msra.mxu0 0
        %2237 = vmatprep.subr.bf16.mxu0 0
        %2238 = vmatpush2.bf16.xpose.msra.mxu0 0
        %2239 = vmatprep.mubr.bf16.mxu0 0
        %2240 = vmatmul.mubr.bf16.gmra.mxu0 %v2202
        %v2241 = vpop.f32.mrf.mxu0
        %v2242 = vadd.f32 0.0, %v2241
        %v2243 = vpop.f32.mrf.mxu0
        %v2244 = vpop.f32.mrf.mxu0
        %v2245 = vpop.f32.mrf.mxu0
        %2246 = vdwg.mxu0
        %v2247 = vmul.f32 %v2242, 0.125
        %v2248 = vadd.f32 %v2247, %v1130
        %v2249 = vsel %vm1132, %v2248, -inf
        %2250 = vmax.xlane.f32.xlu0 %v2249
        %v2251 = vpop.xlane.xlu0 %2250
        %v2252 = vsub.f32 %v2248, %v2251
        %v2253 = vmul.f32 %v2252, 1.442695
        %v2254 = vpow.pop %v2253
        %v2255 = vsel %vm1132, %v2254, 0.0
        %2256 = vadd.xlane.f32.xlu0 %v2255
        %v2257 = vpop.xlane.xlu0 %2256
        %v2258 = vrcp.pop %v2257
        %v2259 = vmul.f32 %v2254, %v2258
        %v2260 = vpack.c.bf16 %v2259, %v2259
        %2262 = vrot.lane.b32.xlu0 %v2088, 64
        %v2263 = vpop.permute.xlu0 %2262
        %v2265 = vsel %vm1132, %v2260, 0
        %v2268 = vsel %vm1148, %v2263, 0
        %2270 = vmatprep.subr.bf16.mxu0 0
        %2271 = vmatpush1.bf16.msra.mxu0 0
        %2272 = vmatprep.subr.bf16.mxu0 0
        %2273 = vmatpush1.bf16.msra.mxu0 0
        %2274 = vmatprep.subr.bf16.mxu0 0
        %2275 = vmatpush1.bf16.msra.mxu0 0
        %2276 = vmatprep.subr.bf16.mxu0 0
        %2277 = vmatpush1.bf16.msra.mxu0 0
        %2278 = vmatprep.subr.bf16.mxu0 0
        %2279 = vmatpush1.bf16.msra.mxu0 0
        %2280 = vmatprep.subr.bf16.mxu0 0
        %2281 = vmatpush1.bf16.msra.mxu0 0
        %2282 = vmatprep.subr.bf16.mxu0 0
        %2283 = vmatpush1.bf16.msra.mxu0 0
        %2284 = vmatprep.subr.bf16.mxu0 0
        %2285 = vmatpush1.bf16.msra.mxu0 %v2268
        %2286 = vmatprep.subr.bf16.mxu0 0
        %2287 = vmatpush2.bf16.msra.mxu0 0
        %2288 = vmatprep.subr.bf16.mxu0 0
        %2289 = vmatpush2.bf16.msra.mxu0 0
        %2290 = vmatprep.subr.bf16.mxu0 0
        %2291 = vmatpush2.bf16.msra.mxu0 0
        %2292 = vmatprep.subr.bf16.mxu0 0
        %2293 = vmatpush2.bf16.msra.mxu0 0
        %2294 = vmatprep.subr.bf16.mxu0 0
        %2295 = vmatpush2.bf16.msra.mxu0 0
        %2296 = vmatprep.subr.bf16.mxu0 0
        %2297 = vmatpush2.bf16.msra.mxu0 0
        %2298 = vmatprep.subr.bf16.mxu0 0
        %2299 = vmatpush2.bf16.msra.mxu0 0
        %2300 = vmatprep.subr.bf16.mxu0 0
        %2301 = vmatpush2.bf16.msra.mxu0 0
        %2302 = vmatprep.mubr.bf16.mxu0 0
        %2303 = vmatmul.mubr.bf16.gmra.mxu0 %v2265
        %v2304 = vpop.f32.mrf.mxu0
        %v2305 = vadd.f32 0.0, %v2304
        %v2306 = vpop.f32.mrf.mxu0
        %v2307 = vpop.f32.mrf.mxu0
        %v2308 = vpop.f32.mrf.mxu0
        %2309 = vdwg.mxu0
        %2311 = vrot.lane.b32.xlu0 %v2305, 64
        %v2312 = vpop.permute.xlu0 %2311
        %v2314 = vsel %vm1079, %v2190, %v2312
        %v2315 = vpack.c.bf16 %v2314, %v2314
        %s2316 = scalar_lea.vmem [#allocation9], 64
        %v2317 = vld [vmem:[%s2316] sm:$0xf]
        %v2318 = vld [vmem:[%s2316 + $0x4] sm:$0xf]
        %v2319 = vld [vmem:[%s2316 + $0x8] sm:$0xf]
        %v2320 = vld [vmem:[%s2316 + $0xc] sm:$0xf]
        %v2321 = vld [vmem:[%s2316 + $0x10] sm:$0xf]
        %v2322 = vld [vmem:[%s2316 + $0x14] sm:$0xf]
        %v2323 = vld [vmem:[%s2316 + $0x18] sm:$0xf]
        %v2324 = vld [vmem:[%s2316 + $0x1c] sm:$0xf]
        %v2325 = vld [vmem:[%s2316 + $0x20] sm:$0xf]
        %v2326 = vld [vmem:[%s2316 + $0x24] sm:$0xf]
        %v2327 = vld [vmem:[%s2316 + $0x28] sm:$0xf]
        %v2328 = vld [vmem:[%s2316 + $0x2c] sm:$0xf]
        %v2329 = vld [vmem:[%s2316 + $0x30] sm:$0xf]
        %v2330 = vld [vmem:[%s2316 + $0x34] sm:$0xf]
        %v2331 = vld [vmem:[%s2316 + $0x38] sm:$0xf]
        %v2332 = vld [vmem:[%s2316 + $0x3c] sm:$0xf]
        %s2333 = scalar_lea.vmem %s9, 1
        %v2334 = vld [vmem:[%s2333] sm:$0x1]
        %v2336 = vlaneseq
        %v2337 = vshrl.u32 %v2336, 7
        %v2338 = vsub.s32 0, %v2337
        %v2339 = vrot.slane %v2334, %v2338
        %v2357 = vunpack.c.l.b16 %v2317
        %v2358 = vunpack.c.l.b16 %v2318
        %v2359 = vunpack.c.l.b16 %v2319
        %v2360 = vunpack.c.l.b16 %v2320
        %v2361 = vunpack.c.l.b16 %v2321
        %v2362 = vunpack.c.l.b16 %v2322
        %v2363 = vunpack.c.l.b16 %v2323
        %v2364 = vunpack.c.l.b16 %v2324
        %v2365 = vunpack.c.l.b16 %v2325
        %v2366 = vunpack.c.l.b16 %v2326
        %v2367 = vunpack.c.l.b16 %v2327
        %v2368 = vunpack.c.l.b16 %v2328
        %v2369 = vunpack.c.l.b16 %v2329
        %v2370 = vunpack.c.l.b16 %v2330
        %v2371 = vunpack.c.l.b16 %v2331
        %v2372 = vunpack.c.l.b16 %v2332
        %v2373 = vpack.c.b16 %v2358, %v2357
        %v2374 = vpack.c.b16 %v2360, %v2359
        %v2375 = vpack.c.b16 %v2362, %v2361
        %v2376 = vpack.c.b16 %v2364, %v2363
        %v2377 = vpack.c.b16 %v2366, %v2365
        %v2378 = vpack.c.b16 %v2368, %v2367
        %v2379 = vpack.c.b16 %v2370, %v2369
        %v2380 = vpack.c.b16 %v2372, %v2371
        %2389 = vmatprep.subr.bf16.mxu0 0
        %2390 = vmatpush1.bf16.msra.mxu0 %v2380
        %2391 = vmatprep.subr.bf16.mxu0 0
        %2392 = vmatpush1.bf16.msra.mxu0 %v2379
        %2393 = vmatprep.subr.bf16.mxu0 0
        %2394 = vmatpush1.bf16.msra.mxu0 %v2378
        %2395 = vmatprep.subr.bf16.mxu0 0
        %2396 = vmatpush1.bf16.msra.mxu0 %v2377
        %2397 = vmatprep.subr.bf16.mxu0 0
        %2398 = vmatpush1.bf16.msra.mxu0 %v2376
        %2399 = vmatprep.subr.bf16.mxu0 0
        %2400 = vmatpush1.bf16.msra.mxu0 %v2375
        %2401 = vmatprep.subr.bf16.mxu0 0
        %2402 = vmatpush1.bf16.msra.mxu0 %v2374
        %2403 = vmatprep.subr.bf16.mxu0 0
        %2404 = vmatpush1.bf16.msra.mxu0 %v2373
        %2405 = vmatprep.subr.bf16.mxu0 0
        %2406 = vmatpush2.bf16.msra.mxu0 0
        %2407 = vmatprep.subr.bf16.mxu0 0
        %2408 = vmatpush2.bf16.msra.mxu0 0
        %2409 = vmatprep.subr.bf16.mxu0 0
        %2410 = vmatpush2.bf16.msra.mxu0 0
        %2411 = vmatprep.subr.bf16.mxu0 0
        %2412 = vmatpush2.bf16.msra.mxu0 0
        %2413 = vmatprep.subr.bf16.mxu0 0
        %2414 = vmatpush2.bf16.msra.mxu0 0
        %2415 = vmatprep.subr.bf16.mxu0 0
        %2416 = vmatpush2.bf16.msra.mxu0 0
        %2417 = vmatprep.subr.bf16.mxu0 0
        %2418 = vmatpush2.bf16.msra.mxu0 0
        %2419 = vmatprep.subr.bf16.mxu0 0
        %2420 = vmatpush2.bf16.msra.mxu0 0
        %2421 = vmatprep.mubr.bf16.mxu0 0
        %2422 = vmatmul.mubr.bf16.gmra.mxu0 %v2315
        %v2423 = vpop.f32.mrf.mxu0
        %v2424 = vadd.f32 %v2339, %v2423
        %v2425 = vpop.f32.mrf.mxu0
        %v2426 = vpop.f32.mrf.mxu0
        %v2427 = vpop.f32.mrf.mxu0
        %2428 = vdwg.mxu0
        %v2429 = vadd.f32 %v2424, %v1824
        %s2430 = scalar_lea.vmem %s10, 1
        %v2431 = vld [vmem:[%s2430] sm:$0x1]
        %s2432 = scalar_lea.vmem %s11, 1
        %v2433 = vld [vmem:[%s2432] sm:$0x1]
        %2434 = vadd.xlane.f32.xlu0 %v2429
        %v2435 = vpop.xlane.xlu0 %2434
        %v2436 = vmul.f32 %v2435, %v791
        %v2437 = vsub.f32 %v2429, %v2436
        %v2438 = vmul.f32 %v2437, %v2437
        %2439 = vadd.xlane.f32.xlu0 %v2438
        %v2440 = vpop.xlane.xlu0 %2439
        %v2441 = vmul.f32 %v2440, %v791
        %v2442 = vadd.f32 %v2441, 1e-12
        %v2443 = vrsqrt.pop %v2442
        %v2444 = vmul.f32 %v2437, %v2443
        %v2446 = vlaneseq
        %v2447 = vshrl.u32 %v2446, 7
        %v2448 = vsub.s32 0, %v2447
        %v2449 = vrot.slane %v2431, %v2448
        %v2451 = vmul.f32 %v2444, %v2449
        %v2453 = vlaneseq
        %v2454 = vshrl.u32 %v2453, 7
        %v2455 = vsub.s32 0, %v2454
        %v2456 = vrot.slane %v2433, %v2455
        %v2458 = vadd.f32 %v2451, %v2456
        %v2459 = vpack.c.bf16 %v2458, %v2458
        %s2460 = scalar_lea.vmem [#allocation11], 128
        %v2461 = vld [vmem:[%s2460] sm:$0xff]
        %v2462 = vld [vmem:[%s2460 + $0x8] sm:$0xff]
        %v2463 = vld [vmem:[%s2460 + $0x10] sm:$0xff]
        %v2464 = vld [vmem:[%s2460 + $0x18] sm:$0xff]
        %v2465 = vld [vmem:[%s2460 + $0x20] sm:$0xff]
        %v2466 = vld [vmem:[%s2460 + $0x28] sm:$0xff]
        %v2467 = vld [vmem:[%s2460 + $0x30] sm:$0xff]
        %v2468 = vld [vmem:[%s2460 + $0x38] sm:$0xff]
        %v2469 = vld [vmem:[%s2460 + $0x40] sm:$0xff]
        %v2470 = vld [vmem:[%s2460 + $0x48] sm:$0xff]
        %v2471 = vld [vmem:[%s2460 + $0x50] sm:$0xff]
        %v2472 = vld [vmem:[%s2460 + $0x58] sm:$0xff]
        %v2473 = vld [vmem:[%s2460 + $0x60] sm:$0xff]
        %v2474 = vld [vmem:[%s2460 + $0x68] sm:$0xff]
        %v2475 = vld [vmem:[%s2460 + $0x70] sm:$0xff]
        %v2476 = vld [vmem:[%s2460 + $0x78] sm:$0xff]
        %s2477 = scalar_lea.vmem %s13, 2
        %v2478 = vld [vmem:[%s2477] sm:$0x3]
        %v2480 = vlaneseq
        %v2481 = vshrl.u32 %v2480, 7
        %v2482 = vsub.s32 0, %v2481
        %v2483 = vrot.slane %v2478, %v2482
        %v2484 = vlaneseq
        %v2485 = vshrl.u32 %v2484, 7
        %v2486 = vsub.s32 1, %v2485
        %v2487 = vrot.slane %v2478, %v2486
        %v2506 = vunpack.c.l.b16 %v2461
        %v2507 = vunpack.c.h.b16 %v2461
        %v2508 = vunpack.c.l.b16 %v2462
        %v2509 = vunpack.c.h.b16 %v2462
        %v2510 = vunpack.c.l.b16 %v2463
        %v2511 = vunpack.c.h.b16 %v2463
        %v2512 = vunpack.c.l.b16 %v2464
        %v2513 = vunpack.c.h.b16 %v2464
        %v2514 = vunpack.c.l.b16 %v2465
        %v2515 = vunpack.c.h.b16 %v2465
        %v2516 = vunpack.c.l.b16 %v2466
        %v2517 = vunpack.c.h.b16 %v2466
        %v2518 = vunpack.c.l.b16 %v2467
        %v2519 = vunpack.c.h.b16 %v2467
        %v2520 = vunpack.c.l.b16 %v2468
        %v2521 = vunpack.c.h.b16 %v2468
        %v2522 = vunpack.c.l.b16 %v2469
        %v2523 = vunpack.c.h.b16 %v2469
        %v2524 = vunpack.c.l.b16 %v2470
        %v2525 = vunpack.c.h.b16 %v2470
        %v2526 = vunpack.c.l.b16 %v2471
        %v2527 = vunpack.c.h.b16 %v2471
        %v2528 = vunpack.c.l.b16 %v2472
        %v2529 = vunpack.c.h.b16 %v2472
        %v2530 = vunpack.c.l.b16 %v2473
        %v2531 = vunpack.c.h.b16 %v2473
        %v2532 = vunpack.c.l.b16 %v2474
        %v2533 = vunpack.c.h.b16 %v2474
        %v2534 = vunpack.c.l.b16 %v2475
        %v2535 = vunpack.c.h.b16 %v2475
        %v2536 = vunpack.c.l.b16 %v2476
        %v2537 = vunpack.c.h.b16 %v2476
        %v2538 = vpack.c.b16 %v2508, %v2506
        %v2539 = vpack.c.b16 %v2509, %v2507
        %v2540 = vpack.c.b16 %v2512, %v2510
        %v2541 = vpack.c.b16 %v2513, %v2511
        %v2542 = vpack.c.b16 %v2516, %v2514
        %v2543 = vpack.c.b16 %v2517, %v2515
        %v2544 = vpack.c.b16 %v2520, %v2518
        %v2545 = vpack.c.b16 %v2521, %v2519
        %v2546 = vpack.c.b16 %v2524, %v2522
        %v2547 = vpack.c.b16 %v2525, %v2523
        %v2548 = vpack.c.b16 %v2528, %v2526
        %v2549 = vpack.c.b16 %v2529, %v2527
        %v2550 = vpack.c.b16 %v2532, %v2530
        %v2551 = vpack.c.b16 %v2533, %v2531
        %v2552 = vpack.c.b16 %v2536, %v2534
        %v2553 = vpack.c.b16 %v2537, %v2535
        %2570 = vmatprep.subr.bf16.mxu0 %v2553
        %2571 = vmatpush1.bf16.msra.mxu0 %v2552
        %2572 = vmatprep.subr.bf16.mxu0 %v2551
        %2573 = vmatpush1.bf16.msra.mxu0 %v2550
        %2574 = vmatprep.subr.bf16.mxu0 %v2549
        %2575 = vmatpush1.bf16.msra.mxu0 %v2548
        %2576 = vmatprep.subr.bf16.mxu0 %v2547
        %2577 = vmatpush1.bf16.msra.mxu0 %v2546
        %2578 = vmatprep.subr.bf16.mxu0 %v2545
        %2579 = vmatpush1.bf16.msra.mxu0 %v2544
        %2580 = vmatprep.subr.bf16.mxu0 %v2543
        %2581 = vmatpush1.bf16.msra.mxu0 %v2542
        %2582 = vmatprep.subr.bf16.mxu0 %v2541
        %2583 = vmatpush1.bf16.msra.mxu0 %v2540
        %2584 = vmatprep.subr.bf16.mxu0 %v2539
        %2585 = vmatpush1.bf16.msra.mxu0 %v2538
        %2586 = vmatprep.subr.bf16.mxu0 0
        %2587 = vmatpush2.bf16.msra.mxu0 0
        %2588 = vmatprep.subr.bf16.mxu0 0
        %2589 = vmatpush2.bf16.msra.mxu0 0
        %2590 = vmatprep.subr.bf16.mxu0 0
        %2591 = vmatpush2.bf16.msra.mxu0 0
        %2592 = vmatprep.subr.bf16.mxu0 0
        %2593 = vmatpush2.bf16.msra.mxu0 0
        %2594 = vmatprep.subr.bf16.mxu0 0
        %2595 = vmatpush2.bf16.msra.mxu0 0
        %2596 = vmatprep.subr.bf16.mxu0 0
        %2597 = vmatpush2.bf16.msra.mxu0 0
        %2598 = vmatprep.subr.bf16.mxu0 0
        %2599 = vmatpush2.bf16.msra.mxu0 0
        %2600 = vmatprep.subr.bf16.mxu0 0
        %2601 = vmatpush2.bf16.msra.mxu0 0
        %2602 = vmatprep.mubr.bf16.mxu0 0
        %2603 = vmatmul.mubr.bf16.gmra.mxu0 %v2459
        %v2604 = vpop.f32.mrf.mxu0
        %v2605 = vadd.f32 %v2483, %v2604
        %v2606 = vpop.f32.mrf.mxu0
        %v2607 = vadd.f32 %v2487, %v2606
        %v2608 = vpop.f32.mrf.mxu0
        %v2609 = vpop.f32.mrf.mxu0
        %2610 = vdwg.mxu0
        %v2611 = vmul.f32 %v2605, 0.5
        %v2612 = vmul.f32 %v2607, 0.5
        %v2613 = vmul.f32 %v2605, 0.044715
        %v2614 = vmul.f32 %v2607, 0.044715
        %v2615 = vmul.f32 %v2613, %v2605
        %v2616 = vmul.f32 %v2614, %v2607
        %v2617 = vmul.f32 %v2615, %v2605
        %v2618 = vmul.f32 %v2616, %v2607
        %v2619 = vadd.f32 %v2605, %v2617
        %v2620 = vadd.f32 %v2607, %v2618
        %v2621 = vmul.f32 %v2619, 0.7978846
        %v2622 = vmul.f32 %v2620, 0.7978846
        %v2623 = vtanh.pop %v2621
        %v2624 = vtanh.pop %v2622
        %v2625 = vadd.f32 %v2623, 1.0
        %v2626 = vadd.f32 %v2624, 1.0
        %v2627 = vmul.f32 %v2611, %v2625
        %v2628 = vmul.f32 %v2612, %v2626
        %v2629 = vpack.c.bf16 %v2627, %v2627
        %v2630 = vpack.c.bf16 %v2628, %v2628
        %s2631 = scalar_lea.vmem [#allocation12], 128
        %v2632 = vld [vmem:[%s2631] sm:$0xf]
        %v2633 = vld [vmem:[%s2631 + $0x4] sm:$0xf]
        %v2634 = vld [vmem:[%s2631 + $0x8] sm:$0xf]
        %v2635 = vld [vmem:[%s2631 + $0xc] sm:$0xf]
        %v2636 = vld [vmem:[%s2631 + $0x10] sm:$0xf]
        %v2637 = vld [vmem:[%s2631 + $0x14] sm:$0xf]
        %v2638 = vld [vmem:[%s2631 + $0x18] sm:$0xf]
        %v2639 = vld [vmem:[%s2631 + $0x1c] sm:$0xf]
        %v2640 = vld [vmem:[%s2631 + $0x20] sm:$0xf]
        %v2641 = vld [vmem:[%s2631 + $0x24] sm:$0xf]
        %v2642 = vld [vmem:[%s2631 + $0x28] sm:$0xf]
        %v2643 = vld [vmem:[%s2631 + $0x2c] sm:$0xf]
        %v2644 = vld [vmem:[%s2631 + $0x30] sm:$0xf]
        %v2645 = vld [vmem:[%s2631 + $0x34] sm:$0xf]
        %v2646 = vld [vmem:[%s2631 + $0x38] sm:$0xf]
        %v2647 = vld [vmem:[%s2631 + $0x3c] sm:$0xf]
        %v2648 = vld [vmem:[%s2631 + $0x40] sm:$0xf]
        %v2649 = vld [vmem:[%s2631 + $0x44] sm:$0xf]
        %v2650 = vld [vmem:[%s2631 + $0x48] sm:$0xf]
        %v2651 = vld [vmem:[%s2631 + $0x4c] sm:$0xf]
        %v2652 = vld [vmem:[%s2631 + $0x50] sm:$0xf]
        %v2653 = vld [vmem:[%s2631 + $0x54] sm:$0xf]
        %v2654 = vld [vmem:[%s2631 + $0x58] sm:$0xf]
        %v2655 = vld [vmem:[%s2631 + $0x5c] sm:$0xf]
        %v2656 = vld [vmem:[%s2631 + $0x60] sm:$0xf]
        %v2657 = vld [vmem:[%s2631 + $0x64] sm:$0xf]
        %v2658 = vld [vmem:[%s2631 + $0x68] sm:$0xf]
        %v2659 = vld [vmem:[%s2631 + $0x6c] sm:$0xf]
        %v2660 = vld [vmem:[%s2631 + $0x70] sm:$0xf]
        %v2661 = vld [vmem:[%s2631 + $0x74] sm:$0xf]
        %v2662 = vld [vmem:[%s2631 + $0x78] sm:$0xf]
        %v2663 = vld [vmem:[%s2631 + $0x7c] sm:$0xf]
        %s2664 = scalar_lea.vmem %s15, 1
        %v2665 = vld [vmem:[%s2664] sm:$0x1]
        %v2667 = vlaneseq
        %v2668 = vshrl.u32 %v2667, 7
        %v2669 = vsub.s32 0, %v2668
        %v2670 = vrot.slane %v2665, %v2669
        %v2704 = vunpack.c.l.b16 %v2632
        %v2705 = vunpack.c.l.b16 %v2633
        %v2706 = vunpack.c.l.b16 %v2634
        %v2707 = vunpack.c.l.b16 %v2635
        %v2708 = vunpack.c.l.b16 %v2636
        %v2709 = vunpack.c.l.b16 %v2637
        %v2710 = vunpack.c.l.b16 %v2638
        %v2711 = vunpack.c.l.b16 %v2639
        %v2712 = vunpack.c.l.b16 %v2640
        %v2713 = vunpack.c.l.b16 %v2641
        %v2714 = vunpack.c.l.b16 %v2642
        %v2715 = vunpack.c.l.b16 %v2643
        %v2716 = vunpack.c.l.b16 %v2644
        %v2717 = vunpack.c.l.b16 %v2645
        %v2718 = vunpack.c.l.b16 %v2646
        %v2719 = vunpack.c.l.b16 %v2647
        %v2720 = vunpack.c.l.b16 %v2648
        %v2721 = vunpack.c.l.b16 %v2649
        %v2722 = vunpack.c.l.b16 %v2650
        %v2723 = vunpack.c.l.b16 %v2651
        %v2724 = vunpack.c.l.b16 %v2652
        %v2725 = vunpack.c.l.b16 %v2653
        %v2726 = vunpack.c.l.b16 %v2654
        %v2727 = vunpack.c.l.b16 %v2655
        %v2728 = vunpack.c.l.b16 %v2656
        %v2729 = vunpack.c.l.b16 %v2657
        %v2730 = vunpack.c.l.b16 %v2658
        %v2731 = vunpack.c.l.b16 %v2659
        %v2732 = vunpack.c.l.b16 %v2660
        %v2733 = vunpack.c.l.b16 %v2661
        %v2734 = vunpack.c.l.b16 %v2662
        %v2735 = vunpack.c.l.b16 %v2663
        %v2736 = vpack.c.b16 %v2705, %v2704
        %v2737 = vpack.c.b16 %v2707, %v2706
        %v2738 = vpack.c.b16 %v2709, %v2708
        %v2739 = vpack.c.b16 %v2711, %v2710
        %v2740 = vpack.c.b16 %v2713, %v2712
        %v2741 = vpack.c.b16 %v2715, %v2714
        %v2742 = vpack.c.b16 %v2717, %v2716
        %v2743 = vpack.c.b16 %v2719, %v2718
        %v2744 = vpack.c.b16 %v2721, %v2720
        %v2745 = vpack.c.b16 %v2723, %v2722
        %v2746 = vpack.c.b16 %v2725, %v2724
        %v2747 = vpack.c.b16 %v2727, %v2726
        %v2748 = vpack.c.b16 %v2729, %v2728
        %v2749 = vpack.c.b16 %v2731, %v2730
        %v2750 = vpack.c.b16 %v2733, %v2732
        %v2751 = vpack.c.b16 %v2735, %v2734
        %2768 = vmatprep.subr.bf16.mxu0 0
        %2769 = vmatpush1.bf16.msra.mxu0 %v2743
        %2770 = vmatprep.subr.bf16.mxu0 0
        %2771 = vmatpush1.bf16.msra.mxu0 %v2742
        %2772 = vmatprep.subr.bf16.mxu0 0
        %2773 = vmatpush1.bf16.msra.mxu0 %v2741
        %2774 = vmatprep.subr.bf16.mxu0 0
        %2775 = vmatpush1.bf16.msra.mxu0 %v2740
        %2776 = vmatprep.subr.bf16.mxu0 0
        %2777 = vmatpush1.bf16.msra.mxu0 %v2739
        %2778 = vmatprep.subr.bf16.mxu0 0
        %2779 = vmatpush1.bf16.msra.mxu0 %v2738
        %2780 = vmatprep.subr.bf16.mxu0 0
        %2781 = vmatpush1.bf16.msra.mxu0 %v2737
        %2782 = vmatprep.subr.bf16.mxu0 0
        %2783 = vmatpush1.bf16.msra.mxu0 %v2736
        %2784 = vmatprep.subr.bf16.mxu0 0
        %2785 = vmatpush2.bf16.msra.mxu0 %v2751
        %2786 = vmatprep.subr.bf16.mxu0 0
        %2787 = vmatpush2.bf16.msra.mxu0 %v2750
        %2788 = vmatprep.subr.bf16.mxu0 0
        %2789 = vmatpush2.bf16.msra.mxu0 %v2749
        %2790 = vmatprep.subr.bf16.mxu0 0
        %2791 = vmatpush2.bf16.msra.mxu0 %v2748
        %2792 = vmatprep.subr.bf16.mxu0 0
        %2793 = vmatpush2.bf16.msra.mxu0 %v2747
        %2794 = vmatprep.subr.bf16.mxu0 0
        %2795 = vmatpush2.bf16.msra.mxu0 %v2746
        %2796 = vmatprep.subr.bf16.mxu0 0
        %2797 = vmatpush2.bf16.msra.mxu0 %v2745
        %2798 = vmatprep.subr.bf16.mxu0 0
        %2799 = vmatpush2.bf16.msra.mxu0 %v2744
        %2800 = vmatprep.mubr.bf16.mxu0 %v2630
        %2801 = vmatmul.mubr.bf16.gmra.mxu0 %v2629
        %v2802 = vpop.f32.mrf.mxu0
        %v2803 = vadd.f32 %v2670, %v2802
        %v2804 = vpop.f32.mrf.mxu0
        %v2805 = vpop.f32.mrf.mxu0
        %v2806 = vpop.f32.mrf.mxu0
        %2807 = vdwg.mxu0
        %v2808 = vadd.f32 %v2803, %v2458
        %s2809 = scalar_lea.vmem [#allocation14], 1
        %v2810 = vld [vmem:[%s2809] sm:$0x1]
        %s2811 = scalar_lea.vmem %s17, 1
        %v2812 = vld [vmem:[%s2811] sm:$0x1]
        %2813 = vadd.xlane.f32.xlu0 %v2808
        %v2814 = vpop.xlane.xlu0 %2813
        %v2815 = vmul.f32 %v2814, %v791
        %v2816 = vsub.f32 %v2808, %v2815
        %v2817 = vmul.f32 %v2816, %v2816
        %2818 = vadd.xlane.f32.xlu0 %v2817
        %v2819 = vpop.xlane.xlu0 %2818
        %v2820 = vmul.f32 %v2819, %v791
        %v2821 = vadd.f32 %v2820, 1e-12
        %v2822 = vrsqrt.pop %v2821
        %v2823 = vmul.f32 %v2816, %v2822
        %v2825 = vlaneseq
        %v2826 = vshrl.u32 %v2825, 7
        %v2827 = vsub.s32 0, %v2826
        %v2828 = vrot.slane %v2810, %v2827
        %v2830 = vmul.f32 %v2823, %v2828
        %v2832 = vlaneseq
        %v2833 = vshrl.u32 %v2832, 7
        %v2834 = vsub.s32 0, %v2833
        %v2835 = vrot.slane %v2812, %v2834
        %v2837 = vadd.f32 %v2830, %v2835
        %v2838 = vld [vmem:[%s18] sm:$0xff]
        %v2839 = vld [vmem:[%s18 + $0x8] sm:$0xff]
        %v2840 = vld [vmem:[%s18 + $0x10] sm:$0xff]
        %v2841 = vld [vmem:[%s18 + $0x18] sm:$0xff]
        %v2842 = vld [vmem:[%s18 + $0x20] sm:$0xff]
        %v2843 = vld [vmem:[%s18 + $0x28] sm:$0xff]
        %v2844 = vld [vmem:[%s18 + $0x30] sm:$0xff]
        %v2845 = vld [vmem:[%s18 + $0x38] sm:$0xff]
        %v2846 = vld [vmem:[%s18 + $0x40] sm:$0xff]
        %v2847 = vld [vmem:[%s18 + $0x48] sm:$0xff]
        %v2848 = vld [vmem:[%s18 + $0x50] sm:$0xff]
        %v2849 = vld [vmem:[%s18 + $0x58] sm:$0xff]
        %v2850 = vld [vmem:[%s18 + $0x60] sm:$0xff]
        %v2851 = vld [vmem:[%s18 + $0x68] sm:$0xff]
        %v2852 = vld [vmem:[%s18 + $0x70] sm:$0xff]
        %v2853 = vld [vmem:[%s18 + $0x78] sm:$0xff]
        %v2854 = vld [vmem:[%s19] sm:$0x1]
        %2855 = vmatprep.subr.mxu0 0.0
        %2856 = vmatpush1.msra.mxu0 %v2853
        %2857 = vmatprep.subr.mxu0 0.0
        %2858 = vmatpush1.msra.mxu0 %v2852
        %2859 = vmatprep.subr.mxu0 0.0
        %2860 = vmatpush1.msra.mxu0 %v2851
        %2861 = vmatprep.subr.mxu0 0.0
        %2862 = vmatpush1.msra.mxu0 %v2850
        %2863 = vmatprep.subr.mxu0 0.0
        %2864 = vmatpush1.msra.mxu0 %v2849
        %2865 = vmatprep.subr.mxu0 0.0
        %2866 = vmatpush1.msra.mxu0 %v2848
        %2867 = vmatprep.subr.mxu0 0.0
        %2868 = vmatpush1.msra.mxu0 %v2847
        %2869 = vmatprep.subr.mxu0 0.0
        %2870 = vmatpush1.msra.mxu0 %v2846
        %2871 = vmatprep.subr.mxu0 0.0
        %2872 = vmatpush1.msra.mxu0 %v2845
        %2873 = vmatprep.subr.mxu0 0.0
        %2874 = vmatpush1.msra.mxu0 %v2844
        %2875 = vmatprep.subr.mxu0 0.0
        %2876 = vmatpush1.msra.mxu0 %v2843
        %2877 = vmatprep.subr.mxu0 0.0
        %2878 = vmatpush1.msra.mxu0 %v2842
        %2879 = vmatprep.subr.mxu0 0.0
        %2880 = vmatpush1.msra.mxu0 %v2841
        %2881 = vmatprep.subr.mxu0 0.0
        %2882 = vmatpush1.msra.mxu0 %v2840
        %2883 = vmatprep.subr.mxu0 0.0
        %2884 = vmatpush1.msra.mxu0 %v2839
        %2885 = vmatprep.subr.mxu0 0.0
        %2886 = vmatpush1.msra.mxu0 %v2838
        %2887 = vmatprep.subr.mxu0 0.0
        %2888 = vmatpush2.msra.mxu0 0.0
        %2889 = vmatprep.subr.mxu0 0.0
        %2890 = vmatpush2.msra.mxu0 0.0
        %2891 = vmatprep.subr.mxu0 0.0
        %2892 = vmatpush2.msra.mxu0 0.0
        %2893 = vmatprep.subr.mxu0 0.0
        %2894 = vmatpush2.msra.mxu0 0.0
        %2895 = vmatprep.subr.mxu0 0.0
        %2896 = vmatpush2.msra.mxu0 0.0
        %2897 = vmatprep.subr.mxu0 0.0
        %2898 = vmatpush2.msra.mxu0 0.0
        %2899 = vmatprep.subr.mxu0 0.0
        %2900 = vmatpush2.msra.mxu0 0.0
        %2901 = vmatprep.subr.mxu0 0.0
        %2902 = vmatpush2.msra.mxu0 0.0
        %2903 = vmatprep.subr.mxu0 0.0
        %2904 = vmatpush2.msra.mxu0 0.0
        %2905 = vmatprep.subr.mxu0 0.0
        %2906 = vmatpush2.msra.mxu0 0.0
        %2907 = vmatprep.subr.mxu0 0.0
        %2908 = vmatpush2.msra.mxu0 0.0
        %2909 = vmatprep.subr.mxu0 0.0
        %2910 = vmatpush2.msra.mxu0 0.0
        %2911 = vmatprep.subr.mxu0 0.0
        %2912 = vmatpush2.msra.mxu0 0.0
        %2913 = vmatprep.subr.mxu0 0.0
        %2914 = vmatpush2.msra.mxu0 0.0
        %2915 = vmatprep.subr.mxu0 0.0
        %2916 = vmatpush2.msra.mxu0 0.0
        %2917 = vmatprep.subr.mxu0 0.0
        %2918 = vmatpush2.msra.mxu0 0.0
        %2919 = vmatprep.mubr.f32.mxu0 0.0
        %2920 = vmatmul.mubr.f32.gmra.mxu0 %v2837
        %v2921 = vpop.f32.mrf.mxu0
        %v2922 = vadd.f32 %v2854, %v2921
        %v2923 = vpop.f32.mrf.mxu0
        %2924 = vdwg.mxu0
        %2925 = vst [vmem:[%s631] sm:$0x1] %v2922
        %s2926 = sand.u32 %s429, 1
        %s2927 = scalar_lea.sflag [#allocation8], %s2926
        %s2928 = sand.u32 %s429, 1
        %s2929 = scalar_lea.vmem [#allocation15], %s2928
        // Predicated region
        $region145: #{text_classification_forward.1} parent=91 // pred_check
          %p2930 = pneg %p439
        $region146: #{text_classification_forward.1} parent=91 // pred_check_branch
          %2932 = sbr.rel (%p2930) target = $region148
        $region147: #{text_classification_forward.1} parent=91 // pred_region
          %s2934 = ssub.s32 16, 16
          %2935 = vsyncadd %s2927, %s2934
          %s2936 = smul.addr %s43, 16
          %s2937 = scalar_lea.hbm %s20, %s2936
          %s2939 = sshll.u32 %s2929, 4
          %s2940 = int_to_ptr.vmem [resolvable:$true] %s2939
          %2942 = dma.vmem_to_hbm [thread:$0]  %s2940, 16, %s2937, %s2927
        $region148: #{text_classification_forward.1} parent=91 // pred_fallthru
          _
      $region92: #{text_classification_forward.1} parent=5 // pred_fallthru
        _
      %p2943 = scmp.le.s32.totalorder 2, %s38
      // Predicated region
      $region149: #{text_classification_forward.1} parent=5 // pred_check
        %p2944 = pneg %p2943
      $region150: #{text_classification_forward.1} parent=5 // pred_check_branch
        %2946 = sbr.rel (%p2944) target = $region152
      $region151: #{text_classification_forward.1} parent=5 // pred_region
        %s2947 = ssub.s32 %s38, 2
        // Predicated region
        $region153: #{text_classification_forward.1} parent=151 // pred_check
          %p2948 = pneg %p445
        $region154: #{text_classification_forward.1} parent=151 // pred_check_branch
          %2950 = sbr.rel (%p2948) target = $region156
        $region155: #{text_classification_forward.1} parent=151 // pred_region
          %s2951 = sand.u32 %s430, 1
          %s2952 = scalar_lea.sflag [#allocation8], %s2951
          %s2953 = sand.u32 %s430, 1
          %s2954 = scalar_lea.vmem [#allocation15], %s2953
          %2955 = dma.done %s2952, 16
        $region156: #{text_classification_forward.1} parent=151 // pred_fallthru
          _
      $region152: #{text_classification_forward.1} parent=5 // pred_fallthru
        _
    $region6: #{text_classification_forward.1} parent=1 // loop_footer
      %s42 = sadd.s32 1, %s38
    $region7: #{text_classification_forward.1} parent=1 // loop_footer_branch
      %37 = sbr.rel target = $region3
    $region8: #{text_classification_forward.1} parent=1 // loop_exit
      _
    %2956 = vsyncpa [#allocation7], 1
    %s2957 = scalar_lea.sflag [#allocation7], 1
    %2958 = vsyncpa %s2957, 1
    %2959 = vsyncpa [#allocation10], 1
    %2960 = vsyncpa [#allocation13], 1
    %2961 = vsyncpa [#allocation8], 1
    %s2962 = scalar_lea.sflag [#allocation8], 1
    %2963 = vsyncpa %s2962, 1
  %2964 = vsyncmov [#allocation3]
  %s2965 = vpop.sfrf %2964
  %p2966 = scmp.eq.s32.totalorder %s2965, 0
  %p2967 = pneg %p2966
  %2969 = shalt.err (%p2967)
  %s2970 = scalar_lea.sflag [#allocation3], 1
  %2971 = vsyncmov %s2970
  %s2972 = vpop.sfrf %2971
  %p2973 = scmp.eq.s32.totalorder %s2972, 0
  %p2974 = pneg %p2973
  %2976 = shalt.err (%p2974)
  %s2977 = scalar_lea.sflag [#allocation3], 2
  %2978 = vsyncmov %s2977
  %s2979 = vpop.sfrf %2978
  %p2980 = scmp.eq.s32.totalorder %s2979, 0
  %p2981 = pneg %p2980
  %2983 = shalt.err (%p2981)
  %s2984 = scalar_lea.sflag [#allocation3], 3
  %2985 = vsyncmov %s2984
  %s2986 = vpop.sfrf %2985
  %p2987 = scmp.eq.s32.totalorder %s2986, 0
  %p2988 = pneg %p2987
  %2990 = shalt.err (%p2988)
  %s2991 = scalar_lea.sflag [#allocation3], 4
  %2992 = vsyncmov %s2991
  %s2993 = vpop.sfrf %2992
  %p2994 = scmp.eq.s32.totalorder %s2993, 0
  %p2995 = pneg %p2994
  %2997 = shalt.err (%p2995)
  %s2998 = scalar_lea.sflag [#allocation3], 5
  %2999 = vsyncmov %s2998
  %s3000 = vpop.sfrf %2999
  %p3001 = scmp.eq.s32.totalorder %s3000, 0
  %p3002 = pneg %p3001
  %3004 = shalt.err (%p3002)
  %s3005 = scalar_lea.sflag [#allocation3], 6
  %3006 = vsyncmov %s3005
  %s3007 = vpop.sfrf %3006
  %p3008 = scmp.eq.s32.totalorder %s3007, 0
  %p3009 = pneg %p3008
  %3011 = shalt.err (%p3009)
  %s3012 = scalar_lea.sflag [#allocation3], 7
  %3013 = vsyncmov %s3012
  %s3014 = vpop.sfrf %3013
  %p3015 = scmp.eq.s32.totalorder %s3014, 0
  %p3016 = pneg %p3015
  %3018 = shalt.err (%p3016)

</llo_original>
